<compile_context>
chip_gen: v7x
topology: tpu7x:2x2x1
jax: 0.10.0
libtpu: 0.0.40
codegen_flags: <defaults>
</compile_context>

<pallas_src>
import functools

import numpy as np
import jax
import jax.numpy as jnp
from jax.experimental import pallas as pl
from jax.experimental.pallas import tpu as pltpu


IN_CHANNELS = (32, 64, 160, 256)   # phi='b0'
EMBED_DIM = 256                    # phi='b0'
NUM_CLASSES = 21

_TM = 256           # M tile: >=2 M-blocks on the big (M=512) calls -> both v7x TCs
_TN = 256
_K_MAX = 2048       # single-K-step ceiling (every b0 matmul here has K <= 640)
_PALLAS_MIN_M = 64  # below this, pallas_call overhead exceeds the compute


def _round_up(x, m):
    return ((x + m - 1) // m) * m


# ----------------------------------------------------------------------------
# Pallas kernel 1: y = maybe_relu(x @ w [+ bias]), single K step, no scratch.
# ----------------------------------------------------------------------------
def _matmul_kernel(*refs, relu, has_bias):
    if has_bias:
        x_ref, w_ref, b_ref, o_ref = refs
    else:
        x_ref, w_ref, o_ref = refs
        b_ref = None
    y = jnp.dot(x_ref[...], w_ref[...], preferred_element_type=jnp.float32)
    if has_bias:
        y = y + b_ref[...]
    if relu:
        y = jnp.maximum(y, 0.0)
    o_ref[...] = y.astype(o_ref.dtype)


def fused_matmul(x, w, bias=None, relu=False, out_dtype=jnp.bfloat16):
    """y = maybe_relu(x @ w [+ bias]) with bf16 MXU feed / f32 accumulation.

    Single K step (no accumulator scratch, no K padding): the K block equals
    the full array extent.  N is used at its true width with a full-extent
    block when possible, so there is no pad-then-slice round trip.
    """
    M, K = x.shape
    K2, N = w.shape
    assert K == K2
    # TODO(synk): add a K-accumulator grid axis for K > _K_MAX (not needed for b0).
    assert K <= _K_MAX and N <= _K_MAX

    xb = x.astype(jnp.bfloat16)
    wb = w.astype(jnp.bfloat16)

    if M < _PALLAS_MIN_M:
        # Tiny token counts: let XLA fuse it (launch overhead > compute).
        y = jnp.dot(xb, wb, preferred_element_type=jnp.float32)
        if bias is not None:
            y = y + bias.astype(jnp.float32)
        if relu:
            y = jnp.maximum(y, 0.0)
        return y.astype(out_dtype)

    # --- M tiling: full-extent block when M <= _TM, else 256-row blocks.
    if M <= _TM:
        tm, Mp = M, M
    else:
        tm = _TM
        Mp = _round_up(M, tm)
        if Mp != M:  # rare: only when M > 256 and not a multiple of 256
            xb = jnp.pad(xb, ((0, Mp - M), (0, 0)))

    # --- N tiling: true N, full-extent block; split only to hand v7x's two
    #     TensorCores >=2 grid blocks when the M axis has a single block.
    if (Mp // tm) == 1 and N >= 256 and N % 256 == 0:
        tn = 128
    elif N > _TN and N % 128 == 0:
        tn = _TN if N % _TN == 0 else 128
    else:
        tn = N
    grid = (Mp // tm, N // tn)

    operands = [xb, wb]
    in_specs = [
        pl.BlockSpec((tm, K), lambda i, j: (i, 0)),
        pl.BlockSpec((K, tn), lambda i, j: (0, j)),
    ]
    if bias is not None:
        operands.append(bias.astype(jnp.float32).reshape(1, N))
        in_specs.append(pl.BlockSpec((1, tn), lambda i, j: (0, j)))

    flops = 2 * Mp * N * K
    bytes_accessed = Mp * K * 2 + K * N * 2 + Mp * N * np.dtype(out_dtype).itemsize

    out = pl.pallas_call(
        functools.partial(_matmul_kernel, relu=relu, has_bias=bias is not None),
        out_shape=jax.ShapeDtypeStruct((Mp, N), out_dtype),
        grid=grid,
        in_specs=in_specs,
        out_specs=pl.BlockSpec((tm, tn), lambda i, j: (i, j)),
        compiler_params=pltpu.CompilerParams(
            dimension_semantics=("parallel", "parallel")),
        cost_estimate=pl.CostEstimate(flops=int(flops), transcendentals=0,
                                      bytes_accessed=int(bytes_accessed)),
    )(*operands)

    if Mp != M:
        out = out[:M]
    return out


# ----------------------------------------------------------------------------
# Pallas kernel 2: fused  BN(affine) + ReLU + linear_pred
#   logits = relu(x * scale + shift) @ w + bias
# (the post-fold head: the 1024->256 linear_fuse matmul was folded into the
#  per-branch projections, so only the BN epilogue + pred matmul remain)
# ----------------------------------------------------------------------------
def _bn_relu_pred_kernel(x_ref, scale_ref, shift_ref, w_ref, b_ref, o_ref):
    y = jnp.maximum(
        x_ref[...].astype(jnp.float32) * scale_ref[...] + shift_ref[...], 0.0)
    logits = jnp.dot(y.astype(w_ref.dtype), w_ref[...],
                     preferred_element_type=jnp.float32)
    o_ref[...] = (logits + b_ref[...]).astype(o_ref.dtype)


def fused_bn_relu_pred(x, scale, shift, w, bias):
    """x:(M,E) bf16; scale/shift:(E,); w:(E,Nc); bias:(Nc,). Output (M,Nc) f32."""
    M, E = x.shape
    _, Nc = w.shape

    xb = x.astype(jnp.bfloat16)
    if M < _PALLAS_MIN_M:
        y = jnp.maximum(x.astype(jnp.float32) * scale + shift, 0.0)
        return jnp.dot(y.astype(jnp.bfloat16), w.astype(jnp.bfloat16),
                       preferred_element_type=jnp.float32) + bias

    if M <= _TM:
        tm, Mp = M, M
    else:
        tm = _TM
        Mp = _round_up(M, tm)
        if Mp != M:
            xb = jnp.pad(xb, ((0, Mp - M), (0, 0)))
    grid = (Mp // tm,)

    flops = 2 * Mp * Nc * E
    bytes_accessed = Mp * E * 2 + E * Nc * 2 + Mp * Nc * 4

    out = pl.pallas_call(
        _bn_relu_pred_kernel,
        out_shape=jax.ShapeDtypeStruct((Mp, Nc), jnp.float32),
        grid=grid,
        in_specs=[
            pl.BlockSpec((tm, E), lambda i: (i, 0)),
            pl.BlockSpec((1, E), lambda i: (0, 0)),
            pl.BlockSpec((1, E), lambda i: (0, 0)),
            pl.BlockSpec((E, Nc), lambda i: (0, 0)),
            pl.BlockSpec((1, Nc), lambda i: (0, 0)),
        ],
        out_specs=pl.BlockSpec((tm, Nc), lambda i: (i, 0)),
        compiler_params=pltpu.CompilerParams(dimension_semantics=("parallel",)),
        cost_estimate=pl.CostEstimate(flops=int(flops), transcendentals=0,
                                      bytes_accessed=int(bytes_accessed)),
    )(xb,
      scale.astype(jnp.float32).reshape(1, E),
      shift.astype(jnp.float32).reshape(1, E),
      w.astype(jnp.bfloat16),
      bias.astype(jnp.float32).reshape(1, Nc))

    if Mp != M:
        out = out[:M]
    return out


# ----------------------------------------------------------------------------
# Layout helpers (NHWC / token-major, plain JAX glue)
# ----------------------------------------------------------------------------
def nhwc_tokens(x):
    n, h, w, c = x.shape
    return x.reshape(n * h * w, c), (n, h, w)


def tokens_nhwc(t, nhw):
    n, h, w = nhw
    return t.reshape(n, h, w, t.shape[-1])


def space_to_depth_nhwc(x, f):
    """NHWC pixel-unshuffle by factor f (channel order c, fh, fw)."""
    n, h, w, c = x.shape
    x = x.reshape(n, h // f, f, w // f, f, c)
    x = jnp.transpose(x, (0, 1, 3, 5, 2, 4))
    return x.reshape(n, h // f, w // f, c * f * f)


# ----------------------------------------------------------------------------
# Bilinear resize (exact PyTorch F.interpolate semantics, both align_corners)
# ----------------------------------------------------------------------------
def bilinear_matrix(in_size, out_size, align_corners):
    if align_corners:
        if out_size == 1:
            src = np.zeros((out_size,), dtype=np.float64)
        else:
            src = np.arange(out_size, dtype=np.float64) * (in_size - 1) / (out_size - 1)
    else:
        scale = in_size / out_size
        src = (np.arange(out_size, dtype=np.float64) + 0.5) * scale - 0.5
        src = np.clip(src, 0.0, in_size - 1)
    lo = np.clip(np.floor(src).astype(np.int64), 0, in_size - 1)
    hi = np.minimum(lo + 1, in_size - 1)
    frac = (src - lo).astype(np.float32)
    W = np.zeros((out_size, in_size), dtype=np.float32)
    idx = np.arange(out_size)
    np.add.at(W, (idx, lo), 1.0 - frac)
    np.add.at(W, (idx, hi), frac)
    return jnp.asarray(W)   # NOTE: rows sum to 1 (needed for the fuse_w fold)


def bilinear_resize_nhwc(x, size, align_corners):
    _, h, w, _ = x.shape
    ho, wo = size
    Wh = bilinear_matrix(h, ho, align_corners)
    Ww = bilinear_matrix(w, wo, align_corners)
    y = jnp.einsum("ph,nhwc->npwc", Wh, x)
    y = jnp.einsum("qw,npwc->npqc", Ww, y)
    return y


# ----------------------------------------------------------------------------
# Deterministic parameter initialization (raw, module-shaped)
# ----------------------------------------------------------------------------
def _linear(key, fan_in, fan_out):
    kw, kb = jax.random.split(key)
    bound = 1.0 / np.sqrt(fan_in)
    w = jax.random.uniform(kw, (fan_in, fan_out), jnp.float32, -bound, bound)
    b = jax.random.uniform(kb, (fan_out,), jnp.float32, -bound, bound)
    return w.astype(jnp.bfloat16), b


def init_params(key):
    keys = jax.random.split(key, 10)
    p = {}
    # --- backbone stand-in: 4 stages (stride 4, 2, 2, 2) of patchify+linear+ReLU
    chans = (3,) + IN_CHANNELS
    factors = (4, 2, 2, 2)
    p["backbone"] = []
    for i in range(4):
        w, b = _linear(keys[i], chans[i] * factors[i] * factors[i], chans[i + 1])
        p["backbone"].append((w, b))
    # --- SegFormerHead MLP projections (Linear: C_i -> EMBED_DIM)
    for name, cin, k in zip(("c1", "c2", "c3", "c4"), IN_CHANNELS, keys[4:8]):
        p[name] = _linear(k, cin, EMBED_DIM)
    # --- linear_fuse: 1x1 conv (4E -> E, no bias) + BatchNorm(eps=0.001) + ReLU
    wf, _ = _linear(keys[8], 4 * EMBED_DIM, EMBED_DIM)
    p["fuse_w"] = wf                                   # rows ordered [c4,c3,c2,c1]
    p["bn_gamma"] = jnp.ones((EMBED_DIM,), jnp.float32)
    p["bn_beta"] = jnp.zeros((EMBED_DIM,), jnp.float32)
    p["bn_mean"] = jnp.zeros((EMBED_DIM,), jnp.float32)
    p["bn_var"] = jnp.ones((EMBED_DIM,), jnp.float32)
    # --- linear_pred: 1x1 conv (E -> num_classes, with bias), true width
    wp, bp = _linear(keys[9], EMBED_DIM, NUM_CLASSES)
    p["pred_w"] = wp
    p["pred_b"] = bp
    return p


def fold_head_params(p):
    """Exact algebraic fold of linear_fuse into the per-branch MLP projections.

    concat([_c4,_c3,_c2,_c1]) @ Wf == sum_i resize_i(c_i @ (W_i @ Wf_i)) + sum_i b_i @ Wf_i
    (bilinear rows sum to 1, so the per-channel bias commutes with the resize).
    The constant bias term and BatchNorm(eval, eps=0.001) fold into scale/shift.
    """
    eps = 0.001
    scale = p["bn_gamma"] / jnp.sqrt(p["bn_var"] + eps)
    shift = p["bn_beta"] - p["bn_mean"] * scale
    fuse_w = p["fuse_w"].astype(jnp.float32)           # (4E, E)
    folded = dict(p)
    bias_total = jnp.zeros((EMBED_DIM,), jnp.float32)
    for slot, name in enumerate(("c4", "c3", "c2", "c1")):   # concat order
        w_i, b_i = p[name]
        blk = fuse_w[slot * EMBED_DIM:(slot + 1) * EMBED_DIM]           # (E, E)
        folded[name + "_fold"] = (w_i.astype(jnp.float32) @ blk).astype(jnp.bfloat16)
        bias_total = bias_total + b_i.astype(jnp.float32) @ blk
    folded["bn_scale"] = scale
    folded["bn_shift"] = shift + scale * bias_total
    return folded


# ----------------------------------------------------------------------------
# Forward pass (NHWC end-to-end)
# ----------------------------------------------------------------------------
def backbone_forward(params, x_nhwc):
    # TODO(synk): mit_b0 is not defined in archs.py; this stand-in only
    # reproduces its output shape contract (strides 4/8/16/32, C=[32,64,160,256]).
    feats = []
    x = x_nhwc
    for (w, b), f in zip(params["backbone"], (4, 2, 2, 2)):
        x = space_to_depth_nhwc(x, f)
        t, nhw = nhwc_tokens(x)
        t = fused_matmul(t, w, bias=b, relu=True)      # bias + ReLU, bf16 out
        x = tokens_nhwc(t, nhw)
        feats.append(x)
    return feats  # [c1, c2, c3, c4], NHWC


def segformer_head(params, feats):
    c1, c2, c3, c4 = feats
    h1, w1 = c1.shape[1], c1.shape[2]

    # Per-branch MLP projection with fuse_w pre-folded in (C_i -> E), then
    # bilinear upsample and sum -- replaces the 1024-channel concat + fuse matmul.
    acc = None
    for fmap, name in ((c4, "c4"), (c3, "c3"), (c2, "c2"), (c1, "c1")):
        t, nhw = nhwc_tokens(fmap)                     # MLP: flatten(2).transpose(1,2)
        t = fused_matmul(t, params[name + "_fold"], bias=None, relu=False)
        emb = tokens_nhwc(t, nhw)
        if emb.shape[1:3] != (h1, w1):
            emb = bilinear_resize_nhwc(emb, (h1, w1), align_corners=False)
        acc = emb if acc is None else acc + emb

    # Dropout2d is identity in eval mode.  BN+ReLU+pred fused in one kernel;
    # the summed embedding is cast to bf16 once to halve the kernel's input DMA.
    t, nhw = nhwc_tokens(acc.astype(jnp.bfloat16))
    logits = fused_bn_relu_pred(t, params["bn_scale"], params["bn_shift"],
                                params["pred_w"], params["pred_b"])
    return tokens_nhwc(logits, nhw)                    # (N, h1, w1, num_classes) f32


@jax.jit
def segformer_forward(params, inputs):
    # inputs: NCHW like PyTorch; transpose to NHWC once, back once at the end.
    H, W = inputs.shape[2], inputs.shape[3]
    x = jnp.transpose(inputs, (0, 2, 3, 1)).astype(jnp.bfloat16)
    feats = backbone_forward(params, x)
    logits = segformer_head(params, feats)
    logits = bilinear_resize_nhwc(logits, (H, W), align_corners=True)
    return jnp.transpose(logits, (0, 3, 1, 2))


# ----------------------------------------------------------------------------
if __name__ == "__main__":
    key = jax.random.PRNGKey(0)
    k_x, k_p = jax.random.split(key)
    inputs = jax.random.normal(k_x, (2, 3, 64, 64), jnp.float32)
    params = fold_head_params(init_params(k_p))

    out = segformer_forward(params, inputs)
    out = jax.block_until_ready(out)

    assert out.shape == (2, NUM_CLASSES, 64, 64), out.shape
    assert bool(jnp.all(jnp.isfinite(out)))
    print("KERNEL_OK")
</pallas_src>

<mosaic_0001>
module attributes {stable_mosaic.version = 11 : i64} {
  func.func @_matmul_kernel(%arg0: i32, %arg1: i32, %arg2: memref<256x48xbf16, #tpu.memory_space<vmem>>, %arg3: memref<48x32xbf16, #tpu.memory_space<vmem>>, %arg4: memref<1x32xf32, #tpu.memory_space<vmem>>, %arg5: memref<256x32xbf16, #tpu.memory_space<vmem>>) attributes {dimension_semantics = [#tpu.dimension_semantics<parallel>, #tpu.dimension_semantics<parallel>], iteration_bounds = array<i64: 2, 1>, scalar_prefetch = 0 : i64, scratch_operands = 0 : i64, tpu.core_type = #tpu.core_type<tc>, window_params = [{transform_indices = @transform_0, window_bounds = array<i64: 256, 48>}, {transform_indices = @transform_1, window_bounds = array<i64: 48, 32>}, {transform_indices = @transform_2, window_bounds = array<i64: 1, 32>}, {transform_indices = @transform_3, window_bounds = array<i64: 256, 32>}]} {
    %c0 = arith.constant 0 : index
    %c0_0 = arith.constant 0 : index
    %0 = vector.load %arg2[%c0, %c0_0] : memref<256x48xbf16, #tpu.memory_space<vmem>>, vector<256x48xbf16>
    %c0_1 = arith.constant 0 : index
    %c0_2 = arith.constant 0 : index
    %1 = vector.load %arg3[%c0_1, %c0_2] : memref<48x32xbf16, #tpu.memory_space<vmem>>, vector<48x32xbf16>
    %cst = arith.constant dense<0.000000e+00> : vector<256x32xf32>
    %2 = tpu.matmul %0, %1, %cst {dimension_numbers = #tpu.dot_dimension_numbers<[1], [0], [0], [1], [0, 0, 1, 1], [], []>} : vector<256x48xbf16>, vector<48x32xbf16>, vector<256x32xf32> -> vector<256x32xf32>
    %c0_3 = arith.constant 0 : index
    %c0_4 = arith.constant 0 : index
    %3 = vector.load %arg4[%c0_3, %c0_4] : memref<1x32xf32, #tpu.memory_space<vmem>>, vector<1x32xf32>
    %4 = vector.broadcast %3 : vector<1x32xf32> to vector<256x32xf32>
    %5 = arith.addf %2, %4 : vector<256x32xf32>
    %cst_5 = arith.constant 0.000000e+00 : f32
    %6 = vector.broadcast %cst_5 : f32 to vector<256x32xf32>
    %7 = arith.maximumf %5, %6 : vector<256x32xf32>
    %8 = arith.truncf %7 : vector<256x32xf32> to vector<256x32xbf16>
    %c0_6 = arith.constant 0 : index
    %c0_7 = arith.constant 0 : index
    %9 = vector.load %arg5[%c0_6, %c0_7] : memref<256x32xbf16, #tpu.memory_space<vmem>>, vector<256x32xbf16>
    tpu.vector_store %arg5[%c0_6, %c0_7], %8 {strides = array<i32>} : memref<256x32xbf16, #tpu.memory_space<vmem>>, vector<256x32xbf16>,
    return
  }
  func.func @transform_0(%arg0: i32, %arg1: i32) -> (i32, i32) {
    %c0_i32 = arith.constant 0 : i32
    %c0_i32_0 = arith.constant 0 : i32
    return %arg0, %c0_i32 : i32, i32
  }
  func.func @transform_1(%arg0: i32, %arg1: i32) -> (i32, i32) {
    %c0_i32 = arith.constant 0 : i32
    %c0_i32_0 = arith.constant 0 : i32
    return %c0_i32, %arg1 : i32, i32
  }
  func.func @transform_2(%arg0: i32, %arg1: i32) -> (i32, i32) {
    %c0_i32 = arith.constant 0 : i32
    %c0_i32_0 = arith.constant 0 : i32
    return %c0_i32, %arg1 : i32, i32
  }
  func.func @transform_3(%arg0: i32, %arg1: i32) -> (i32, i32) {
    %c0_i32 = arith.constant 0 : i32
    return %arg0, %arg1 : i32, i32
  }
}

module attributes {stable_mosaic.version = 11 : i64} {
  func.func @_matmul_kernel(%arg0: i32, %arg1: i32, %arg2: memref<128x128xbf16, #tpu.memory_space<vmem>>, %arg3: memref<128x64xbf16, #tpu.memory_space<vmem>>, %arg4: memref<1x64xf32, #tpu.memory_space<vmem>>, %arg5: memref<128x64xbf16, #tpu.memory_space<vmem>>) attributes {dimension_semantics = [#tpu.dimension_semantics<parallel>, #tpu.dimension_semantics<parallel>], iteration_bounds = array<i64: 1, 1>, scalar_prefetch = 0 : i64, scratch_operands = 0 : i64, tpu.core_type = #tpu.core_type<tc>, window_params = [{transform_indices = @transform_0, window_bounds = array<i64: 128, 128>}, {transform_indices = @transform_1, window_bounds = array<i64: 128, 64>}, {transform_indices = @transform_2, window_bounds = array<i64: 1, 64>}, {transform_indices = @transform_3, window_bounds = array<i64: 128, 64>}]} {
    %c0 = arith.constant 0 : index
    %c0_0 = arith.constant 0 : index
    %0 = vector.load %arg2[%c0, %c0_0] : memref<128x128xbf16, #tpu.memory_space<vmem>>, vector<128x128xbf16>
    %c0_1 = arith.constant 0 : index
    %c0_2 = arith.constant 0 : index
    %1 = vector.load %arg3[%c0_1, %c0_2] : memref<128x64xbf16, #tpu.memory_space<vmem>>, vector<128x64xbf16>
    %cst = arith.constant dense<0.000000e+00> : vector<128x64xf32>
    %2 = tpu.matmul %0, %1, %cst {dimension_numbers = #tpu.dot_dimension_numbers<[1], [0], [0], [1], [0, 0, 1, 1], [], []>} : vector<128x128xbf16>, vector<128x64xbf16>, vector<128x64xf32> -> vector<128x64xf32>
    %c0_3 = arith.constant 0 : index
    %c0_4 = arith.constant 0 : index
    %3 = vector.load %arg4[%c0_3, %c0_4] : memref<1x64xf32, #tpu.memory_space<vmem>>, vector<1x64xf32>
    %4 = vector.broadcast %3 : vector<1x64xf32> to vector<128x64xf32>
    %5 = arith.addf %2, %4 : vector<128x64xf32>
    %cst_5 = arith.constant 0.000000e+00 : f32
    %6 = vector.broadcast %cst_5 : f32 to vector<128x64xf32>
    %7 = arith.maximumf %5, %6 : vector<128x64xf32>
    %8 = arith.truncf %7 : vector<128x64xf32> to vector<128x64xbf16>
    %c0_6 = arith.constant 0 : index
    %c0_7 = arith.constant 0 : index
    %9 = vector.load %arg5[%c0_6, %c0_7] : memref<128x64xbf16, #tpu.memory_space<vmem>>, vector<128x64xbf16>
    tpu.vector_store %arg5[%c0_6, %c0_7], %8 {strides = array<i32>} : memref<128x64xbf16, #tpu.memory_space<vmem>>, vector<128x64xbf16>,
    return
  }
  func.func @transform_0(%arg0: i32, %arg1: i32) -> (i32, i32) {
    %c0_i32 = arith.constant 0 : i32
    %c0_i32_0 = arith.constant 0 : i32
    return %arg0, %c0_i32 : i32, i32
  }
  func.func @transform_1(%arg0: i32, %arg1: i32) -> (i32, i32) {
    %c0_i32 = arith.constant 0 : i32
    %c0_i32_0 = arith.constant 0 : i32
    return %c0_i32, %arg1 : i32, i32
  }
  func.func @transform_2(%arg0: i32, %arg1: i32) -> (i32, i32) {
    %c0_i32 = arith.constant 0 : i32
    %c0_i32_0 = arith.constant 0 : i32
    return %c0_i32, %arg1 : i32, i32
  }
  func.func @transform_3(%arg0: i32, %arg1: i32) -> (i32, i32) {
    %c0_i32 = arith.constant 0 : i32
    return %arg0, %arg1 : i32, i32
  }
}

module attributes {stable_mosaic.version = 11 : i64} {
  func.func @_matmul_kernel(%arg0: i32, %arg1: i32, %arg2: memref<128x64xbf16, #tpu.memory_space<vmem>>, %arg3: memref<64x128xbf16, #tpu.memory_space<vmem>>, %arg4: memref<128x128xbf16, #tpu.memory_space<vmem>>) attributes {dimension_semantics = [#tpu.dimension_semantics<parallel>, #tpu.dimension_semantics<parallel>], iteration_bounds = array<i64: 1, 2>, scalar_prefetch = 0 : i64, scratch_operands = 0 : i64, tpu.core_type = #tpu.core_type<tc>, window_params = [{transform_indices = @transform_0, window_bounds = array<i64: 128, 64>}, {transform_indices = @transform_1, window_bounds = array<i64: 64, 128>}, {transform_indices = @transform_2, window_bounds = array<i64: 128, 128>}]} {
    %c0 = arith.constant 0 : index
    %c0_0 = arith.constant 0 : index
    %0 = vector.load %arg2[%c0, %c0_0] : memref<128x64xbf16, #tpu.memory_space<vmem>>, vector<128x64xbf16>
    %c0_1 = arith.constant 0 : index
    %c0_2 = arith.constant 0 : index
    %1 = vector.load %arg3[%c0_1, %c0_2] : memref<64x128xbf16, #tpu.memory_space<vmem>>, vector<64x128xbf16>
    %cst = arith.constant dense<0.000000e+00> : vector<128x128xf32>
    %2 = tpu.matmul %0, %1, %cst {dimension_numbers = #tpu.dot_dimension_numbers<[1], [0], [0], [1], [0, 0, 1, 1], [], []>} : vector<128x64xbf16>, vector<64x128xbf16>, vector<128x128xf32> -> vector<128x128xf32>
    %3 = arith.truncf %2 : vector<128x128xf32> to vector<128x128xbf16>
    %c0_3 = arith.constant 0 : index
    %c0_4 = arith.constant 0 : index
    %4 = vector.load %arg4[%c0_3, %c0_4] : memref<128x128xbf16, #tpu.memory_space<vmem>>, vector<128x128xbf16>
    tpu.vector_store %arg4[%c0_3, %c0_4], %3 {strides = array<i32>} : memref<128x128xbf16, #tpu.memory_space<vmem>>, vector<128x128xbf16>,
    return
  }
  func.func @transform_0(%arg0: i32, %arg1: i32) -> (i32, i32) {
    %c0_i32 = arith.constant 0 : i32
    %c0_i32_0 = arith.constant 0 : i32
    return %arg0, %c0_i32 : i32, i32
  }
  func.func @transform_1(%arg0: i32, %arg1: i32) -> (i32, i32) {
    %c0_i32 = arith.constant 0 : i32
    %c0_i32_0 = arith.constant 0 : i32
    return %c0_i32, %arg1 : i32, i32
  }
  func.func @transform_2(%arg0: i32, %arg1: i32) -> (i32, i32) {
    %c0_i32 = arith.constant 0 : i32
    return %arg0, %arg1 : i32, i32
  }
}

module attributes {stable_mosaic.version = 11 : i64} {
  func.func @_matmul_kernel(%arg0: i32, %arg1: i32, %arg2: memref<256x32xbf16, #tpu.memory_space<vmem>>, %arg3: memref<32x256xbf16, #tpu.memory_space<vmem>>, %arg4: memref<256x256xbf16, #tpu.memory_space<vmem>>) attributes {dimension_semantics = [#tpu.dimension_semantics<parallel>, #tpu.dimension_semantics<parallel>], iteration_bounds = array<i64: 2, 1>, scalar_prefetch = 0 : i64, scratch_operands = 0 : i64, tpu.core_type = #tpu.core_type<tc>, window_params = [{transform_indices = @transform_0, window_bounds = array<i64: 256, 32>}, {transform_indices = @transform_1, window_bounds = array<i64: 32, 256>}, {transform_indices = @transform_2, window_bounds = array<i64: 256, 256>}]} {
    %c0 = arith.constant 0 : index
    %c0_0 = arith.constant 0 : index
    %0 = vector.load %arg2[%c0, %c0_0] : memref<256x32xbf16, #tpu.memory_space<vmem>>, vector<256x32xbf16>
    %c0_1 = arith.constant 0 : index
    %c0_2 = arith.constant 0 : index
    %1 = vector.load %arg3[%c0_1, %c0_2] : memref<32x256xbf16, #tpu.memory_space<vmem>>, vector<32x256xbf16>
    %cst = arith.constant dense<0.000000e+00> : vector<256x256xf32>
    %2 = tpu.matmul %0, %1, %cst {dimension_numbers = #tpu.dot_dimension_numbers<[1], [0], [0], [1], [0, 0, 1, 1], [], []>} : vector<256x32xbf16>, vector<32x256xbf16>, vector<256x256xf32> -> vector<256x256xf32>
    %3 = arith.truncf %2 : vector<256x256xf32> to vector<256x256xbf16>
    %c0_3 = arith.constant 0 : index
    %c0_4 = arith.constant 0 : index
    %4 = vector.load %arg4[%c0_3, %c0_4] : memref<256x256xbf16, #tpu.memory_space<vmem>>, vector<256x256xbf16>
    tpu.vector_store %arg4[%c0_3, %c0_4], %3 {strides = array<i32>} : memref<256x256xbf16, #tpu.memory_space<vmem>>, vector<256x256xbf16>,
    return
  }
  func.func @transform_0(%arg0: i32, %arg1: i32) -> (i32, i32) {
    %c0_i32 = arith.constant 0 : i32
    %c0_i32_0 = arith.constant 0 : i32
    return %arg0, %c0_i32 : i32, i32
  }
  func.func @transform_1(%arg0: i32, %arg1: i32) -> (i32, i32) {
    %c0_i32 = arith.constant 0 : i32
    %c0_i32_0 = arith.constant 0 : i32
    return %c0_i32, %arg1 : i32, i32
  }
  func.func @transform_2(%arg0: i32, %arg1: i32) -> (i32, i32) {
    %c0_i32 = arith.constant 0 : i32
    return %arg0, %arg1 : i32, i32
  }
}

module attributes {stable_mosaic.version = 11 : i64} {
  func.func @_bn_relu_pred_kernel(%arg0: i32, %arg1: memref<256x256xbf16, #tpu.memory_space<vmem>>, %arg2: memref<1x256xf32, #tpu.memory_space<vmem>>, %arg3: memref<1x256xf32, #tpu.memory_space<vmem>>, %arg4: memref<256x21xbf16, #tpu.memory_space<vmem>>, %arg5: memref<1x21xf32, #tpu.memory_space<vmem>>, %arg6: memref<256x21xf32, #tpu.memory_space<vmem>>) attributes {dimension_semantics = [#tpu.dimension_semantics<parallel>], iteration_bounds = array<i64: 2>, scalar_prefetch = 0 : i64, scratch_operands = 0 : i64, tpu.core_type = #tpu.core_type<tc>, window_params = [{transform_indices = @transform_0, window_bounds = array<i64: 256, 256>}, {pipeline_mode = #tpu.pipeline_mode<synchronous>, transform_indices = @transform_1, window_bounds = array<i64: 1, 256>}, {pipeline_mode = #tpu.pipeline_mode<synchronous>, transform_indices = @transform_2, window_bounds = array<i64: 1, 256>}, {pipeline_mode = #tpu.pipeline_mode<synchronous>, transform_indices = @transform_3, window_bounds = array<i64: 256, 21>}, {pipeline_mode = #tpu.pipeline_mode<synchronous>, transform_indices = @transform_4, window_bounds = array<i64: 1, 21>}, {transform_indices = @transform_5, window_bounds = array<i64: 256, 21>}]} {
    %c0 = arith.constant 0 : index
    %c0_0 = arith.constant 0 : index
    %0 = vector.load %arg1[%c0, %c0_0] : memref<256x256xbf16, #tpu.memory_space<vmem>>, vector<256x256xbf16>
    %1 = arith.extf %0 : vector<256x256xbf16> to vector<256x256xf32>
    %c0_1 = arith.constant 0 : index
    %c0_2 = arith.constant 0 : index
    %2 = vector.load %arg2[%c0_1, %c0_2] : memref<1x256xf32, #tpu.memory_space<vmem>>, vector<1x256xf32>
    %3 = vector.broadcast %2 : vector<1x256xf32> to vector<256x256xf32>
    %4 = arith.mulf %1, %3 : vector<256x256xf32>
    %c0_3 = arith.constant 0 : index
    %c0_4 = arith.constant 0 : index
    %5 = vector.load %arg3[%c0_3, %c0_4] : memref<1x256xf32, #tpu.memory_space<vmem>>, vector<1x256xf32>
    %6 = vector.broadcast %5 : vector<1x256xf32> to vector<256x256xf32>
    %7 = arith.addf %4, %6 : vector<256x256xf32>
    %cst = arith.constant 0.000000e+00 : f32
    %8 = vector.broadcast %cst : f32 to vector<256x256xf32>
    %9 = arith.maximumf %7, %8 : vector<256x256xf32>
    %10 = arith.truncf %9 : vector<256x256xf32> to vector<256x256xbf16>
    %c0_5 = arith.constant 0 : index
    %c0_6 = arith.constant 0 : index
    %11 = vector.load %arg4[%c0_5, %c0_6] : memref<256x21xbf16, #tpu.memory_space<vmem>>, vector<256x21xbf16>
    %cst_7 = arith.constant dense<0.000000e+00> : vector<256x21xf32>
    %12 = tpu.matmul %10, %11, %cst_7 {dimension_numbers = #tpu.dot_dimension_numbers<[1], [0], [0], [1], [0, 0, 1, 1], [], []>} : vector<256x256xbf16>, vector<256x21xbf16>, vector<256x21xf32> -> vector<256x21xf32>
    %c0_8 = arith.constant 0 : index
    %c0_9 = arith.constant 0 : index
    %13 = vector.load %arg5[%c0_8, %c0_9] : memref<1x21xf32, #tpu.memory_space<vmem>>, vector<1x21xf32>
    %14 = vector.broadcast %13 : vector<1x21xf32> to vector<256x21xf32>
    %15 = arith.addf %12, %14 : vector<256x21xf32>
    %c0_10 = arith.constant 0 : index
    %c0_11 = arith.constant 0 : index
    %16 = vector.load %arg6[%c0_10, %c0_11] : memref<256x21xf32, #tpu.memory_space<vmem>>, vector<256x21xf32>
    tpu.vector_store %arg6[%c0_10, %c0_11], %15 {strides = array<i32>} : memref<256x21xf32, #tpu.memory_space<vmem>>, vector<256x21xf32>,
    return
  }
  func.func @transform_0(%arg0: i32) -> (i32, i32) {
    %c0_i32 = arith.constant 0 : i32
    %c0_i32_0 = arith.constant 0 : i32
    return %arg0, %c0_i32 : i32, i32
  }
  func.func @transform_1(%arg0: i32) -> (i32, i32) {
    %c0_i32 = arith.constant 0 : i32
    %c0_i32_0 = arith.constant 0 : i32
    %c0_i32_1 = arith.constant 0 : i32
    return %c0_i32, %c0_i32_0 : i32, i32
  }
  func.func @transform_2(%arg0: i32) -> (i32, i32) {
    %c0_i32 = arith.constant 0 : i32
    %c0_i32_0 = arith.constant 0 : i32
    %c0_i32_1 = arith.constant 0 : i32
    return %c0_i32, %c0_i32_0 : i32, i32
  }
  func.func @transform_3(%arg0: i32) -> (i32, i32) {
    %c0_i32 = arith.constant 0 : i32
    %c0_i32_0 = arith.constant 0 : i32
    %c0_i32_1 = arith.constant 0 : i32
    return %c0_i32, %c0_i32_0 : i32, i32
  }
  func.func @transform_4(%arg0: i32) -> (i32, i32) {
    %c0_i32 = arith.constant 0 : i32
    %c0_i32_0 = arith.constant 0 : i32
    %c0_i32_1 = arith.constant 0 : i32
    return %c0_i32, %c0_i32_0 : i32, i32
  }
  func.func @transform_5(%arg0: i32) -> (i32, i32) {
    %c0_i32 = arith.constant 0 : i32
    %c0_i32_0 = arith.constant 0 : i32
    return %arg0, %c0_i32 : i32, i32
  }
}

</mosaic_0001>

<llo_original>
// kernel: segformer_forward.5
$region0: #{segformer_forward.5}
  #allocation0 [shape = 'u32[]', space=smem, size = 0x4, offset = 0x4, fixed_abs, tag = 'smem constant byte address 0x4 - core index']
  #allocation1 [shape = 'u32[144,128]{1,0:T(1,128)}', space=vmem, size = 0x12000, scoped, tag = 'internal scratch']
  %s0 = inlined_call_operand.vmem [shape: bf16[512,48], index: 0, kind: input, shape index: {}]
  %s1 = inlined_call_operand.vmem [shape: bf16[48,32], index: 1, kind: input, shape index: {}]
  %s2 = inlined_call_operand.vmem [shape: f32[1,32], index: 2, kind: input, shape index: {}]
  %s3 = inlined_call_operand.vmem [shape: bf16[512,32], index: 3, kind: output, shape index: {}]
  %s4 = sld [smem:[#allocation0]]
  $region45: #{segformer_forward.5} parent=0
    _
  %s6 = ssub.s32 1, %s4
  %s7 = scalar_select 0, %s6, %s4
  loop: start=0, step=1, limit=4
  $region2: #{segformer_forward.5} parent=0 // loop_pre_header
    _
  $region3: #{segformer_forward.5} parent=0 // loop_header
    %s9 = sphi 0, %s13
    %p10 = scmp.ge.s32.totalorder %s9, 4
    %s16 = sphi 0, %s28
    %s17 = sphi 0, %s24
    %s18 = sphi 0, %s16
    %s19 = sphi 0, %s17
    %s20 = sphi 0, %s18
    %s21 = sphi 0, %s19
    %s31 = sphi 0, %s33
    %s34 = sphi 0, %s31
    %s35 = sphi 0, %s34
    %s51 = sphi 0, %s35
    %s57 = sphi 0, %s59
    %s60 = sphi 0, %s57
    %s61 = sphi 0, %s60
    %s77 = sphi 0, %s61
    %s83 = sphi 0, %s85
    %s86 = sphi 0, %s83
    %s87 = sphi 0, %s86
    %s103 = sphi 0, %s87
    %s111 = sphi 0, %s113
    %s114 = sphi 0, %s111
    %s115 = sphi 0, %s114
    %s131 = sphi 0, %s115
  $region4: #{segformer_forward.5} parent=0 // loop_header_branch
    %12 = sbr.rel (%p10) target = $region8
  $region5: #{segformer_forward.5} parent=0 // loop_body
    %s14 = ssub.s32 %s9, 1
    %s15 = ssub.s32 %s9, 2
    %s22 = sadd.s32 1, %s17
    %p23 = scmp.ge.s32.totalorder %s22, 1
    %s24 = scalar_select %p23, 0, %s22
    %s25 = sadd.s32 1, %s16
    %s26 = scalar_select %p23, %s25, %s16
    %p27 = scmp.ge.s32.totalorder %s26, 2
    %s28 = scalar_select %p27, 0, %s26
    %s29 = ssub.s32 %s16, %s28
    %p30 = scmp.eq.s32.totalorder %s29, 0
    %s32 = sadd.s32 %s31, 1
    %s33 = scalar_select %p30, %s31, %s32
    %p36 = pneg %p30
    %p37 = scmp.eq.s32.totalorder %s9, 1
    %p38 = por %p36, %p37
    %p39 = scmp.ne.s32.totalorder %s31, %s34
    %p40 = scmp.eq.s32.totalorder %s9, 0
    %p41 = por %p39, %p40
    %p42 = scmp.ne.s32.totalorder %s31, %s34
    %p43 = scmp.eq.s32.totalorder %s14, 1
    %p44 = por %p42, %p43
    %p45 = scmp.ne.s32.totalorder %s34, %s35
    %p46 = scmp.eq.s32.totalorder %s14, 0
    %p47 = por %p45, %p46
    %p48 = scmp.ne.s32.totalorder %s34, %s35
    %p49 = scmp.eq.s32.totalorder %s15, 1
    %p50 = por %p48, %p49
    %p52 = scmp.ne.s32.totalorder %s35, %s51
    %p53 = scmp.eq.s32.totalorder %s15, 0
    %p54 = por %p52, %p53
    %s55 = ssub.s32 %s17, %s24
    %p56 = scmp.eq.s32.totalorder %s55, 0
    %s58 = sadd.s32 %s57, 1
    %s59 = scalar_select %p56, %s57, %s58
    %p62 = pneg %p56
    %p63 = scmp.eq.s32.totalorder %s9, 1
    %p64 = por %p62, %p63
    %p65 = scmp.ne.s32.totalorder %s57, %s60
    %p66 = scmp.eq.s32.totalorder %s9, 0
    %p67 = por %p65, %p66
    %p68 = scmp.ne.s32.totalorder %s57, %s60
    %p69 = scmp.eq.s32.totalorder %s14, 1
    %p70 = por %p68, %p69
    %p71 = scmp.ne.s32.totalorder %s60, %s61
    %p72 = scmp.eq.s32.totalorder %s14, 0
    %p73 = por %p71, %p72
    %p74 = scmp.ne.s32.totalorder %s60, %s61
    %p75 = scmp.eq.s32.totalorder %s15, 1
    %p76 = por %p74, %p75
    %p78 = scmp.ne.s32.totalorder %s61, %s77
    %p79 = scmp.eq.s32.totalorder %s15, 0
    %p80 = por %p78, %p79
    %s81 = ssub.s32 %s17, %s24
    %p82 = scmp.eq.s32.totalorder %s81, 0
    %s84 = sadd.s32 %s83, 1
    %s85 = scalar_select %p82, %s83, %s84
    %p88 = pneg %p82
    %p89 = scmp.eq.s32.totalorder %s9, 1
    %p90 = por %p88, %p89
    %p91 = scmp.ne.s32.totalorder %s83, %s86
    %p92 = scmp.eq.s32.totalorder %s9, 0
    %p93 = por %p91, %p92
    %p94 = scmp.ne.s32.totalorder %s83, %s86
    %p95 = scmp.eq.s32.totalorder %s14, 1
    %p96 = por %p94, %p95
    %p97 = scmp.ne.s32.totalorder %s86, %s87
    %p98 = scmp.eq.s32.totalorder %s14, 0
    %p99 = por %p97, %p98
    %p100 = scmp.ne.s32.totalorder %s86, %s87
    %p101 = scmp.eq.s32.totalorder %s15, 1
    %p102 = por %p100, %p101
    %p104 = scmp.ne.s32.totalorder %s87, %s103
    %p105 = scmp.eq.s32.totalorder %s15, 0
    %p106 = por %p104, %p105
    %s107 = ssub.s32 %s16, %s28
    %s108 = ssub.s32 %s17, %s24
    %s109 = sor.u32 %s107, %s108
    %p110 = scmp.eq.s32.totalorder %s109, 0
    %s112 = sadd.s32 %s111, 1
    %s113 = scalar_select %p110, %s111, %s112
    %p116 = pneg %p110
    %p117 = scmp.eq.s32.totalorder %s9, 1
    %p118 = por %p116, %p117
    %p119 = scmp.ne.s32.totalorder %s111, %s114
    %p120 = scmp.eq.s32.totalorder %s9, 0
    %p121 = por %p119, %p120
    %p122 = scmp.ne.s32.totalorder %s111, %s114
    %p123 = scmp.eq.s32.totalorder %s14, 1
    %p124 = por %p122, %p123
    %p125 = scmp.ne.s32.totalorder %s114, %s115
    %p126 = scmp.eq.s32.totalorder %s14, 0
    %p127 = por %p125, %p126
    %p128 = scmp.ne.s32.totalorder %s114, %s115
    %p129 = scmp.eq.s32.totalorder %s15, 1
    %p130 = por %p128, %p129
    %p132 = scmp.ne.s32.totalorder %s115, %s131
    %p133 = scmp.eq.s32.totalorder %s15, 0
    %p134 = por %p132, %p133
    %p135 = scmp.le.s32.totalorder 1, %s9
    %p136 = scmp.lt.s32.totalorder %s9, 3
    %p137 = pnand %p135, %p136
    %p138 = pneg %p137
    // Predicated region
    $region9: #{segformer_forward.5} parent=5 // pred_check
      _
    $region10: #{segformer_forward.5} parent=5 // pred_check_branch
      %140 = sbr.rel (%p137) target = $region12
    $region11: #{segformer_forward.5} parent=5 // pred_region
      %s141 = ssub.s32 %s9, 1
      // Predicated region
      $region13: #{segformer_forward.5} parent=11 // pred_check
        %p142 = pneg %p73
      $region14: #{segformer_forward.5} parent=11 // pred_check_branch
        %144 = sbr.rel (%p142) target = $region16
      $region15: #{segformer_forward.5} parent=11 // pred_region
        %p145 = scmp.lt.s32.totalorder %s19, 0
        %s146 = scalar_select %p145, %s19, 0
        %s147 = smul.addr %s146, 4
        %s148 = scalar_lea.vmem %s1, %s147
      $region16: #{segformer_forward.5} parent=11 // pred_fallthru
        _
      // Predicated region
      $region17: #{segformer_forward.5} parent=11 // pred_check
        %p149 = pneg %p99
      $region18: #{segformer_forward.5} parent=11 // pred_check_branch
        %151 = sbr.rel (%p149) target = $region20
      $region19: #{segformer_forward.5} parent=11 // pred_region
        %p152 = scmp.lt.s32.totalorder %s19, 0
        %s153 = scalar_select %p152, %s19, 0
        %s154 = scalar_lea.vmem %s2, %s153
      $region20: #{segformer_forward.5} parent=11 // pred_fallthru
        _
    $region12: #{segformer_forward.5} parent=5 // pred_fallthru
      _
    %p155 = scmp.lt.s32.totalorder %s9, 2
    // Predicated region
    $region21: #{segformer_forward.5} parent=5 // pred_check
      %p156 = pneg %p155
    $region22: #{segformer_forward.5} parent=5 // pred_check_branch
      %158 = sbr.rel (%p156) target = $region24
    $region23: #{segformer_forward.5} parent=5 // pred_region
      // Predicated region
      $region25: #{segformer_forward.5} parent=23 // pred_check
        %p159 = pneg %p41
      $region26: #{segformer_forward.5} parent=23 // pred_check_branch
        %161 = sbr.rel (%p159) target = $region28
      $region27: #{segformer_forward.5} parent=23 // pred_region
        %s162 = smul.u32 32, %s16
        %p163 = scmp.lt.s32.totalorder %s162, 63
        %s164 = scalar_select %p163, %s162, 63
        %s165 = smul.addr %s164, 4
        %s166 = scalar_lea.vmem %s0, %s165
        %s167 = smul.u32 32, %s16
      $region28: #{segformer_forward.5} parent=23 // pred_fallthru
        _
    $region24: #{segformer_forward.5} parent=5 // pred_fallthru
      _
    %p168 = scmp.le.s32.totalorder 1, %s9
    %p169 = scmp.lt.s32.totalorder %s9, 3
    %p170 = pnand %p168, %p169
    %p171 = pneg %p170
    // Predicated region
    $region29: #{segformer_forward.5} parent=5 // pred_check
      _
    $region30: #{segformer_forward.5} parent=5 // pred_check_branch
      %173 = sbr.rel (%p170) target = $region32
    $region31: #{segformer_forward.5} parent=5 // pred_region
      %s174 = ssub.s32 %s9, 1
      %s175 = smul.u32 32, %s18
      %p176 = scmp.lt.s32.totalorder %s175, 63
      %s177 = scalar_select %p176, %s175, 63
      %s178 = smul.addr %s177, 4
      %s179 = scalar_lea.vmem %s0, %s178
      %p180 = pneg %p47
      %p181 = pneg %p44
      %p182 = scmp.lt.s32.totalorder %s19, 0
      %s183 = scalar_select %p182, %s19, 0
      %s184 = smul.addr %s183, 4
      %s185 = scalar_lea.vmem %s1, %s184
      %p186 = pneg %p73
      %p187 = pneg %p70
      %p188 = scmp.lt.s32.totalorder %s19, 0
      %s189 = scalar_select %p188, %s19, 0
      %s190 = scalar_lea.vmem %s2, %s189
      %p191 = pneg %p99
      %p192 = pneg %p96
      %p193 = pneg %p127
      %p194 = pneg %p124
      %s195 = smul.u32 32, %s18
      %p196 = scmp.lt.s32.totalorder %s195, 63
      %s197 = scalar_select %p196, %s195, 63
      %p198 = scmp.lt.s32.totalorder %s19, 0
      %s199 = scalar_select %p198, %s19, 0
      %s200 = sadd.s32 %s199, %s197
      %s201 = smul.addr %s200, 4
      %s202 = scalar_lea.vmem %s3, %s201
      %s203 = smul.u32 32, %s18
      %p204 = scmp.lt.s32.totalorder %s203, 63
      %s205 = scalar_select %p204, %s203, 63
      %s206 = smul.addr %s205, 4
      %s207 = scalar_lea.vmem %s0, %s206
      %s208 = smul.u32 32, %s18
      %p209 = scmp.lt.s32.totalorder %s19, 0
      %s210 = scalar_select %p209, %s19, 0
      %s211 = smul.addr %s210, 4
      %s212 = scalar_lea.vmem %s1, %s211
      %p213 = scmp.lt.s32.totalorder %s19, 0
      %s214 = scalar_select %p213, %s19, 0
      %s215 = scalar_lea.vmem %s2, %s214
      %s216 = smul.u32 32, %s18
      %p217 = scmp.lt.s32.totalorder %s216, 63
      %s218 = scalar_select %p217, %s216, 63
      %p219 = scmp.lt.s32.totalorder %s19, 0
      %s220 = scalar_select %p219, %s19, 0
      %s221 = sadd.s32 %s220, %s218
      %s222 = smul.addr %s221, 4
      %s223 = scalar_lea.vmem %s3, %s222
      %s224 = smul.u32 32, %s18
      %v226 = vld [vmem:[%s207] sm:$0xf]
      %v227 = vld [vmem:[%s207 + $0x4] sm:$0xf]
      %v228 = vld [vmem:[%s207 + $0x8] sm:$0xf]
      %v229 = vld [vmem:[%s207 + $0xc] sm:$0xf]
      %v230 = vld [vmem:[%s207 + $0x10] sm:$0xf]
      %v231 = vld [vmem:[%s207 + $0x14] sm:$0xf]
      %v232 = vld [vmem:[%s207 + $0x18] sm:$0xf]
      %v233 = vld [vmem:[%s207 + $0x1c] sm:$0xf]
      %v234 = vld [vmem:[%s207 + $0x20] sm:$0xf]
      %v235 = vld [vmem:[%s207 + $0x24] sm:$0xf]
      %v236 = vld [vmem:[%s207 + $0x28] sm:$0xf]
      %v237 = vld [vmem:[%s207 + $0x2c] sm:$0xf]
      %v238 = vld [vmem:[%s207 + $0x30] sm:$0xf]
      %v239 = vld [vmem:[%s207 + $0x34] sm:$0xf]
      %v240 = vld [vmem:[%s207 + $0x38] sm:$0xf]
      %v241 = vld [vmem:[%s207 + $0x3c] sm:$0xf]
      %v242 = vld [vmem:[%s207 + $0x40] sm:$0xf]
      %v243 = vld [vmem:[%s207 + $0x44] sm:$0xf]
      %v244 = vld [vmem:[%s207 + $0x48] sm:$0xf]
      %v245 = vld [vmem:[%s207 + $0x4c] sm:$0xf]
      %v246 = vld [vmem:[%s207 + $0x50] sm:$0xf]
      %v247 = vld [vmem:[%s207 + $0x54] sm:$0xf]
      %v248 = vld [vmem:[%s207 + $0x58] sm:$0xf]
      %v249 = vld [vmem:[%s207 + $0x5c] sm:$0xf]
      %v250 = vld [vmem:[%s207 + $0x60] sm:$0xf]
      %v251 = vld [vmem:[%s207 + $0x64] sm:$0xf]
      %v252 = vld [vmem:[%s207 + $0x68] sm:$0xf]
      %v253 = vld [vmem:[%s207 + $0x6c] sm:$0xf]
      %v254 = vld [vmem:[%s207 + $0x70] sm:$0xf]
      %v255 = vld [vmem:[%s207 + $0x74] sm:$0xf]
      %v256 = vld [vmem:[%s207 + $0x78] sm:$0xf]
      %v257 = vld [vmem:[%s207 + $0x7c] sm:$0xf]
      %v258 = vld [vmem:[%s212] sm:$0xf]
      %v259 = vld [vmem:[%s212 + $0x4] sm:$0xf]
      %v260 = vld [vmem:[%s212 + $0x8] sm:$0xf]
      %v261 = vld [vmem:[%s212 + $0xc] sm:$0xf]
      %v262 = vld [vmem:[%s212 + $0x10] sm:$0xf]
      %v263 = vld [vmem:[%s212 + $0x14] sm:$0xf]
      %v264 = vld [vmem:[%s215] sm:$0x1]
      %v266 = vlaneseq
      %v267 = vshrl.u32 %v266, 7
      %v268 = vsub.s32 0, %v267
      %v269 = vrot.slane %v264, %v268
      %v303 = vunpack.c.l.b16 %v226
      %v304 = vunpack.c.l.b16 %v227
      %v305 = vunpack.c.l.b16 %v228
      %v306 = vunpack.c.l.b16 %v229
      %v307 = vunpack.c.l.b16 %v230
      %v308 = vunpack.c.l.b16 %v231
      %v309 = vunpack.c.l.b16 %v232
      %v310 = vunpack.c.l.b16 %v233
      %v311 = vunpack.c.l.b16 %v234
      %v312 = vunpack.c.l.b16 %v235
      %v313 = vunpack.c.l.b16 %v236
      %v314 = vunpack.c.l.b16 %v237
      %v315 = vunpack.c.l.b16 %v238
      %v316 = vunpack.c.l.b16 %v239
      %v317 = vunpack.c.l.b16 %v240
      %v318 = vunpack.c.l.b16 %v241
      %v319 = vunpack.c.l.b16 %v242
      %v320 = vunpack.c.l.b16 %v243
      %v321 = vunpack.c.l.b16 %v244
      %v322 = vunpack.c.l.b16 %v245
      %v323 = vunpack.c.l.b16 %v246
      %v324 = vunpack.c.l.b16 %v247
      %v325 = vunpack.c.l.b16 %v248
      %v326 = vunpack.c.l.b16 %v249
      %v327 = vunpack.c.l.b16 %v250
      %v328 = vunpack.c.l.b16 %v251
      %v329 = vunpack.c.l.b16 %v252
      %v330 = vunpack.c.l.b16 %v253
      %v331 = vunpack.c.l.b16 %v254
      %v332 = vunpack.c.l.b16 %v255
      %v333 = vunpack.c.l.b16 %v256
      %v334 = vunpack.c.l.b16 %v257
      %v335 = vpack.c.b16 %v304, %v303
      %v336 = vpack.c.b16 %v306, %v305
      %v337 = vpack.c.b16 %v308, %v307
      %v338 = vpack.c.b16 %v310, %v309
      %v339 = vpack.c.b16 %v312, %v311
      %v340 = vpack.c.b16 %v314, %v313
      %v341 = vpack.c.b16 %v316, %v315
      %v342 = vpack.c.b16 %v318, %v317
      %v343 = vpack.c.b16 %v320, %v319
      %v344 = vpack.c.b16 %v322, %v321
      %v345 = vpack.c.b16 %v324, %v323
      %v346 = vpack.c.b16 %v326, %v325
      %v347 = vpack.c.b16 %v328, %v327
      %v348 = vpack.c.b16 %v330, %v329
      %v349 = vpack.c.b16 %v332, %v331
      %v350 = vpack.c.b16 %v334, %v333
      %v357 = vunpack.c.l.b16 %v258
      %v358 = vunpack.c.l.b16 %v259
      %v359 = vunpack.c.l.b16 %v260
      %v360 = vunpack.c.l.b16 %v261
      %v361 = vunpack.c.l.b16 %v262
      %v362 = vunpack.c.l.b16 %v263
      %v363 = vpack.c.b16 %v358, %v357
      %v364 = vpack.c.b16 %v360, %v359
      %v365 = vpack.c.b16 %v362, %v361
      %vm369 = vcmask 392192
      %v371 = vsel %vm369, %v335, 0
      %v374 = vsel %vm369, %v336, 0
      %v377 = vsel %vm369, %v337, 0
      %v380 = vsel %vm369, %v338, 0
      %v383 = vsel %vm369, %v339, 0
      %v386 = vsel %vm369, %v340, 0
      %v389 = vsel %vm369, %v341, 0
      %v392 = vsel %vm369, %v342, 0
      %v395 = vsel %vm369, %v343, 0
      %v398 = vsel %vm369, %v344, 0
      %v401 = vsel %vm369, %v345, 0
      %v404 = vsel %vm369, %v346, 0
      %v407 = vsel %vm369, %v347, 0
      %v410 = vsel %vm369, %v348, 0
      %v413 = vsel %vm369, %v349, 0
      %v416 = vsel %vm369, %v350, 0
      %418 = vmatprep.subr.bf16.mxu0 0
      %419 = vmatpush1.bf16.msra.mxu0 %v363
      %420 = vmatprep.subr.bf16.mxu0 0
      %421 = vmatpush1.bf16.msra.mxu0 %v364
      %422 = vmatprep.subr.bf16.mxu0 0
      %423 = vmatpush1.bf16.msra.mxu0 %v365
      %424 = vmatprep.subr.bf16.mxu0 0
      %425 = vmatpush1.bf16.msra.mxu0 0
      %426 = vmatprep.subr.bf16.mxu0 0
      %427 = vmatpush1.bf16.msra.mxu0 0
      %428 = vmatprep.subr.bf16.mxu0 0
      %429 = vmatpush1.bf16.msra.mxu0 0
      %430 = vmatprep.subr.bf16.mxu0 0
      %431 = vmatpush1.bf16.msra.mxu0 0
      %432 = vmatprep.subr.bf16.mxu0 0
      %433 = vmatpush1.bf16.msra.mxu0 0
      %434 = vmatprep.subr.bf16.mxu0 0
      %435 = vmatpush1.bf16.msra.mxu0 0
      %436 = vmatprep.subr.bf16.mxu0 0
      %437 = vmatpush1.bf16.msra.mxu0 0
      %438 = vmatprep.subr.bf16.mxu0 0
      %439 = vmatpush1.bf16.msra.mxu0 0
      %440 = vmatprep.subr.bf16.mxu0 0
      %441 = vmatpush1.bf16.msra.mxu0 0
      %442 = vmatprep.subr.bf16.mxu0 0
      %443 = vmatpush1.bf16.msra.mxu0 0
      %444 = vmatprep.subr.bf16.mxu0 0
      %445 = vmatpush1.bf16.msra.mxu0 0
      %446 = vmatprep.subr.bf16.mxu0 0
      %447 = vmatpush1.bf16.msra.mxu0 0
      %448 = vmatprep.subr.bf16.mxu0 0
      %449 = vmatpush1.bf16.msra.mxu0 0
      %450 = vmatprep.mubr.bf16.mxu0 0
      %451 = vmatmul.mubr.bf16.gmra.mrb[0].mxu0 %v371
      %v452 = vpop.f32.mrb[0].mxu0
      %v453 = vadd.f32 %v269, %v452
      %v454 = vpop.f32.mrb[0].mxu0
      %v455 = vpop.f32.mrb[0].mxu0
      %v456 = vadd.f32 %v269, %v455
      %v457 = vpop.f32.mrb[0].mxu0
      %458 = vmatprep.mubr.bf16.mxu0 0
      %459 = vmatmul.mubr.bf16.gmra.mrb[0].mxu0 %v374
      %v460 = vpop.f32.mrb[0].mxu0
      %v461 = vadd.f32 %v269, %v460
      %v462 = vpop.f32.mrb[0].mxu0
      %v463 = vpop.f32.mrb[0].mxu0
      %v464 = vadd.f32 %v269, %v463
      %v465 = vpop.f32.mrb[0].mxu0
      %466 = vmatprep.mubr.bf16.mxu0 0
      %467 = vmatmul.mubr.bf16.gmra.mrb[0].mxu0 %v377
      %v468 = vpop.f32.mrb[0].mxu0
      %v469 = vadd.f32 %v269, %v468
      %v470 = vpop.f32.mrb[0].mxu0
      %v471 = vpop.f32.mrb[0].mxu0
      %v472 = vadd.f32 %v269, %v471
      %v473 = vpop.f32.mrb[0].mxu0
      %474 = vmatprep.mubr.bf16.mxu0 0
      %475 = vmatmul.mubr.bf16.gmra.mrb[0].mxu0 %v380
      %v476 = vpop.f32.mrb[0].mxu0
      %v477 = vadd.f32 %v269, %v476
      %v478 = vpop.f32.mrb[0].mxu0
      %v479 = vpop.f32.mrb[0].mxu0
      %v480 = vadd.f32 %v269, %v479
      %v481 = vpop.f32.mrb[0].mxu0
      %482 = vmatprep.mubr.bf16.mxu0 0
      %483 = vmatmul.mubr.bf16.gmra.mrb[0].mxu0 %v383
      %v484 = vpop.f32.mrb[0].mxu0
      %v485 = vadd.f32 %v269, %v484
      %v486 = vpop.f32.mrb[0].mxu0
      %v487 = vpop.f32.mrb[0].mxu0
      %v488 = vadd.f32 %v269, %v487
      %v489 = vpop.f32.mrb[0].mxu0
      %490 = vmatprep.mubr.bf16.mxu0 0
      %491 = vmatmul.mubr.bf16.gmra.mrb[0].mxu0 %v386
      %v492 = vpop.f32.mrb[0].mxu0
      %v493 = vadd.f32 %v269, %v492
      %v494 = vpop.f32.mrb[0].mxu0
      %v495 = vpop.f32.mrb[0].mxu0
      %v496 = vadd.f32 %v269, %v495
      %v497 = vpop.f32.mrb[0].mxu0
      %498 = vmatprep.mubr.bf16.mxu0 0
      %499 = vmatmul.mubr.bf16.gmra.mrb[0].mxu0 %v389
      %v500 = vpop.f32.mrb[0].mxu0
      %v501 = vadd.f32 %v269, %v500
      %v502 = vpop.f32.mrb[0].mxu0
      %v503 = vpop.f32.mrb[0].mxu0
      %v504 = vadd.f32 %v269, %v503
      %v505 = vpop.f32.mrb[0].mxu0
      %506 = vmatprep.mubr.bf16.mxu0 0
      %507 = vmatmul.mubr.bf16.gmra.mrb[0].mxu0 %v392
      %v508 = vpop.f32.mrb[0].mxu0
      %v509 = vadd.f32 %v269, %v508
      %v510 = vpop.f32.mrb[0].mxu0
      %v511 = vpop.f32.mrb[0].mxu0
      %v512 = vadd.f32 %v269, %v511
      %v513 = vpop.f32.mrb[0].mxu0
      %514 = vmatprep.mubr.bf16.mxu0 0
      %515 = vmatmul.mubr.bf16.gmra.mrb[0].mxu0 %v395
      %v516 = vpop.f32.mrb[0].mxu0
      %v517 = vadd.f32 %v269, %v516
      %v518 = vpop.f32.mrb[0].mxu0
      %v519 = vpop.f32.mrb[0].mxu0
      %v520 = vadd.f32 %v269, %v519
      %v521 = vpop.f32.mrb[0].mxu0
      %522 = vmatprep.mubr.bf16.mxu0 0
      %523 = vmatmul.mubr.bf16.gmra.mrb[0].mxu0 %v398
      %v524 = vpop.f32.mrb[0].mxu0
      %v525 = vadd.f32 %v269, %v524
      %v526 = vpop.f32.mrb[0].mxu0
      %v527 = vpop.f32.mrb[0].mxu0
      %v528 = vadd.f32 %v269, %v527
      %v529 = vpop.f32.mrb[0].mxu0
      %530 = vmatprep.mubr.bf16.mxu0 0
      %531 = vmatmul.mubr.bf16.gmra.mrb[0].mxu0 %v401
      %v532 = vpop.f32.mrb[0].mxu0
      %v533 = vadd.f32 %v269, %v532
      %v534 = vpop.f32.mrb[0].mxu0
      %v535 = vpop.f32.mrb[0].mxu0
      %v536 = vadd.f32 %v269, %v535
      %v537 = vpop.f32.mrb[0].mxu0
      %538 = vmatprep.mubr.bf16.mxu0 0
      %539 = vmatmul.mubr.bf16.gmra.mrb[0].mxu0 %v404
      %v540 = vpop.f32.mrb[0].mxu0
      %v541 = vadd.f32 %v269, %v540
      %v542 = vpop.f32.mrb[0].mxu0
      %v543 = vpop.f32.mrb[0].mxu0
      %v544 = vadd.f32 %v269, %v543
      %v545 = vpop.f32.mrb[0].mxu0
      %546 = vmatprep.mubr.bf16.mxu0 0
      %547 = vmatmul.mubr.bf16.gmra.mrb[0].mxu0 %v407
      %v548 = vpop.f32.mrb[0].mxu0
      %v549 = vadd.f32 %v269, %v548
      %v550 = vpop.f32.mrb[0].mxu0
      %v551 = vpop.f32.mrb[0].mxu0
      %v552 = vadd.f32 %v269, %v551
      %v553 = vpop.f32.mrb[0].mxu0
      %554 = vmatprep.mubr.bf16.mxu0 0
      %555 = vmatmul.mubr.bf16.gmra.mrb[0].mxu0 %v410
      %v556 = vpop.f32.mrb[0].mxu0
      %v557 = vadd.f32 %v269, %v556
      %v558 = vpop.f32.mrb[0].mxu0
      %v559 = vpop.f32.mrb[0].mxu0
      %v560 = vadd.f32 %v269, %v559
      %v561 = vpop.f32.mrb[0].mxu0
      %562 = vmatprep.mubr.bf16.mxu0 0
      %563 = vmatmul.mubr.bf16.gmra.mrb[0].mxu0 %v413
      %v564 = vpop.f32.mrb[0].mxu0
      %v565 = vadd.f32 %v269, %v564
      %v566 = vpop.f32.mrb[0].mxu0
      %v567 = vpop.f32.mrb[0].mxu0
      %v568 = vadd.f32 %v269, %v567
      %v569 = vpop.f32.mrb[0].mxu0
      %570 = vmatprep.mubr.bf16.mxu0 0
      %571 = vmatmul.mubr.bf16.gmra.mrb[0].mxu0 %v416
      %v572 = vpop.f32.mrb[0].mxu0
      %v573 = vadd.f32 %v269, %v572
      %v574 = vpop.f32.mrb[0].mxu0
      %v575 = vpop.f32.mrb[0].mxu0
      %v576 = vadd.f32 %v269, %v575
      %v577 = vpop.f32.mrb[0].mxu0
      %578 = vdwg.mxu0
      %v579 = vmax.f32 %v453, 0.0
      %v580 = vmax.f32 %v456, 0.0
      %v581 = vmax.f32 %v461, 0.0
      %v582 = vmax.f32 %v464, 0.0
      %v583 = vmax.f32 %v469, 0.0
      %v584 = vmax.f32 %v472, 0.0
      %v585 = vmax.f32 %v477, 0.0
      %v586 = vmax.f32 %v480, 0.0
      %v587 = vmax.f32 %v485, 0.0
      %v588 = vmax.f32 %v488, 0.0
      %v589 = vmax.f32 %v493, 0.0
      %v590 = vmax.f32 %v496, 0.0
      %v591 = vmax.f32 %v501, 0.0
      %v592 = vmax.f32 %v504, 0.0
      %v593 = vmax.f32 %v509, 0.0
      %v594 = vmax.f32 %v512, 0.0
      %v595 = vmax.f32 %v517, 0.0
      %v596 = vmax.f32 %v520, 0.0
      %v597 = vmax.f32 %v525, 0.0
      %v598 = vmax.f32 %v528, 0.0
      %v599 = vmax.f32 %v533, 0.0
      %v600 = vmax.f32 %v536, 0.0
      %v601 = vmax.f32 %v541, 0.0
      %v602 = vmax.f32 %v544, 0.0
      %v603 = vmax.f32 %v549, 0.0
      %v604 = vmax.f32 %v552, 0.0
      %v605 = vmax.f32 %v557, 0.0
      %v606 = vmax.f32 %v560, 0.0
      %v607 = vmax.f32 %v565, 0.0
      %v608 = vmax.f32 %v568, 0.0
      %v609 = vmax.f32 %v573, 0.0
      %v610 = vmax.f32 %v576, 0.0
      %v611 = vpack.c.bf16 %v580, %v579
      %v612 = vpack.c.bf16 %v582, %v581
      %v613 = vpack.c.bf16 %v584, %v583
      %v614 = vpack.c.bf16 %v586, %v585
      %v615 = vpack.c.bf16 %v588, %v587
      %v616 = vpack.c.bf16 %v590, %v589
      %v617 = vpack.c.bf16 %v592, %v591
      %v618 = vpack.c.bf16 %v594, %v593
      %v619 = vpack.c.bf16 %v596, %v595
      %v620 = vpack.c.bf16 %v598, %v597
      %v621 = vpack.c.bf16 %v600, %v599
      %v622 = vpack.c.bf16 %v602, %v601
      %v623 = vpack.c.bf16 %v604, %v603
      %v624 = vpack.c.bf16 %v606, %v605
      %v625 = vpack.c.bf16 %v608, %v607
      %v626 = vpack.c.bf16 %v610, %v609
      %v643 = vunpack.c.l.b16 %v611
      %v644 = vunpack.c.h.b16 %v611
      %v645 = vunpack.c.l.b16 %v612
      %v646 = vunpack.c.h.b16 %v612
      %v647 = vunpack.c.l.b16 %v613
      %v648 = vunpack.c.h.b16 %v613
      %v649 = vunpack.c.l.b16 %v614
      %v650 = vunpack.c.h.b16 %v614
      %v651 = vunpack.c.l.b16 %v615
      %v652 = vunpack.c.h.b16 %v615
      %v653 = vunpack.c.l.b16 %v616
      %v654 = vunpack.c.h.b16 %v616
      %v655 = vunpack.c.l.b16 %v617
      %v656 = vunpack.c.h.b16 %v617
      %v657 = vunpack.c.l.b16 %v618
      %v658 = vunpack.c.h.b16 %v618
      %v659 = vunpack.c.l.b16 %v619
      %v660 = vunpack.c.h.b16 %v619
      %v661 = vunpack.c.l.b16 %v620
      %v662 = vunpack.c.h.b16 %v620
      %v663 = vunpack.c.l.b16 %v621
      %v664 = vunpack.c.h.b16 %v621
      %v665 = vunpack.c.l.b16 %v622
      %v666 = vunpack.c.h.b16 %v622
      %v667 = vunpack.c.l.b16 %v623
      %v668 = vunpack.c.h.b16 %v623
      %v669 = vunpack.c.l.b16 %v624
      %v670 = vunpack.c.h.b16 %v624
      %v671 = vunpack.c.l.b16 %v625
      %v672 = vunpack.c.h.b16 %v625
      %v673 = vunpack.c.l.b16 %v626
      %v674 = vunpack.c.h.b16 %v626
      %v675 = vpack.c.b16 %v643, %v643
      %v676 = vpack.c.b16 %v644, %v644
      %v677 = vpack.c.b16 %v645, %v645
      %v678 = vpack.c.b16 %v646, %v646
      %v679 = vpack.c.b16 %v647, %v647
      %v680 = vpack.c.b16 %v648, %v648
      %v681 = vpack.c.b16 %v649, %v649
      %v682 = vpack.c.b16 %v650, %v650
      %v683 = vpack.c.b16 %v651, %v651
      %v684 = vpack.c.b16 %v652, %v652
      %v685 = vpack.c.b16 %v653, %v653
      %v686 = vpack.c.b16 %v654, %v654
      %v687 = vpack.c.b16 %v655, %v655
      %v688 = vpack.c.b16 %v656, %v656
      %v689 = vpack.c.b16 %v657, %v657
      %v690 = vpack.c.b16 %v658, %v658
      %v691 = vpack.c.b16 %v659, %v659
      %v692 = vpack.c.b16 %v660, %v660
      %v693 = vpack.c.b16 %v661, %v661
      %v694 = vpack.c.b16 %v662, %v662
      %v695 = vpack.c.b16 %v663, %v663
      %v696 = vpack.c.b16 %v664, %v664
      %v697 = vpack.c.b16 %v665, %v665
      %v698 = vpack.c.b16 %v666, %v666
      %v699 = vpack.c.b16 %v667, %v667
      %v700 = vpack.c.b16 %v668, %v668
      %v701 = vpack.c.b16 %v669, %v669
      %v702 = vpack.c.b16 %v670, %v670
      %v703 = vpack.c.b16 %v671, %v671
      %v704 = vpack.c.b16 %v672, %v672
      %v705 = vpack.c.b16 %v673, %v673
      %v706 = vpack.c.b16 %v674, %v674
      %vm739 = vcmask 257024
      %740 = vst.msk [vmem:[%s223] sm:$0xf] %vm739, %v675
      %741 = vst.msk [vmem:[%s223 + $0x4] sm:$0xf] %vm739, %v676
      %742 = vst.msk [vmem:[%s223 + $0x8] sm:$0xf] %vm739, %v677
      %743 = vst.msk [vmem:[%s223 + $0xc] sm:$0xf] %vm739, %v678
      %744 = vst.msk [vmem:[%s223 + $0x10] sm:$0xf] %vm739, %v679
      %745 = vst.msk [vmem:[%s223 + $0x14] sm:$0xf] %vm739, %v680
      %746 = vst.msk [vmem:[%s223 + $0x18] sm:$0xf] %vm739, %v681
      %747 = vst.msk [vmem:[%s223 + $0x1c] sm:$0xf] %vm739, %v682
      %748 = vst.msk [vmem:[%s223 + $0x20] sm:$0xf] %vm739, %v683
      %749 = vst.msk [vmem:[%s223 + $0x24] sm:$0xf] %vm739, %v684
      %750 = vst.msk [vmem:[%s223 + $0x28] sm:$0xf] %vm739, %v685
      %751 = vst.msk [vmem:[%s223 + $0x2c] sm:$0xf] %vm739, %v686
      %752 = vst.msk [vmem:[%s223 + $0x30] sm:$0xf] %vm739, %v687
      %753 = vst.msk [vmem:[%s223 + $0x34] sm:$0xf] %vm739, %v688
      %754 = vst.msk [vmem:[%s223 + $0x38] sm:$0xf] %vm739, %v689
      %755 = vst.msk [vmem:[%s223 + $0x3c] sm:$0xf] %vm739, %v690
      %756 = vst.msk [vmem:[%s223 + $0x40] sm:$0xf] %vm739, %v691
      %757 = vst.msk [vmem:[%s223 + $0x44] sm:$0xf] %vm739, %v692
      %758 = vst.msk [vmem:[%s223 + $0x48] sm:$0xf] %vm739, %v693
      %759 = vst.msk [vmem:[%s223 + $0x4c] sm:$0xf] %vm739, %v694
      %760 = vst.msk [vmem:[%s223 + $0x50] sm:$0xf] %vm739, %v695
      %761 = vst.msk [vmem:[%s223 + $0x54] sm:$0xf] %vm739, %v696
      %762 = vst.msk [vmem:[%s223 + $0x58] sm:$0xf] %vm739, %v697
      %763 = vst.msk [vmem:[%s223 + $0x5c] sm:$0xf] %vm739, %v698
      %764 = vst.msk [vmem:[%s223 + $0x60] sm:$0xf] %vm739, %v699
      %765 = vst.msk [vmem:[%s223 + $0x64] sm:$0xf] %vm739, %v700
      %766 = vst.msk [vmem:[%s223 + $0x68] sm:$0xf] %vm739, %v701
      %767 = vst.msk [vmem:[%s223 + $0x6c] sm:$0xf] %vm739, %v702
      %768 = vst.msk [vmem:[%s223 + $0x70] sm:$0xf] %vm739, %v703
      %769 = vst.msk [vmem:[%s223 + $0x74] sm:$0xf] %vm739, %v704
      %770 = vst.msk [vmem:[%s223 + $0x78] sm:$0xf] %vm739, %v705
      %771 = vst.msk [vmem:[%s223 + $0x7c] sm:$0xf] %vm739, %v706
      %s772 = smul.u32 32, %s18
      %p773 = scmp.lt.s32.totalorder %s772, 63
      %s774 = scalar_select %p773, %s772, 63
      %p775 = scmp.lt.s32.totalorder %s19, 0
      %s776 = scalar_select %p775, %s19, 0
      %s777 = sadd.s32 %s776, %s774
      %s778 = smul.addr %s777, 4
      %s779 = scalar_lea.vmem %s3, %s778
      // Predicated region
      $region33: #{segformer_forward.5} parent=31 // pred_check
        %p780 = pneg %p124
      $region34: #{segformer_forward.5} parent=31 // pred_check_branch
        %782 = sbr.rel (%p780) target = $region36
      $region35: #{segformer_forward.5} parent=31 // pred_region
        %s783 = smul.u32 32, %s18
      $region36: #{segformer_forward.5} parent=31 // pred_fallthru
        _
    $region32: #{segformer_forward.5} parent=5 // pred_fallthru
      _
    %p784 = scmp.le.s32.totalorder 2, %s9
    // Predicated region
    $region37: #{segformer_forward.5} parent=5 // pred_check
      %p785 = pneg %p784
    $region38: #{segformer_forward.5} parent=5 // pred_check_branch
      %787 = sbr.rel (%p785) target = $region40
    $region39: #{segformer_forward.5} parent=5 // pred_region
      %s788 = ssub.s32 %s9, 2
      // Predicated region
      $region41: #{segformer_forward.5} parent=39 // pred_check
        %p789 = pneg %p130
      $region42: #{segformer_forward.5} parent=39 // pred_check_branch
        %791 = sbr.rel (%p789) target = $region44
      $region43: #{segformer_forward.5} parent=39 // pred_region
        %s792 = smul.u32 32, %s20
        %p793 = scmp.lt.s32.totalorder %s792, 63
        %s794 = scalar_select %p793, %s792, 63
        %p795 = scmp.lt.s32.totalorder %s21, 0
        %s796 = scalar_select %p795, %s21, 0
        %s797 = sadd.s32 %s796, %s794
        %s798 = smul.addr %s797, 4
        %s799 = scalar_lea.vmem %s3, %s798
      $region44: #{segformer_forward.5} parent=39 // pred_fallthru
        _
    $region40: #{segformer_forward.5} parent=5 // pred_fallthru
      _
  $region6: #{segformer_forward.5} parent=0 // loop_footer
    %s13 = sadd.s32 1, %s9
  $region7: #{segformer_forward.5} parent=0 // loop_footer_branch
    %8 = sbr.rel target = $region3
  $region8: #{segformer_forward.5} parent=0 // loop_exit
    _

// kernel: segformer_forward.6
$region0: #{segformer_forward.6}
  #allocation0 [shape = 'u32[]', space=smem, size = 0x4, offset = 0x4, fixed_abs, tag = 'smem constant byte address 0x4 - core index']
  #allocation1 [shape = 'u32[144,128]{1,0:T(1,128)}', space=vmem, size = 0x12000, scoped, tag = 'internal scratch']
  %s0 = inlined_call_operand.vmem [shape: bf16[128,128], index: 0, kind: input, shape index: {}]
  %s1 = inlined_call_operand.vmem [shape: bf16[128,64], index: 1, kind: input, shape index: {}]
  %s2 = inlined_call_operand.vmem [shape: f32[1,64], index: 2, kind: input, shape index: {}]
  %s3 = inlined_call_operand.vmem [shape: bf16[128,64], index: 3, kind: output, shape index: {}]
  %s4 = sld [smem:[#allocation0]]
  $region22: #{segformer_forward.6} parent=0
    _
  %s6 = ssub.s32 1, %s4
  %s7 = scalar_select 0, %s6, %s4
  // Predicated region
  $region2: #{segformer_forward.6} parent=0 // pred_check
    _
  $region3: #{segformer_forward.6} parent=0 // pred_check_branch
    %9 = sbr.rel (0) target = $region5
  $region4: #{segformer_forward.6} parent=0 // pred_region
    _
  $region5: #{segformer_forward.6} parent=0 // pred_fallthru
    _
  // Predicated region
  $region6: #{segformer_forward.6} parent=0 // pred_check
    _
  $region7: #{segformer_forward.6} parent=0 // pred_check_branch
    %11 = sbr.rel (0) target = $region9
  $region8: #{segformer_forward.6} parent=0 // pred_region
    _
  $region9: #{segformer_forward.6} parent=0 // pred_fallthru
    _
  // Predicated region
  $region10: #{segformer_forward.6} parent=0 // pred_check
    _
  $region11: #{segformer_forward.6} parent=0 // pred_check_branch
    %13 = sbr.rel (0) target = $region13
  $region12: #{segformer_forward.6} parent=0 // pred_region
    _
  $region13: #{segformer_forward.6} parent=0 // pred_fallthru
    _
  %v15 = vld [vmem:[%s0] sm:$0xf]
  %v16 = vld [vmem:[%s0 + $0x4] sm:$0xf]
  %v17 = vld [vmem:[%s0 + $0x8] sm:$0xf]
  %v18 = vld [vmem:[%s0 + $0xc] sm:$0xf]
  %v19 = vld [vmem:[%s0 + $0x10] sm:$0xf]
  %v20 = vld [vmem:[%s0 + $0x14] sm:$0xf]
  %v21 = vld [vmem:[%s0 + $0x18] sm:$0xf]
  %v22 = vld [vmem:[%s0 + $0x1c] sm:$0xf]
  %v23 = vld [vmem:[%s0 + $0x20] sm:$0xf]
  %v24 = vld [vmem:[%s0 + $0x24] sm:$0xf]
  %v25 = vld [vmem:[%s0 + $0x28] sm:$0xf]
  %v26 = vld [vmem:[%s0 + $0x2c] sm:$0xf]
  %v27 = vld [vmem:[%s0 + $0x30] sm:$0xf]
  %v28 = vld [vmem:[%s0 + $0x34] sm:$0xf]
  %v29 = vld [vmem:[%s0 + $0x38] sm:$0xf]
  %v30 = vld [vmem:[%s0 + $0x3c] sm:$0xf]
  %v31 = vld [vmem:[%s1] sm:$0xf]
  %v32 = vld [vmem:[%s1 + $0x4] sm:$0xf]
  %v33 = vld [vmem:[%s1 + $0x8] sm:$0xf]
  %v34 = vld [vmem:[%s1 + $0xc] sm:$0xf]
  %v35 = vld [vmem:[%s1 + $0x10] sm:$0xf]
  %v36 = vld [vmem:[%s1 + $0x14] sm:$0xf]
  %v37 = vld [vmem:[%s1 + $0x18] sm:$0xf]
  %v38 = vld [vmem:[%s1 + $0x1c] sm:$0xf]
  %v39 = vld [vmem:[%s1 + $0x20] sm:$0xf]
  %v40 = vld [vmem:[%s1 + $0x24] sm:$0xf]
  %v41 = vld [vmem:[%s1 + $0x28] sm:$0xf]
  %v42 = vld [vmem:[%s1 + $0x2c] sm:$0xf]
  %v43 = vld [vmem:[%s1 + $0x30] sm:$0xf]
  %v44 = vld [vmem:[%s1 + $0x34] sm:$0xf]
  %v45 = vld [vmem:[%s1 + $0x38] sm:$0xf]
  %v46 = vld [vmem:[%s1 + $0x3c] sm:$0xf]
  %v47 = vld [vmem:[%s2] sm:$0x1]
  %v49 = vlaneseq
  %v50 = vshrl.u32 %v49, 7
  %v51 = vsub.s32 0, %v50
  %v52 = vrot.slane %v47, %v51
  %v70 = vunpack.c.l.b16 %v15
  %v71 = vunpack.c.l.b16 %v16
  %v72 = vunpack.c.l.b16 %v17
  %v73 = vunpack.c.l.b16 %v18
  %v74 = vunpack.c.l.b16 %v19
  %v75 = vunpack.c.l.b16 %v20
  %v76 = vunpack.c.l.b16 %v21
  %v77 = vunpack.c.l.b16 %v22
  %v78 = vunpack.c.l.b16 %v23
  %v79 = vunpack.c.l.b16 %v24
  %v80 = vunpack.c.l.b16 %v25
  %v81 = vunpack.c.l.b16 %v26
  %v82 = vunpack.c.l.b16 %v27
  %v83 = vunpack.c.l.b16 %v28
  %v84 = vunpack.c.l.b16 %v29
  %v85 = vunpack.c.l.b16 %v30
  %v86 = vpack.c.b16 %v71, %v70
  %v87 = vpack.c.b16 %v73, %v72
  %v88 = vpack.c.b16 %v75, %v74
  %v89 = vpack.c.b16 %v77, %v76
  %v90 = vpack.c.b16 %v79, %v78
  %v91 = vpack.c.b16 %v81, %v80
  %v92 = vpack.c.b16 %v83, %v82
  %v93 = vpack.c.b16 %v85, %v84
  %v118 = vunpack.c.l.b16 %v31
  %v119 = vunpack.c.l.b16 %v32
  %v120 = vunpack.c.l.b16 %v33
  %v121 = vunpack.c.l.b16 %v34
  %v122 = vunpack.c.l.b16 %v35
  %v123 = vunpack.c.l.b16 %v36
  %v124 = vunpack.c.l.b16 %v37
  %v125 = vunpack.c.l.b16 %v38
  %v126 = vunpack.c.l.b16 %v39
  %v127 = vunpack.c.l.b16 %v40
  %v128 = vunpack.c.l.b16 %v41
  %v129 = vunpack.c.l.b16 %v42
  %v130 = vunpack.c.l.b16 %v43
  %v131 = vunpack.c.l.b16 %v44
  %v132 = vunpack.c.l.b16 %v45
  %v133 = vunpack.c.l.b16 %v46
  %v134 = vpack.c.b16 %v119, %v118
  %v135 = vpack.c.b16 %v121, %v120
  %v136 = vpack.c.b16 %v123, %v122
  %v137 = vpack.c.b16 %v125, %v124
  %v138 = vpack.c.b16 %v127, %v126
  %v139 = vpack.c.b16 %v129, %v128
  %v140 = vpack.c.b16 %v131, %v130
  %v141 = vpack.c.b16 %v133, %v132
  %150 = vmatprep.subr.bf16.mxu0 0
  %151 = vmatpush1.bf16.msra.mxu0 %v134
  %152 = vmatprep.subr.bf16.mxu0 0
  %153 = vmatpush1.bf16.msra.mxu0 %v135
  %154 = vmatprep.subr.bf16.mxu0 0
  %155 = vmatpush1.bf16.msra.mxu0 %v136
  %156 = vmatprep.subr.bf16.mxu0 0
  %157 = vmatpush1.bf16.msra.mxu0 %v137
  %158 = vmatprep.subr.bf16.mxu0 0
  %159 = vmatpush1.bf16.msra.mxu0 %v138
  %160 = vmatprep.subr.bf16.mxu0 0
  %161 = vmatpush1.bf16.msra.mxu0 %v139
  %162 = vmatprep.subr.bf16.mxu0 0
  %163 = vmatpush1.bf16.msra.mxu0 %v140
  %164 = vmatprep.subr.bf16.mxu0 0
  %165 = vmatpush1.bf16.msra.mxu0 %v141
  %166 = vmatprep.subr.bf16.mxu0 0
  %167 = vmatpush1.bf16.msra.mxu0 0
  %168 = vmatprep.subr.bf16.mxu0 0
  %169 = vmatpush1.bf16.msra.mxu0 0
  %170 = vmatprep.subr.bf16.mxu0 0
  %171 = vmatpush1.bf16.msra.mxu0 0
  %172 = vmatprep.subr.bf16.mxu0 0
  %173 = vmatpush1.bf16.msra.mxu0 0
  %174 = vmatprep.subr.bf16.mxu0 0
  %175 = vmatpush1.bf16.msra.mxu0 0
  %176 = vmatprep.subr.bf16.mxu0 0
  %177 = vmatpush1.bf16.msra.mxu0 0
  %178 = vmatprep.subr.bf16.mxu0 0
  %179 = vmatpush1.bf16.msra.mxu0 0
  %180 = vmatprep.subr.bf16.mxu0 0
  %181 = vmatpush1.bf16.msra.mxu0 0
  %182 = vmatprep.mubr.bf16.mxu0 0
  %183 = vmatmul.mubr.bf16.gmra.mrb[0].mxu0 %v86
  %v184 = vpop.f32.mrb[0].mxu0
  %v185 = vadd.f32 %v52, %v184
  %v186 = vpop.f32.mrb[0].mxu0
  %v187 = vpop.f32.mrb[0].mxu0
  %v188 = vadd.f32 %v52, %v187
  %v189 = vpop.f32.mrb[0].mxu0
  %190 = vmatprep.mubr.bf16.mxu0 0
  %191 = vmatmul.mubr.bf16.gmra.mrb[0].mxu0 %v87
  %v192 = vpop.f32.mrb[0].mxu0
  %v193 = vadd.f32 %v52, %v192
  %v194 = vpop.f32.mrb[0].mxu0
  %v195 = vpop.f32.mrb[0].mxu0
  %v196 = vadd.f32 %v52, %v195
  %v197 = vpop.f32.mrb[0].mxu0
  %198 = vmatprep.mubr.bf16.mxu0 0
  %199 = vmatmul.mubr.bf16.gmra.mrb[0].mxu0 %v88
  %v200 = vpop.f32.mrb[0].mxu0
  %v201 = vadd.f32 %v52, %v200
  %v202 = vpop.f32.mrb[0].mxu0
  %v203 = vpop.f32.mrb[0].mxu0
  %v204 = vadd.f32 %v52, %v203
  %v205 = vpop.f32.mrb[0].mxu0
  %206 = vmatprep.mubr.bf16.mxu0 0
  %207 = vmatmul.mubr.bf16.gmra.mrb[0].mxu0 %v89
  %v208 = vpop.f32.mrb[0].mxu0
  %v209 = vadd.f32 %v52, %v208
  %v210 = vpop.f32.mrb[0].mxu0
  %v211 = vpop.f32.mrb[0].mxu0
  %v212 = vadd.f32 %v52, %v211
  %v213 = vpop.f32.mrb[0].mxu0
  %214 = vmatprep.mubr.bf16.mxu0 0
  %215 = vmatmul.mubr.bf16.gmra.mrb[0].mxu0 %v90
  %v216 = vpop.f32.mrb[0].mxu0
  %v217 = vadd.f32 %v52, %v216
  %v218 = vpop.f32.mrb[0].mxu0
  %v219 = vpop.f32.mrb[0].mxu0
  %v220 = vadd.f32 %v52, %v219
  %v221 = vpop.f32.mrb[0].mxu0
  %222 = vmatprep.mubr.bf16.mxu0 0
  %223 = vmatmul.mubr.bf16.gmra.mrb[0].mxu0 %v91
  %v224 = vpop.f32.mrb[0].mxu0
  %v225 = vadd.f32 %v52, %v224
  %v226 = vpop.f32.mrb[0].mxu0
  %v227 = vpop.f32.mrb[0].mxu0
  %v228 = vadd.f32 %v52, %v227
  %v229 = vpop.f32.mrb[0].mxu0
  %230 = vmatprep.mubr.bf16.mxu0 0
  %231 = vmatmul.mubr.bf16.gmra.mrb[0].mxu0 %v92
  %v232 = vpop.f32.mrb[0].mxu0
  %v233 = vadd.f32 %v52, %v232
  %v234 = vpop.f32.mrb[0].mxu0
  %v235 = vpop.f32.mrb[0].mxu0
  %v236 = vadd.f32 %v52, %v235
  %v237 = vpop.f32.mrb[0].mxu0
  %238 = vmatprep.mubr.bf16.mxu0 0
  %239 = vmatmul.mubr.bf16.gmra.mrb[0].mxu0 %v93
  %v240 = vpop.f32.mrb[0].mxu0
  %v241 = vadd.f32 %v52, %v240
  %v242 = vpop.f32.mrb[0].mxu0
  %v243 = vpop.f32.mrb[0].mxu0
  %v244 = vadd.f32 %v52, %v243
  %v245 = vpop.f32.mrb[0].mxu0
  %246 = vdwg.mxu0
  %v247 = vmax.f32 %v185, 0.0
  %v248 = vmax.f32 %v188, 0.0
  %v249 = vmax.f32 %v193, 0.0
  %v250 = vmax.f32 %v196, 0.0
  %v251 = vmax.f32 %v201, 0.0
  %v252 = vmax.f32 %v204, 0.0
  %v253 = vmax.f32 %v209, 0.0
  %v254 = vmax.f32 %v212, 0.0
  %v255 = vmax.f32 %v217, 0.0
  %v256 = vmax.f32 %v220, 0.0
  %v257 = vmax.f32 %v225, 0.0
  %v258 = vmax.f32 %v228, 0.0
  %v259 = vmax.f32 %v233, 0.0
  %v260 = vmax.f32 %v236, 0.0
  %v261 = vmax.f32 %v241, 0.0
  %v262 = vmax.f32 %v244, 0.0
  %v263 = vpack.c.bf16 %v248, %v247
  %v264 = vpack.c.bf16 %v250, %v249
  %v265 = vpack.c.bf16 %v252, %v251
  %v266 = vpack.c.bf16 %v254, %v253
  %v267 = vpack.c.bf16 %v256, %v255
  %v268 = vpack.c.bf16 %v258, %v257
  %v269 = vpack.c.bf16 %v260, %v259
  %v270 = vpack.c.bf16 %v262, %v261
  %v279 = vunpack.c.l.b16 %v263
  %v280 = vunpack.c.h.b16 %v263
  %v281 = vunpack.c.l.b16 %v264
  %v282 = vunpack.c.h.b16 %v264
  %v283 = vunpack.c.l.b16 %v265
  %v284 = vunpack.c.h.b16 %v265
  %v285 = vunpack.c.l.b16 %v266
  %v286 = vunpack.c.h.b16 %v266
  %v287 = vunpack.c.l.b16 %v267
  %v288 = vunpack.c.h.b16 %v267
  %v289 = vunpack.c.l.b16 %v268
  %v290 = vunpack.c.h.b16 %v268
  %v291 = vunpack.c.l.b16 %v269
  %v292 = vunpack.c.h.b16 %v269
  %v293 = vunpack.c.l.b16 %v270
  %v294 = vunpack.c.h.b16 %v270
  %v295 = vpack.c.b16 %v279, %v279
  %v296 = vpack.c.b16 %v280, %v280
  %v297 = vpack.c.b16 %v281, %v281
  %v298 = vpack.c.b16 %v282, %v282
  %v299 = vpack.c.b16 %v283, %v283
  %v300 = vpack.c.b16 %v284, %v284
  %v301 = vpack.c.b16 %v285, %v285
  %v302 = vpack.c.b16 %v286, %v286
  %v303 = vpack.c.b16 %v287, %v287
  %v304 = vpack.c.b16 %v288, %v288
  %v305 = vpack.c.b16 %v289, %v289
  %v306 = vpack.c.b16 %v290, %v290
  %v307 = vpack.c.b16 %v291, %v291
  %v308 = vpack.c.b16 %v292, %v292
  %v309 = vpack.c.b16 %v293, %v293
  %v310 = vpack.c.b16 %v294, %v294
  %vm327 = vcmask 519168
  %328 = vst.msk [vmem:[%s3] sm:$0xf] %vm327, %v295
  %329 = vst.msk [vmem:[%s3 + $0x4] sm:$0xf] %vm327, %v296
  %330 = vst.msk [vmem:[%s3 + $0x8] sm:$0xf] %vm327, %v297
  %331 = vst.msk [vmem:[%s3 + $0xc] sm:$0xf] %vm327, %v298
  %332 = vst.msk [vmem:[%s3 + $0x10] sm:$0xf] %vm327, %v299
  %333 = vst.msk [vmem:[%s3 + $0x14] sm:$0xf] %vm327, %v300
  %334 = vst.msk [vmem:[%s3 + $0x18] sm:$0xf] %vm327, %v301
  %335 = vst.msk [vmem:[%s3 + $0x1c] sm:$0xf] %vm327, %v302
  %336 = vst.msk [vmem:[%s3 + $0x20] sm:$0xf] %vm327, %v303
  %337 = vst.msk [vmem:[%s3 + $0x24] sm:$0xf] %vm327, %v304
  %338 = vst.msk [vmem:[%s3 + $0x28] sm:$0xf] %vm327, %v305
  %339 = vst.msk [vmem:[%s3 + $0x2c] sm:$0xf] %vm327, %v306
  %340 = vst.msk [vmem:[%s3 + $0x30] sm:$0xf] %vm327, %v307
  %341 = vst.msk [vmem:[%s3 + $0x34] sm:$0xf] %vm327, %v308
  %342 = vst.msk [vmem:[%s3 + $0x38] sm:$0xf] %vm327, %v309
  %343 = vst.msk [vmem:[%s3 + $0x3c] sm:$0xf] %vm327, %v310
  // Predicated region
  $region14: #{segformer_forward.6} parent=0 // pred_check
    _
  $region15: #{segformer_forward.6} parent=0 // pred_check_branch
    %345 = sbr.rel (0) target = $region17
  $region16: #{segformer_forward.6} parent=0 // pred_region
    _
  $region17: #{segformer_forward.6} parent=0 // pred_fallthru
    _
  // Predicated region
  $region18: #{segformer_forward.6} parent=0 // pred_check
    _
  $region19: #{segformer_forward.6} parent=0 // pred_check_branch
    %347 = sbr.rel (0) target = $region21
  $region20: #{segformer_forward.6} parent=0 // pred_region
    _
  $region21: #{segformer_forward.6} parent=0 // pred_fallthru
    _

// kernel: segformer_forward.7
$region0: #{segformer_forward.7}
  #allocation0 [shape = 'u32[]', space=smem, size = 0x4, offset = 0x4, fixed_abs, tag = 'smem constant byte address 0x4 - core index']
  #allocation1 [shape = 'u32[144,128]{1,0:T(1,128)}', space=vmem, size = 0x12000, scoped, tag = 'internal scratch']
  %s0 = inlined_call_operand.vmem [shape: bf16[128,64], index: 0, kind: input, shape index: {}]
  %s1 = inlined_call_operand.vmem [shape: bf16[64,256], index: 1, kind: input, shape index: {}]
  %s2 = inlined_call_operand.vmem [shape: bf16[128,256], index: 2, kind: output, shape index: {}]
  %s3 = sld [smem:[#allocation0]]
  $region119: #{segformer_forward.7} parent=0
    _
  %s5 = ssub.s32 1, %s3
  %s6 = scalar_select 0, %s5, %s3
  $region1: #{segformer_forward.7} parent=0
    #allocation2 [shape = 'u8[32768]{0}', space=vmem, size = 0x8000, scoped, tag = 'input window, operand 1']
    #allocation3 [shape = 'u8[65536]{0}', space=vmem, size = 0x10000, scoped, tag = 'output window, operand 0']
    loop: start=0, step=1, limit=4
    $region2: #{segformer_forward.7} parent=1 // loop_pre_header
      _
    $region3: #{segformer_forward.7} parent=1 // loop_header
      %s8 = sphi 0, %s12
      %p9 = scmp.ge.s32.totalorder %s8, 4
      %s15 = sphi 0, %s27
      %s16 = sphi 0, %s23
      %s17 = sphi 0, %s15
      %s18 = sphi 0, %s16
      %s19 = sphi 0, %s17
      %s20 = sphi 0, %s18
      %s30 = sphi 0, %s32
      %s33 = sphi 0, %s30
      %s34 = sphi 0, %s33
      %s50 = sphi 0, %s34
      %s56 = sphi 0, %s58
      %s59 = sphi 0, %s56
      %s60 = sphi 0, %s59
      %s76 = sphi 0, %s60
      %s84 = sphi 0, %s86
      %s87 = sphi 0, %s84
      %s88 = sphi 0, %s87
      %s104 = sphi 0, %s88
    $region4: #{segformer_forward.7} parent=1 // loop_header_branch
      %11 = sbr.rel (%p9) target = $region8
    $region5: #{segformer_forward.7} parent=1 // loop_body
      %s13 = ssub.s32 %s8, 1
      %s14 = ssub.s32 %s8, 2
      %s21 = sadd.s32 1, %s16
      %p22 = scmp.ge.s32.totalorder %s21, 2
      %s23 = scalar_select %p22, 0, %s21
      %s24 = sadd.s32 1, %s15
      %s25 = scalar_select %p22, %s24, %s15
      %p26 = scmp.ge.s32.totalorder %s25, 1
      %s27 = scalar_select %p26, 0, %s25
      %s28 = ssub.s32 %s15, %s27
      %p29 = scmp.eq.s32.totalorder %s28, 0
      %s31 = sadd.s32 %s30, 1
      %s32 = scalar_select %p29, %s30, %s31
      %p35 = pneg %p29
      %p36 = scmp.eq.s32.totalorder %s8, 1
      %p37 = por %p35, %p36
      %p38 = scmp.ne.s32.totalorder %s30, %s33
      %p39 = scmp.eq.s32.totalorder %s8, 0
      %p40 = por %p38, %p39
      %p41 = scmp.ne.s32.totalorder %s30, %s33
      %p42 = scmp.eq.s32.totalorder %s13, 1
      %p43 = por %p41, %p42
      %p44 = scmp.ne.s32.totalorder %s33, %s34
      %p45 = scmp.eq.s32.totalorder %s13, 0
      %p46 = por %p44, %p45
      %p47 = scmp.ne.s32.totalorder %s33, %s34
      %p48 = scmp.eq.s32.totalorder %s14, 1
      %p49 = por %p47, %p48
      %p51 = scmp.ne.s32.totalorder %s34, %s50
      %p52 = scmp.eq.s32.totalorder %s14, 0
      %p53 = por %p51, %p52
      %s54 = ssub.s32 %s16, %s23
      %p55 = scmp.eq.s32.totalorder %s54, 0
      %s57 = sadd.s32 %s56, 1
      %s58 = scalar_select %p55, %s56, %s57
      %p61 = pneg %p55
      %p62 = scmp.eq.s32.totalorder %s8, 1
      %p63 = por %p61, %p62
      %p64 = scmp.ne.s32.totalorder %s56, %s59
      %p65 = scmp.eq.s32.totalorder %s8, 0
      %p66 = por %p64, %p65
      %p67 = scmp.ne.s32.totalorder %s56, %s59
      %p68 = scmp.eq.s32.totalorder %s13, 1
      %p69 = por %p67, %p68
      %p70 = scmp.ne.s32.totalorder %s59, %s60
      %p71 = scmp.eq.s32.totalorder %s13, 0
      %p72 = por %p70, %p71
      %p73 = scmp.ne.s32.totalorder %s59, %s60
      %p74 = scmp.eq.s32.totalorder %s14, 1
      %p75 = por %p73, %p74
      %p77 = scmp.ne.s32.totalorder %s60, %s76
      %p78 = scmp.eq.s32.totalorder %s14, 0
      %p79 = por %p77, %p78
      %s80 = ssub.s32 %s15, %s27
      %s81 = ssub.s32 %s16, %s23
      %s82 = sor.u32 %s80, %s81
      %p83 = scmp.eq.s32.totalorder %s82, 0
      %s85 = sadd.s32 %s84, 1
      %s86 = scalar_select %p83, %s84, %s85
      %p89 = pneg %p83
      %p90 = scmp.eq.s32.totalorder %s8, 1
      %p91 = por %p89, %p90
      %p92 = scmp.ne.s32.totalorder %s84, %s87
      %p93 = scmp.eq.s32.totalorder %s8, 0
      %p94 = por %p92, %p93
      %p95 = scmp.ne.s32.totalorder %s84, %s87
      %p96 = scmp.eq.s32.totalorder %s13, 1
      %p97 = por %p95, %p96
      %p98 = scmp.ne.s32.totalorder %s87, %s88
      %p99 = scmp.eq.s32.totalorder %s13, 0
      %p100 = por %p98, %p99
      %p101 = scmp.ne.s32.totalorder %s87, %s88
      %p102 = scmp.eq.s32.totalorder %s14, 1
      %p103 = por %p101, %p102
      %p105 = scmp.ne.s32.totalorder %s88, %s104
      %p106 = scmp.eq.s32.totalorder %s14, 0
      %p107 = por %p105, %p106
      %p108 = scmp.le.s32.totalorder 1, %s8
      %p109 = scmp.lt.s32.totalorder %s8, 3
      %p110 = pnand %p108, %p109
      %p111 = pneg %p110
      // Predicated region
      $region9: #{segformer_forward.7} parent=5 // pred_check
        _
      $region10: #{segformer_forward.7} parent=5 // pred_check_branch
        %113 = sbr.rel (%p110) target = $region12
      $region11: #{segformer_forward.7} parent=5 // pred_region
        %s114 = ssub.s32 %s8, 1
        // Predicated region
        $region13: #{segformer_forward.7} parent=11 // pred_check
          %p115 = pneg %p46
        $region14: #{segformer_forward.7} parent=11 // pred_check_branch
          %117 = sbr.rel (%p115) target = $region16
        $region15: #{segformer_forward.7} parent=11 // pred_region
          %s118 = smul.u32 16, %s17
          %p119 = scmp.lt.s32.totalorder %s118, 15
          %s120 = scalar_select %p119, %s118, 15
          %s121 = smul.addr %s120, 4
          %s122 = scalar_lea.vmem %s0, %s121
          %s123 = smul.u32 16, %s17
        $region16: #{segformer_forward.7} parent=11 // pred_fallthru
          _
      $region12: #{segformer_forward.7} parent=5 // pred_fallthru
        _
      %p124 = scmp.lt.s32.totalorder %s8, 2
      // Predicated region
      $region17: #{segformer_forward.7} parent=5 // pred_check
        %p125 = pneg %p124
      $region18: #{segformer_forward.7} parent=5 // pred_check_branch
        %127 = sbr.rel (%p125) target = $region20
      $region19: #{segformer_forward.7} parent=5 // pred_region
        // Predicated region
        $region21: #{segformer_forward.7} parent=19 // pred_check
          %p128 = pneg %p66
        $region22: #{segformer_forward.7} parent=19 // pred_check_branch
          %130 = sbr.rel (%p128) target = $region24
        $region23: #{segformer_forward.7} parent=19 // pred_region
          %s131 = sand.u32 %s56, 1
          %s132 = sand.u32 %s56, 1
          %s133 = smul.addr %s132, 32
          %s134 = scalar_lea.vmem [#allocation2], %s133
          %s135 = smul.addr %s16, 4
          %s136 = scalar_lea.vmem %s1, %s135
          // Predicated region
          $region25: #{segformer_forward.7} parent=23 // pred_check
            _
          $region26: #{segformer_forward.7} parent=23 // pred_check_branch
            %138 = sbr.rel (0) target = $region28
          $region27: #{segformer_forward.7} parent=23 // pred_region
            // Predicated region
            $region29: #{segformer_forward.7} parent=27 // pred_check
              _
            $region30: #{segformer_forward.7} parent=27 // pred_check_branch
              %140 = sbr.rel target = $region32
            $region31: #{segformer_forward.7} parent=27 // pred_region
              // Predicated region
              $region44: #{segformer_forward.7} parent=31 // pred_check
                _
              $region45: #{segformer_forward.7} parent=31 // pred_check_branch
                %169 = sbr.rel (0) target = $region47
              $region46: #{segformer_forward.7} parent=31 // pred_region
                loop: start=0, step=1, limit=1
                $region48: #{segformer_forward.7} parent=46 // loop_pre_header
                  _
                $region49: #{segformer_forward.7} parent=46 // loop_header
                  %s171 = sphi 0, %s175
                  %p172 = scmp.ge.s32.totalorder %s171, 1
                  %s176 = sphi %s136, %s136
                  %s177 = sphi %s134, %s134
                $region50: #{segformer_forward.7} parent=46 // loop_header_branch
                  %174 = sbr.rel (%p172) target = $region54
                $region51: #{segformer_forward.7} parent=46 // loop_body
                  _
                $region52: #{segformer_forward.7} parent=46 // loop_footer
                  %s175 = sadd.s32 1, %s171
                $region53: #{segformer_forward.7} parent=46 // loop_footer_branch
                  %170 = sbr.rel target = $region49
                $region54: #{segformer_forward.7} parent=46 // loop_exit
                  _
                loop: start=0, step=1, limit=1
                $region55: #{segformer_forward.7} parent=46 // loop_pre_header
                  _
                $region56: #{segformer_forward.7} parent=46 // loop_header
                  %s180 = sphi 0, %s184
                  %p181 = scmp.ge.s32.totalorder %s180, 1
                  %s185 = sphi %s136, %s136
                  %s186 = sphi %s134, %s134
                $region57: #{segformer_forward.7} parent=46 // loop_header_branch
                  %183 = sbr.rel (%p181) target = $region61
                $region58: #{segformer_forward.7} parent=46 // loop_body
                  %v187 = vld [vmem:[%s185] sm:$0xf]
                  %188 = vst [vmem:[%s186] sm:$0xf] %v187
                  %v189 = vld [vmem:[%s185 + $0x8] sm:$0xf]
                  %190 = vst [vmem:[%s186 + $0x4] sm:$0xf] %v189
                  %v191 = vld [vmem:[%s185 + $0x10] sm:$0xf]
                  %192 = vst [vmem:[%s186 + $0x8] sm:$0xf] %v191
                  %v193 = vld [vmem:[%s185 + $0x18] sm:$0xf]
                  %194 = vst [vmem:[%s186 + $0xc] sm:$0xf] %v193
                  %v195 = vld [vmem:[%s185 + $0x20] sm:$0xf]
                  %196 = vst [vmem:[%s186 + $0x10] sm:$0xf] %v195
                  %v197 = vld [vmem:[%s185 + $0x28] sm:$0xf]
                  %198 = vst [vmem:[%s186 + $0x14] sm:$0xf] %v197
                  %v199 = vld [vmem:[%s185 + $0x30] sm:$0xf]
                  %200 = vst [vmem:[%s186 + $0x18] sm:$0xf] %v199
                  %v201 = vld [vmem:[%s185 + $0x38] sm:$0xf]
                  %202 = vst [vmem:[%s186 + $0x1c] sm:$0xf] %v201
                $region59: #{segformer_forward.7} parent=46 // loop_footer
                  %s184 = sadd.s32 1, %s180
                $region60: #{segformer_forward.7} parent=46 // loop_footer_branch
                  %179 = sbr.rel target = $region56
                $region61: #{segformer_forward.7} parent=46 // loop_exit
                  _
              $region47: #{segformer_forward.7} parent=31 // pred_fallthru
                _
            $region32: #{segformer_forward.7} parent=27 // pred_fallthru
              _
            // Predicated region
            $region33: #{segformer_forward.7} parent=27 // pred_check
              _
            $region34: #{segformer_forward.7} parent=27 // pred_check_branch
              %142 = sbr.rel (0) target = $region36
            $region35: #{segformer_forward.7} parent=27 // pred_region
              loop: start=0, step=1, limit=1
              $region37: #{segformer_forward.7} parent=35 // loop_pre_header
                _
              $region38: #{segformer_forward.7} parent=35 // loop_header
                %s145 = sphi 0, %s149
                %p146 = scmp.ge.s32.totalorder %s145, 1
                %s150 = sphi %s136, %s136
                %s151 = sphi %s134, %s134
              $region39: #{segformer_forward.7} parent=35 // loop_header_branch
                %148 = sbr.rel (%p146) target = $region43
              $region40: #{segformer_forward.7} parent=35 // loop_body
                %v152 = vld [vmem:[%s150] sm:$0xf]
                %153 = vst [vmem:[%s151] sm:$0xf] %v152
                %v154 = vld [vmem:[%s150 + $0x8] sm:$0xf]
                %155 = vst [vmem:[%s151 + $0x4] sm:$0xf] %v154
                %v156 = vld [vmem:[%s150 + $0x10] sm:$0xf]
                %157 = vst [vmem:[%s151 + $0x8] sm:$0xf] %v156
                %v158 = vld [vmem:[%s150 + $0x18] sm:$0xf]
                %159 = vst [vmem:[%s151 + $0xc] sm:$0xf] %v158
                %v160 = vld [vmem:[%s150 + $0x20] sm:$0xf]
                %161 = vst [vmem:[%s151 + $0x10] sm:$0xf] %v160
                %v162 = vld [vmem:[%s150 + $0x28] sm:$0xf]
                %163 = vst [vmem:[%s151 + $0x14] sm:$0xf] %v162
                %v164 = vld [vmem:[%s150 + $0x30] sm:$0xf]
                %165 = vst [vmem:[%s151 + $0x18] sm:$0xf] %v164
                %v166 = vld [vmem:[%s150 + $0x38] sm:$0xf]
                %167 = vst [vmem:[%s151 + $0x1c] sm:$0xf] %v166
              $region41: #{segformer_forward.7} parent=35 // loop_footer
                %s149 = sadd.s32 1, %s145
              $region42: #{segformer_forward.7} parent=35 // loop_footer_branch
                %144 = sbr.rel target = $region38
              $region43: #{segformer_forward.7} parent=35 // loop_exit
                _
            $region36: #{segformer_forward.7} parent=27 // pred_fallthru
              _
          $region28: #{segformer_forward.7} parent=23 // pred_fallthru
            _
          %203 = vnop
        $region24: #{segformer_forward.7} parent=19 // pred_fallthru
          _
      $region20: #{segformer_forward.7} parent=5 // pred_fallthru
        _
      %p204 = scmp.le.s32.totalorder 1, %s8
      %p205 = scmp.lt.s32.totalorder %s8, 3
      %p206 = pnand %p204, %p205
      %p207 = pneg %p206
      // Predicated region
      $region62: #{segformer_forward.7} parent=5 // pred_check
        _
      $region63: #{segformer_forward.7} parent=5 // pred_check_branch
        %209 = sbr.rel (%p206) target = $region65
      $region64: #{segformer_forward.7} parent=5 // pred_region
        %s210 = ssub.s32 %s8, 1
        %s211 = sand.u32 %s59, 1
        %s212 = sand.u32 %s59, 1
        %s213 = smul.addr %s212, 32
        %s214 = scalar_lea.vmem [#allocation2], %s213
        // Predicated region
        $region66: #{segformer_forward.7} parent=64 // pred_check
          %p215 = pneg %p72
        $region67: #{segformer_forward.7} parent=64 // pred_check_branch
          %217 = sbr.rel (%p215) target = $region69
        $region68: #{segformer_forward.7} parent=64 // pred_region
          _
        $region69: #{segformer_forward.7} parent=64 // pred_fallthru
          _
        %s218 = smul.u32 16, %s17
        %p219 = scmp.lt.s32.totalorder %s218, 15
        %s220 = scalar_select %p219, %s218, 15
        %s221 = smul.addr %s220, 4
        %s222 = scalar_lea.vmem %s0, %s221
        %p223 = pneg %p46
        %p224 = pneg %p43
        %s225 = sand.u32 %s59, 1
        %s226 = sand.u32 %s59, 1
        %s227 = smul.addr %s226, 32
        %s228 = scalar_lea.vmem [#allocation2], %s227
        %p229 = pneg %p72
        %p230 = pneg %p69
        %p231 = pneg %p100
        %p232 = pneg %p97
        %s233 = sand.u32 %s87, 1
        %s234 = sand.u32 %s87, 1
        %s235 = smul.addr %s234, 64
        %s236 = scalar_lea.vmem [#allocation3], %s235
        %s237 = smul.u32 16, %s17
        %p238 = scmp.lt.s32.totalorder %s237, 15
        %s239 = scalar_select %p238, %s237, 15
        %s240 = smul.addr %s239, 4
        %s241 = scalar_lea.vmem %s0, %s240
        %s242 = smul.u32 16, %s17
        %s243 = smul.u32 16, %s17
        %v245 = vld [vmem:[%s241] sm:$0xf]
        %v246 = vld [vmem:[%s241 + $0x4] sm:$0xf]
        %v247 = vld [vmem:[%s241 + $0x8] sm:$0xf]
        %v248 = vld [vmem:[%s241 + $0xc] sm:$0xf]
        %v249 = vld [vmem:[%s241 + $0x10] sm:$0xf]
        %v250 = vld [vmem:[%s241 + $0x14] sm:$0xf]
        %v251 = vld [vmem:[%s241 + $0x18] sm:$0xf]
        %v252 = vld [vmem:[%s241 + $0x1c] sm:$0xf]
        %v253 = vld [vmem:[%s241 + $0x20] sm:$0xf]
        %v254 = vld [vmem:[%s241 + $0x24] sm:$0xf]
        %v255 = vld [vmem:[%s241 + $0x28] sm:$0xf]
        %v256 = vld [vmem:[%s241 + $0x2c] sm:$0xf]
        %v257 = vld [vmem:[%s241 + $0x30] sm:$0xf]
        %v258 = vld [vmem:[%s241 + $0x34] sm:$0xf]
        %v259 = vld [vmem:[%s241 + $0x38] sm:$0xf]
        %v260 = vld [vmem:[%s241 + $0x3c] sm:$0xf]
        %v261 = vld [vmem:[%s214] sm:$0xf]
        %v262 = vld [vmem:[%s214 + $0x4] sm:$0xf]
        %v263 = vld [vmem:[%s214 + $0x8] sm:$0xf]
        %v264 = vld [vmem:[%s214 + $0xc] sm:$0xf]
        %v265 = vld [vmem:[%s214 + $0x10] sm:$0xf]
        %v266 = vld [vmem:[%s214 + $0x14] sm:$0xf]
        %v267 = vld [vmem:[%s214 + $0x18] sm:$0xf]
        %v268 = vld [vmem:[%s214 + $0x1c] sm:$0xf]
        %v285 = vunpack.c.l.b16 %v245
        %v286 = vunpack.c.l.b16 %v246
        %v287 = vunpack.c.l.b16 %v247
        %v288 = vunpack.c.l.b16 %v248
        %v289 = vunpack.c.l.b16 %v249
        %v290 = vunpack.c.l.b16 %v250
        %v291 = vunpack.c.l.b16 %v251
        %v292 = vunpack.c.l.b16 %v252
        %v293 = vunpack.c.l.b16 %v253
        %v294 = vunpack.c.l.b16 %v254
        %v295 = vunpack.c.l.b16 %v255
        %v296 = vunpack.c.l.b16 %v256
        %v297 = vunpack.c.l.b16 %v257
        %v298 = vunpack.c.l.b16 %v258
        %v299 = vunpack.c.l.b16 %v259
        %v300 = vunpack.c.l.b16 %v260
        %v301 = vpack.c.b16 %v286, %v285
        %v302 = vpack.c.b16 %v288, %v287
        %v303 = vpack.c.b16 %v290, %v289
        %v304 = vpack.c.b16 %v292, %v291
        %v305 = vpack.c.b16 %v294, %v293
        %v306 = vpack.c.b16 %v296, %v295
        %v307 = vpack.c.b16 %v298, %v297
        %v308 = vpack.c.b16 %v300, %v299
        %v317 = vunpack.c.l.b16 %v261
        %v318 = vunpack.c.l.b16 %v262
        %v319 = vunpack.c.l.b16 %v263
        %v320 = vunpack.c.l.b16 %v264
        %v321 = vunpack.c.l.b16 %v265
        %v322 = vunpack.c.l.b16 %v266
        %v323 = vunpack.c.l.b16 %v267
        %v324 = vunpack.c.l.b16 %v268
        %v325 = vpack.c.b16 %v318, %v317
        %v326 = vpack.c.b16 %v320, %v319
        %v327 = vpack.c.b16 %v322, %v321
        %v328 = vpack.c.b16 %v324, %v323
        %vm333 = vcmask 523264
        %v335 = vsel %vm333, %v301, 0
        %v338 = vsel %vm333, %v302, 0
        %v341 = vsel %vm333, %v303, 0
        %v344 = vsel %vm333, %v304, 0
        %v347 = vsel %vm333, %v305, 0
        %v350 = vsel %vm333, %v306, 0
        %v353 = vsel %vm333, %v307, 0
        %v356 = vsel %vm333, %v308, 0
        %358 = vmatprep.subr.bf16.mxu0 0
        %359 = vmatpush1.bf16.msra.mxu0 %v325
        %360 = vmatprep.subr.bf16.mxu0 0
        %361 = vmatpush1.bf16.msra.mxu0 %v326
        %362 = vmatprep.subr.bf16.mxu0 0
        %363 = vmatpush1.bf16.msra.mxu0 %v327
        %364 = vmatprep.subr.bf16.mxu0 0
        %365 = vmatpush1.bf16.msra.mxu0 %v328
        %366 = vmatprep.subr.bf16.mxu0 0
        %367 = vmatpush1.bf16.msra.mxu0 0
        %368 = vmatprep.subr.bf16.mxu0 0
        %369 = vmatpush1.bf16.msra.mxu0 0
        %370 = vmatprep.subr.bf16.mxu0 0
        %371 = vmatpush1.bf16.msra.mxu0 0
        %372 = vmatprep.subr.bf16.mxu0 0
        %373 = vmatpush1.bf16.msra.mxu0 0
        %374 = vmatprep.subr.bf16.mxu0 0
        %375 = vmatpush1.bf16.msra.mxu0 0
        %376 = vmatprep.subr.bf16.mxu0 0
        %377 = vmatpush1.bf16.msra.mxu0 0
        %378 = vmatprep.subr.bf16.mxu0 0
        %379 = vmatpush1.bf16.msra.mxu0 0
        %380 = vmatprep.subr.bf16.mxu0 0
        %381 = vmatpush1.bf16.msra.mxu0 0
        %382 = vmatprep.subr.bf16.mxu0 0
        %383 = vmatpush1.bf16.msra.mxu0 0
        %384 = vmatprep.subr.bf16.mxu0 0
        %385 = vmatpush1.bf16.msra.mxu0 0
        %386 = vmatprep.subr.bf16.mxu0 0
        %387 = vmatpush1.bf16.msra.mxu0 0
        %388 = vmatprep.subr.bf16.mxu0 0
        %389 = vmatpush1.bf16.msra.mxu0 0
        %390 = vmatprep.mubr.bf16.mxu0 0
        %391 = vmatmul.mubr.bf16.gmra.mrb[0].mxu0 %v335
        %v392 = vpop.f32.mrb[0].mxu0
        %v393 = vadd.f32 0.0, %v392
        %v394 = vpop.f32.mrb[0].mxu0
        %v395 = vpop.f32.mrb[0].mxu0
        %v396 = vadd.f32 0.0, %v395
        %v397 = vpop.f32.mrb[0].mxu0
        %398 = vmatprep.mubr.bf16.mxu0 0
        %399 = vmatmul.mubr.bf16.gmra.mrb[0].mxu0 %v338
        %v400 = vpop.f32.mrb[0].mxu0
        %v401 = vadd.f32 0.0, %v400
        %v402 = vpop.f32.mrb[0].mxu0
        %v403 = vpop.f32.mrb[0].mxu0
        %v404 = vadd.f32 0.0, %v403
        %v405 = vpop.f32.mrb[0].mxu0
        %406 = vmatprep.mubr.bf16.mxu0 0
        %407 = vmatmul.mubr.bf16.gmra.mrb[0].mxu0 %v341
        %v408 = vpop.f32.mrb[0].mxu0
        %v409 = vadd.f32 0.0, %v408
        %v410 = vpop.f32.mrb[0].mxu0
        %v411 = vpop.f32.mrb[0].mxu0
        %v412 = vadd.f32 0.0, %v411
        %v413 = vpop.f32.mrb[0].mxu0
        %414 = vmatprep.mubr.bf16.mxu0 0
        %415 = vmatmul.mubr.bf16.gmra.mrb[0].mxu0 %v344
        %v416 = vpop.f32.mrb[0].mxu0
        %v417 = vadd.f32 0.0, %v416
        %v418 = vpop.f32.mrb[0].mxu0
        %v419 = vpop.f32.mrb[0].mxu0
        %v420 = vadd.f32 0.0, %v419
        %v421 = vpop.f32.mrb[0].mxu0
        %422 = vmatprep.mubr.bf16.mxu0 0
        %423 = vmatmul.mubr.bf16.gmra.mrb[0].mxu0 %v347
        %v424 = vpop.f32.mrb[0].mxu0
        %v425 = vadd.f32 0.0, %v424
        %v426 = vpop.f32.mrb[0].mxu0
        %v427 = vpop.f32.mrb[0].mxu0
        %v428 = vadd.f32 0.0, %v427
        %v429 = vpop.f32.mrb[0].mxu0
        %430 = vmatprep.mubr.bf16.mxu0 0
        %431 = vmatmul.mubr.bf16.gmra.mrb[0].mxu0 %v350
        %v432 = vpop.f32.mrb[0].mxu0
        %v433 = vadd.f32 0.0, %v432
        %v434 = vpop.f32.mrb[0].mxu0
        %v435 = vpop.f32.mrb[0].mxu0
        %v436 = vadd.f32 0.0, %v435
        %v437 = vpop.f32.mrb[0].mxu0
        %438 = vmatprep.mubr.bf16.mxu0 0
        %439 = vmatmul.mubr.bf16.gmra.mrb[0].mxu0 %v353
        %v440 = vpop.f32.mrb[0].mxu0
        %v441 = vadd.f32 0.0, %v440
        %v442 = vpop.f32.mrb[0].mxu0
        %v443 = vpop.f32.mrb[0].mxu0
        %v444 = vadd.f32 0.0, %v443
        %v445 = vpop.f32.mrb[0].mxu0
        %446 = vmatprep.mubr.bf16.mxu0 0
        %447 = vmatmul.mubr.bf16.gmra.mrb[0].mxu0 %v356
        %v448 = vpop.f32.mrb[0].mxu0
        %v449 = vadd.f32 0.0, %v448
        %v450 = vpop.f32.mrb[0].mxu0
        %v451 = vpop.f32.mrb[0].mxu0
        %v452 = vadd.f32 0.0, %v451
        %v453 = vpop.f32.mrb[0].mxu0
        %454 = vdwg.mxu0
        %v455 = vpack.c.bf16 %v396, %v393
        %v456 = vpack.c.bf16 %v404, %v401
        %v457 = vpack.c.bf16 %v412, %v409
        %v458 = vpack.c.bf16 %v420, %v417
        %v459 = vpack.c.bf16 %v428, %v425
        %v460 = vpack.c.bf16 %v436, %v433
        %v461 = vpack.c.bf16 %v444, %v441
        %v462 = vpack.c.bf16 %v452, %v449
        %v471 = vunpack.c.l.b16 %v455
        %v472 = vunpack.c.h.b16 %v455
        %v473 = vunpack.c.l.b16 %v456
        %v474 = vunpack.c.h.b16 %v456
        %v475 = vunpack.c.l.b16 %v457
        %v476 = vunpack.c.h.b16 %v457
        %v477 = vunpack.c.l.b16 %v458
        %v478 = vunpack.c.h.b16 %v458
        %v479 = vunpack.c.l.b16 %v459
        %v480 = vunpack.c.h.b16 %v459
        %v481 = vunpack.c.l.b16 %v460
        %v482 = vunpack.c.h.b16 %v460
        %v483 = vunpack.c.l.b16 %v461
        %v484 = vunpack.c.h.b16 %v461
        %v485 = vunpack.c.l.b16 %v462
        %v486 = vunpack.c.h.b16 %v462
        %v487 = vpack.c.b16 %v471, %v471
        %v488 = vpack.c.b16 %v472, %v472
        %v489 = vpack.c.b16 %v473, %v473
        %v490 = vpack.c.b16 %v474, %v474
        %v491 = vpack.c.b16 %v475, %v475
        %v492 = vpack.c.b16 %v476, %v476
        %v493 = vpack.c.b16 %v477, %v477
        %v494 = vpack.c.b16 %v478, %v478
        %v495 = vpack.c.b16 %v479, %v479
        %v496 = vpack.c.b16 %v480, %v480
        %v497 = vpack.c.b16 %v481, %v481
        %v498 = vpack.c.b16 %v482, %v482
        %v499 = vpack.c.b16 %v483, %v483
        %v500 = vpack.c.b16 %v484, %v484
        %v501 = vpack.c.b16 %v485, %v485
        %v502 = vpack.c.b16 %v486, %v486
        %519 = vst [vmem:[%s236] sm:$0xf] %v487
        %520 = vst [vmem:[%s236 + $0x4] sm:$0xf] %v488
        %521 = vst [vmem:[%s236 + $0x8] sm:$0xf] %v489
        %522 = vst [vmem:[%s236 + $0xc] sm:$0xf] %v490
        %523 = vst [vmem:[%s236 + $0x10] sm:$0xf] %v491
        %524 = vst [vmem:[%s236 + $0x14] sm:$0xf] %v492
        %525 = vst [vmem:[%s236 + $0x18] sm:$0xf] %v493
        %526 = vst [vmem:[%s236 + $0x1c] sm:$0xf] %v494
        %527 = vst [vmem:[%s236 + $0x20] sm:$0xf] %v495
        %528 = vst [vmem:[%s236 + $0x24] sm:$0xf] %v496
        %529 = vst [vmem:[%s236 + $0x28] sm:$0xf] %v497
        %530 = vst [vmem:[%s236 + $0x2c] sm:$0xf] %v498
        %531 = vst [vmem:[%s236 + $0x30] sm:$0xf] %v499
        %532 = vst [vmem:[%s236 + $0x34] sm:$0xf] %v500
        %533 = vst [vmem:[%s236 + $0x38] sm:$0xf] %v501
        %534 = vst [vmem:[%s236 + $0x3c] sm:$0xf] %v502
        %s535 = sand.u32 %s87, 1
        %s536 = sand.u32 %s87, 1
        %s537 = smul.addr %s536, 64
        %s538 = scalar_lea.vmem [#allocation3], %s537
        // Predicated region
        $region70: #{segformer_forward.7} parent=64 // pred_check
          %p539 = pneg %p97
        $region71: #{segformer_forward.7} parent=64 // pred_check_branch
          %541 = sbr.rel (%p539) target = $region73
        $region72: #{segformer_forward.7} parent=64 // pred_region
          %s542 = smul.u32 16, %s17
          %s543 = smul.addr %s542, 2
          %s544 = sadd.s32 %s18, %s543
          %s545 = smul.addr %s544, 4
          %s546 = scalar_lea.vmem %s2, %s545
          // Predicated region
          $region74: #{segformer_forward.7} parent=72 // pred_check
            _
          $region75: #{segformer_forward.7} parent=72 // pred_check_branch
            %548 = sbr.rel (0) target = $region77
          $region76: #{segformer_forward.7} parent=72 // pred_region
            // Predicated region
            $region78: #{segformer_forward.7} parent=76 // pred_check
              _
            $region79: #{segformer_forward.7} parent=76 // pred_check_branch
              %550 = sbr.rel target = $region81
            $region80: #{segformer_forward.7} parent=76 // pred_region
              // Predicated region
              $region93: #{segformer_forward.7} parent=80 // pred_check
                _
              $region94: #{segformer_forward.7} parent=80 // pred_check_branch
                %595 = sbr.rel (0) target = $region96
              $region95: #{segformer_forward.7} parent=80 // pred_region
                loop: start=0, step=1, limit=1
                $region97: #{segformer_forward.7} parent=95 // loop_pre_header
                  _
                $region98: #{segformer_forward.7} parent=95 // loop_header
                  %s597 = sphi 0, %s601
                  %p598 = scmp.ge.s32.totalorder %s597, 1
                  %s602 = sphi %s538, %s538
                  %s603 = sphi %s546, %s546
                $region99: #{segformer_forward.7} parent=95 // loop_header_branch
                  %600 = sbr.rel (%p598) target = $region103
                $region100: #{segformer_forward.7} parent=95 // loop_body
                  _
                $region101: #{segformer_forward.7} parent=95 // loop_footer
                  %s601 = sadd.s32 1, %s597
                $region102: #{segformer_forward.7} parent=95 // loop_footer_branch
                  %596 = sbr.rel target = $region98
                $region103: #{segformer_forward.7} parent=95 // loop_exit
                  _
                loop: start=0, step=1, limit=1
                $region104: #{segformer_forward.7} parent=95 // loop_pre_header
                  _
                $region105: #{segformer_forward.7} parent=95 // loop_header
                  %s606 = sphi 0, %s610
                  %p607 = scmp.ge.s32.totalorder %s606, 1
                  %s611 = sphi %s538, %s538
                  %s612 = sphi %s546, %s546
                $region106: #{segformer_forward.7} parent=95 // loop_header_branch
                  %609 = sbr.rel (%p607) target = $region110
                $region107: #{segformer_forward.7} parent=95 // loop_body
                  %v613 = vld [vmem:[%s611] sm:$0xf]
                  %614 = vst [vmem:[%s612] sm:$0xf] %v613
                  %v615 = vld [vmem:[%s611 + $0x4] sm:$0xf]
                  %616 = vst [vmem:[%s612 + $0x8] sm:$0xf] %v615
                  %v617 = vld [vmem:[%s611 + $0x8] sm:$0xf]
                  %618 = vst [vmem:[%s612 + $0x10] sm:$0xf] %v617
                  %v619 = vld [vmem:[%s611 + $0xc] sm:$0xf]
                  %620 = vst [vmem:[%s612 + $0x18] sm:$0xf] %v619
                  %v621 = vld [vmem:[%s611 + $0x10] sm:$0xf]
                  %622 = vst [vmem:[%s612 + $0x20] sm:$0xf] %v621
                  %v623 = vld [vmem:[%s611 + $0x14] sm:$0xf]
                  %624 = vst [vmem:[%s612 + $0x28] sm:$0xf] %v623
                  %v625 = vld [vmem:[%s611 + $0x18] sm:$0xf]
                  %626 = vst [vmem:[%s612 + $0x30] sm:$0xf] %v625
                  %v627 = vld [vmem:[%s611 + $0x1c] sm:$0xf]
                  %628 = vst [vmem:[%s612 + $0x38] sm:$0xf] %v627
                  %v629 = vld [vmem:[%s611 + $0x20] sm:$0xf]
                  %630 = vst [vmem:[%s612 + $0x40] sm:$0xf] %v629
                  %v631 = vld [vmem:[%s611 + $0x24] sm:$0xf]
                  %632 = vst [vmem:[%s612 + $0x48] sm:$0xf] %v631
                  %v633 = vld [vmem:[%s611 + $0x28] sm:$0xf]
                  %634 = vst [vmem:[%s612 + $0x50] sm:$0xf] %v633
                  %v635 = vld [vmem:[%s611 + $0x2c] sm:$0xf]
                  %636 = vst [vmem:[%s612 + $0x58] sm:$0xf] %v635
                  %v637 = vld [vmem:[%s611 + $0x30] sm:$0xf]
                  %638 = vst [vmem:[%s612 + $0x60] sm:$0xf] %v637
                  %v639 = vld [vmem:[%s611 + $0x34] sm:$0xf]
                  %640 = vst [vmem:[%s612 + $0x68] sm:$0xf] %v639
                  %v641 = vld [vmem:[%s611 + $0x38] sm:$0xf]
                  %642 = vst [vmem:[%s612 + $0x70] sm:$0xf] %v641
                  %v643 = vld [vmem:[%s611 + $0x3c] sm:$0xf]
                  %644 = vst [vmem:[%s612 + $0x78] sm:$0xf] %v643
                $region108: #{segformer_forward.7} parent=95 // loop_footer
                  %s610 = sadd.s32 1, %s606
                $region109: #{segformer_forward.7} parent=95 // loop_footer_branch
                  %605 = sbr.rel target = $region105
                $region110: #{segformer_forward.7} parent=95 // loop_exit
                  _
              $region96: #{segformer_forward.7} parent=80 // pred_fallthru
                _
            $region81: #{segformer_forward.7} parent=76 // pred_fallthru
              _
            // Predicated region
            $region82: #{segformer_forward.7} parent=76 // pred_check
              _
            $region83: #{segformer_forward.7} parent=76 // pred_check_branch
              %552 = sbr.rel (0) target = $region85
            $region84: #{segformer_forward.7} parent=76 // pred_region
              loop: start=0, step=1, limit=1
              $region86: #{segformer_forward.7} parent=84 // loop_pre_header
                _
              $region87: #{segformer_forward.7} parent=84 // loop_header
                %s555 = sphi 0, %s559
                %p556 = scmp.ge.s32.totalorder %s555, 1
                %s560 = sphi %s538, %s538
                %s561 = sphi %s546, %s546
              $region88: #{segformer_forward.7} parent=84 // loop_header_branch
                %558 = sbr.rel (%p556) target = $region92
              $region89: #{segformer_forward.7} parent=84 // loop_body
                %v562 = vld [vmem:[%s560] sm:$0xf]
                %563 = vst [vmem:[%s561] sm:$0xf] %v562
                %v564 = vld [vmem:[%s560 + $0x4] sm:$0xf]
                %565 = vst [vmem:[%s561 + $0x8] sm:$0xf] %v564
                %v566 = vld [vmem:[%s560 + $0x8] sm:$0xf]
                %567 = vst [vmem:[%s561 + $0x10] sm:$0xf] %v566
                %v568 = vld [vmem:[%s560 + $0xc] sm:$0xf]
                %569 = vst [vmem:[%s561 + $0x18] sm:$0xf] %v568
                %v570 = vld [vmem:[%s560 + $0x10] sm:$0xf]
                %571 = vst [vmem:[%s561 + $0x20] sm:$0xf] %v570
                %v572 = vld [vmem:[%s560 + $0x14] sm:$0xf]
                %573 = vst [vmem:[%s561 + $0x28] sm:$0xf] %v572
                %v574 = vld [vmem:[%s560 + $0x18] sm:$0xf]
                %575 = vst [vmem:[%s561 + $0x30] sm:$0xf] %v574
                %v576 = vld [vmem:[%s560 + $0x1c] sm:$0xf]
                %577 = vst [vmem:[%s561 + $0x38] sm:$0xf] %v576
                %v578 = vld [vmem:[%s560 + $0x20] sm:$0xf]
                %579 = vst [vmem:[%s561 + $0x40] sm:$0xf] %v578
                %v580 = vld [vmem:[%s560 + $0x24] sm:$0xf]
                %581 = vst [vmem:[%s561 + $0x48] sm:$0xf] %v580
                %v582 = vld [vmem:[%s560 + $0x28] sm:$0xf]
                %583 = vst [vmem:[%s561 + $0x50] sm:$0xf] %v582
                %v584 = vld [vmem:[%s560 + $0x2c] sm:$0xf]
                %585 = vst [vmem:[%s561 + $0x58] sm:$0xf] %v584
                %v586 = vld [vmem:[%s560 + $0x30] sm:$0xf]
                %587 = vst [vmem:[%s561 + $0x60] sm:$0xf] %v586
                %v588 = vld [vmem:[%s560 + $0x34] sm:$0xf]
                %589 = vst [vmem:[%s561 + $0x68] sm:$0xf] %v588
                %v590 = vld [vmem:[%s560 + $0x38] sm:$0xf]
                %591 = vst [vmem:[%s561 + $0x70] sm:$0xf] %v590
                %v592 = vld [vmem:[%s560 + $0x3c] sm:$0xf]
                %593 = vst [vmem:[%s561 + $0x78] sm:$0xf] %v592
              $region90: #{segformer_forward.7} parent=84 // loop_footer
                %s559 = sadd.s32 1, %s555
              $region91: #{segformer_forward.7} parent=84 // loop_footer_branch
                %554 = sbr.rel target = $region87
              $region92: #{segformer_forward.7} parent=84 // loop_exit
                _
            $region85: #{segformer_forward.7} parent=76 // pred_fallthru
              _
          $region77: #{segformer_forward.7} parent=72 // pred_fallthru
            _
          %645 = vnop
        $region73: #{segformer_forward.7} parent=64 // pred_fallthru
          _
      $region65: #{segformer_forward.7} parent=5 // pred_fallthru
        _
      %p646 = scmp.le.s32.totalorder 2, %s8
      // Predicated region
      $region111: #{segformer_forward.7} parent=5 // pred_check
        %p647 = pneg %p646
      $region112: #{segformer_forward.7} parent=5 // pred_check_branch
        %649 = sbr.rel (%p647) target = $region114
      $region113: #{segformer_forward.7} parent=5 // pred_region
        %s650 = ssub.s32 %s8, 2
        // Predicated region
        $region115: #{segformer_forward.7} parent=113 // pred_check
          %p651 = pneg %p103
        $region116: #{segformer_forward.7} parent=113 // pred_check_branch
          %653 = sbr.rel (%p651) target = $region118
        $region117: #{segformer_forward.7} parent=113 // pred_region
          %s654 = sand.u32 %s88, 1
          %s655 = sand.u32 %s88, 1
          %s656 = smul.addr %s655, 64
          %s657 = scalar_lea.vmem [#allocation3], %s656
        $region118: #{segformer_forward.7} parent=113 // pred_fallthru
          _
      $region114: #{segformer_forward.7} parent=5 // pred_fallthru
        _
    $region6: #{segformer_forward.7} parent=1 // loop_footer
      %s12 = sadd.s32 1, %s8
    $region7: #{segformer_forward.7} parent=1 // loop_footer_branch
      %7 = sbr.rel target = $region3
    $region8: #{segformer_forward.7} parent=1 // loop_exit
      _

// kernel: segformer_forward.8
$region0: #{segformer_forward.8}
  #allocation0 [shape = 'u32[]', space=smem, size = 0x4, offset = 0x4, fixed_abs, tag = 'smem constant byte address 0x4 - core index']
  #allocation1 [shape = 'u32[144,128]{1,0:T(1,128)}', space=vmem, size = 0x12000, scoped, tag = 'internal scratch']
  %s0 = inlined_call_operand.vmem [shape: bf16[512,32], index: 0, kind: input, shape index: {}]
  %s1 = inlined_call_operand.vmem [shape: bf16[32,256], index: 1, kind: input, shape index: {}]
  %s2 = inlined_call_operand.vmem [shape: bf16[512,256], index: 2, kind: output, shape index: {}]
  %s3 = sld [smem:[#allocation0]]
  $region41: #{segformer_forward.8} parent=0
    _
  %s5 = ssub.s32 1, %s3
  %s6 = scalar_select 0, %s5, %s3
  loop: start=0, step=1, limit=4
  $region2: #{segformer_forward.8} parent=0 // loop_pre_header
    _
  $region3: #{segformer_forward.8} parent=0 // loop_header
    %s8 = sphi 0, %s12
    %p9 = scmp.ge.s32.totalorder %s8, 4
    %s15 = sphi 0, %s27
    %s16 = sphi 0, %s23
    %s17 = sphi 0, %s15
    %s18 = sphi 0, %s16
    %s19 = sphi 0, %s17
    %s20 = sphi 0, %s18
    %s30 = sphi 0, %s32
    %s33 = sphi 0, %s30
    %s34 = sphi 0, %s33
    %s50 = sphi 0, %s34
    %s56 = sphi 0, %s58
    %s59 = sphi 0, %s56
    %s60 = sphi 0, %s59
    %s76 = sphi 0, %s60
    %s84 = sphi 0, %s86
    %s87 = sphi 0, %s84
    %s88 = sphi 0, %s87
    %s104 = sphi 0, %s88
  $region4: #{segformer_forward.8} parent=0 // loop_header_branch
    %11 = sbr.rel (%p9) target = $region8
  $region5: #{segformer_forward.8} parent=0 // loop_body
    %s13 = ssub.s32 %s8, 1
    %s14 = ssub.s32 %s8, 2
    %s21 = sadd.s32 1, %s16
    %p22 = scmp.ge.s32.totalorder %s21, 1
    %s23 = scalar_select %p22, 0, %s21
    %s24 = sadd.s32 1, %s15
    %s25 = scalar_select %p22, %s24, %s15
    %p26 = scmp.ge.s32.totalorder %s25, 2
    %s27 = scalar_select %p26, 0, %s25
    %s28 = ssub.s32 %s15, %s27
    %p29 = scmp.eq.s32.totalorder %s28, 0
    %s31 = sadd.s32 %s30, 1
    %s32 = scalar_select %p29, %s30, %s31
    %p35 = pneg %p29
    %p36 = scmp.eq.s32.totalorder %s8, 1
    %p37 = por %p35, %p36
    %p38 = scmp.ne.s32.totalorder %s30, %s33
    %p39 = scmp.eq.s32.totalorder %s8, 0
    %p40 = por %p38, %p39
    %p41 = scmp.ne.s32.totalorder %s30, %s33
    %p42 = scmp.eq.s32.totalorder %s13, 1
    %p43 = por %p41, %p42
    %p44 = scmp.ne.s32.totalorder %s33, %s34
    %p45 = scmp.eq.s32.totalorder %s13, 0
    %p46 = por %p44, %p45
    %p47 = scmp.ne.s32.totalorder %s33, %s34
    %p48 = scmp.eq.s32.totalorder %s14, 1
    %p49 = por %p47, %p48
    %p51 = scmp.ne.s32.totalorder %s34, %s50
    %p52 = scmp.eq.s32.totalorder %s14, 0
    %p53 = por %p51, %p52
    %s54 = ssub.s32 %s16, %s23
    %p55 = scmp.eq.s32.totalorder %s54, 0
    %s57 = sadd.s32 %s56, 1
    %s58 = scalar_select %p55, %s56, %s57
    %p61 = pneg %p55
    %p62 = scmp.eq.s32.totalorder %s8, 1
    %p63 = por %p61, %p62
    %p64 = scmp.ne.s32.totalorder %s56, %s59
    %p65 = scmp.eq.s32.totalorder %s8, 0
    %p66 = por %p64, %p65
    %p67 = scmp.ne.s32.totalorder %s56, %s59
    %p68 = scmp.eq.s32.totalorder %s13, 1
    %p69 = por %p67, %p68
    %p70 = scmp.ne.s32.totalorder %s59, %s60
    %p71 = scmp.eq.s32.totalorder %s13, 0
    %p72 = por %p70, %p71
    %p73 = scmp.ne.s32.totalorder %s59, %s60
    %p74 = scmp.eq.s32.totalorder %s14, 1
    %p75 = por %p73, %p74
    %p77 = scmp.ne.s32.totalorder %s60, %s76
    %p78 = scmp.eq.s32.totalorder %s14, 0
    %p79 = por %p77, %p78
    %s80 = ssub.s32 %s15, %s27
    %s81 = ssub.s32 %s16, %s23
    %s82 = sor.u32 %s80, %s81
    %p83 = scmp.eq.s32.totalorder %s82, 0
    %s85 = sadd.s32 %s84, 1
    %s86 = scalar_select %p83, %s84, %s85
    %p89 = pneg %p83
    %p90 = scmp.eq.s32.totalorder %s8, 1
    %p91 = por %p89, %p90
    %p92 = scmp.ne.s32.totalorder %s84, %s87
    %p93 = scmp.eq.s32.totalorder %s8, 0
    %p94 = por %p92, %p93
    %p95 = scmp.ne.s32.totalorder %s84, %s87
    %p96 = scmp.eq.s32.totalorder %s13, 1
    %p97 = por %p95, %p96
    %p98 = scmp.ne.s32.totalorder %s87, %s88
    %p99 = scmp.eq.s32.totalorder %s13, 0
    %p100 = por %p98, %p99
    %p101 = scmp.ne.s32.totalorder %s87, %s88
    %p102 = scmp.eq.s32.totalorder %s14, 1
    %p103 = por %p101, %p102
    %p105 = scmp.ne.s32.totalorder %s88, %s104
    %p106 = scmp.eq.s32.totalorder %s14, 0
    %p107 = por %p105, %p106
    %p108 = scmp.le.s32.totalorder 1, %s8
    %p109 = scmp.lt.s32.totalorder %s8, 3
    %p110 = pnand %p108, %p109
    %p111 = pneg %p110
    // Predicated region
    $region9: #{segformer_forward.8} parent=5 // pred_check
      _
    $region10: #{segformer_forward.8} parent=5 // pred_check_branch
      %113 = sbr.rel (%p110) target = $region12
    $region11: #{segformer_forward.8} parent=5 // pred_region
      %s114 = ssub.s32 %s8, 1
      // Predicated region
      $region13: #{segformer_forward.8} parent=11 // pred_check
        %p115 = pneg %p72
      $region14: #{segformer_forward.8} parent=11 // pred_check_branch
        %117 = sbr.rel (%p115) target = $region16
      $region15: #{segformer_forward.8} parent=11 // pred_region
        %s118 = smul.u32 2, %s18
        %p119 = scmp.lt.s32.totalorder %s118, 1
        %s120 = scalar_select %p119, %s118, 1
        %s121 = smul.addr %s120, 4
        %s122 = scalar_lea.vmem %s1, %s121
        %s123 = smul.u32 2, %s18
      $region16: #{segformer_forward.8} parent=11 // pred_fallthru
        _
    $region12: #{segformer_forward.8} parent=5 // pred_fallthru
      _
    %p124 = scmp.lt.s32.totalorder %s8, 2
    // Predicated region
    $region17: #{segformer_forward.8} parent=5 // pred_check
      %p125 = pneg %p124
    $region18: #{segformer_forward.8} parent=5 // pred_check_branch
      %127 = sbr.rel (%p125) target = $region20
    $region19: #{segformer_forward.8} parent=5 // pred_region
      // Predicated region
      $region21: #{segformer_forward.8} parent=19 // pred_check
        %p128 = pneg %p40
      $region22: #{segformer_forward.8} parent=19 // pred_check_branch
        %130 = sbr.rel (%p128) target = $region24
      $region23: #{segformer_forward.8} parent=19 // pred_region
        %s131 = smul.u32 32, %s15
        %p132 = scmp.lt.s32.totalorder %s131, 63
        %s133 = scalar_select %p132, %s131, 63
        %s134 = smul.addr %s133, 4
        %s135 = scalar_lea.vmem %s0, %s134
        %s136 = smul.u32 32, %s15
      $region24: #{segformer_forward.8} parent=19 // pred_fallthru
        _
    $region20: #{segformer_forward.8} parent=5 // pred_fallthru
      _
    %p137 = scmp.le.s32.totalorder 1, %s8
    %p138 = scmp.lt.s32.totalorder %s8, 3
    %p139 = pnand %p137, %p138
    %p140 = pneg %p139
    // Predicated region
    $region25: #{segformer_forward.8} parent=5 // pred_check
      _
    $region26: #{segformer_forward.8} parent=5 // pred_check_branch
      %142 = sbr.rel (%p139) target = $region28
    $region27: #{segformer_forward.8} parent=5 // pred_region
      %s143 = ssub.s32 %s8, 1
      %s144 = smul.u32 32, %s17
      %p145 = scmp.lt.s32.totalorder %s144, 63
      %s146 = scalar_select %p145, %s144, 63
      %s147 = smul.addr %s146, 4
      %s148 = scalar_lea.vmem %s0, %s147
      %p149 = pneg %p46
      %p150 = pneg %p43
      %s151 = smul.u32 2, %s18
      %p152 = scmp.lt.s32.totalorder %s151, 1
      %s153 = scalar_select %p152, %s151, 1
      %s154 = smul.addr %s153, 4
      %s155 = scalar_lea.vmem %s1, %s154
      %p156 = pneg %p72
      %p157 = pneg %p69
      %p158 = pneg %p100
      %p159 = pneg %p97
      %s160 = smul.u32 32, %s17
      %s161 = smul.u32 2, %s18
      %p162 = scmp.lt.s32.totalorder %s160, 63
      %s163 = scalar_select %p162, %s160, 63
      %p164 = scmp.lt.s32.totalorder %s161, 1
      %s165 = scalar_select %p164, %s161, 1
      %s166 = smul.addr %s163, 2
      %s167 = sadd.s32 %s165, %s166
      %s168 = smul.addr %s167, 4
      %s169 = scalar_lea.vmem %s2, %s168
      %s170 = smul.u32 32, %s17
      %p171 = scmp.lt.s32.totalorder %s170, 63
      %s172 = scalar_select %p171, %s170, 63
      %s173 = smul.addr %s172, 4
      %s174 = scalar_lea.vmem %s0, %s173
      %s175 = smul.u32 32, %s17
      %s176 = smul.u32 2, %s18
      %p177 = scmp.lt.s32.totalorder %s176, 1
      %s178 = scalar_select %p177, %s176, 1
      %s179 = smul.addr %s178, 4
      %s180 = scalar_lea.vmem %s1, %s179
      %s181 = smul.u32 2, %s18
      %s182 = smul.u32 32, %s17
      %s183 = smul.u32 2, %s18
      %p184 = scmp.lt.s32.totalorder %s182, 63
      %s185 = scalar_select %p184, %s182, 63
      %p186 = scmp.lt.s32.totalorder %s183, 1
      %s187 = scalar_select %p186, %s183, 1
      %s188 = smul.addr %s185, 2
      %s189 = sadd.s32 %s187, %s188
      %s190 = smul.addr %s189, 4
      %s191 = scalar_lea.vmem %s2, %s190
      %s192 = smul.u32 32, %s17
      %s193 = smul.u32 2, %s18
      %v195 = vld [vmem:[%s174] sm:$0xf]
      %v196 = vld [vmem:[%s174 + $0x4] sm:$0xf]
      %v197 = vld [vmem:[%s174 + $0x8] sm:$0xf]
      %v198 = vld [vmem:[%s174 + $0xc] sm:$0xf]
      %v199 = vld [vmem:[%s174 + $0x10] sm:$0xf]
      %v200 = vld [vmem:[%s174 + $0x14] sm:$0xf]
      %v201 = vld [vmem:[%s174 + $0x18] sm:$0xf]
      %v202 = vld [vmem:[%s174 + $0x1c] sm:$0xf]
      %v203 = vld [vmem:[%s174 + $0x20] sm:$0xf]
      %v204 = vld [vmem:[%s174 + $0x24] sm:$0xf]
      %v205 = vld [vmem:[%s174 + $0x28] sm:$0xf]
      %v206 = vld [vmem:[%s174 + $0x2c] sm:$0xf]
      %v207 = vld [vmem:[%s174 + $0x30] sm:$0xf]
      %v208 = vld [vmem:[%s174 + $0x34] sm:$0xf]
      %v209 = vld [vmem:[%s174 + $0x38] sm:$0xf]
      %v210 = vld [vmem:[%s174 + $0x3c] sm:$0xf]
      %v211 = vld [vmem:[%s174 + $0x40] sm:$0xf]
      %v212 = vld [vmem:[%s174 + $0x44] sm:$0xf]
      %v213 = vld [vmem:[%s174 + $0x48] sm:$0xf]
      %v214 = vld [vmem:[%s174 + $0x4c] sm:$0xf]
      %v215 = vld [vmem:[%s174 + $0x50] sm:$0xf]
      %v216 = vld [vmem:[%s174 + $0x54] sm:$0xf]
      %v217 = vld [vmem:[%s174 + $0x58] sm:$0xf]
      %v218 = vld [vmem:[%s174 + $0x5c] sm:$0xf]
      %v219 = vld [vmem:[%s174 + $0x60] sm:$0xf]
      %v220 = vld [vmem:[%s174 + $0x64] sm:$0xf]
      %v221 = vld [vmem:[%s174 + $0x68] sm:$0xf]
      %v222 = vld [vmem:[%s174 + $0x6c] sm:$0xf]
      %v223 = vld [vmem:[%s174 + $0x70] sm:$0xf]
      %v224 = vld [vmem:[%s174 + $0x74] sm:$0xf]
      %v225 = vld [vmem:[%s174 + $0x78] sm:$0xf]
      %v226 = vld [vmem:[%s174 + $0x7c] sm:$0xf]
      %v227 = vld [vmem:[%s180] sm:$0xff]
      %v228 = vld [vmem:[%s180 + $0x8] sm:$0xff]
      %v229 = vld [vmem:[%s180 + $0x10] sm:$0xff]
      %v230 = vld [vmem:[%s180 + $0x18] sm:$0xff]
      %v263 = vunpack.c.l.b16 %v195
      %v264 = vunpack.c.l.b16 %v196
      %v265 = vunpack.c.l.b16 %v197
      %v266 = vunpack.c.l.b16 %v198
      %v267 = vunpack.c.l.b16 %v199
      %v268 = vunpack.c.l.b16 %v200
      %v269 = vunpack.c.l.b16 %v201
      %v270 = vunpack.c.l.b16 %v202
      %v271 = vunpack.c.l.b16 %v203
      %v272 = vunpack.c.l.b16 %v204
      %v273 = vunpack.c.l.b16 %v205
      %v274 = vunpack.c.l.b16 %v206
      %v275 = vunpack.c.l.b16 %v207
      %v276 = vunpack.c.l.b16 %v208
      %v277 = vunpack.c.l.b16 %v209
      %v278 = vunpack.c.l.b16 %v210
      %v279 = vunpack.c.l.b16 %v211
      %v280 = vunpack.c.l.b16 %v212
      %v281 = vunpack.c.l.b16 %v213
      %v282 = vunpack.c.l.b16 %v214
      %v283 = vunpack.c.l.b16 %v215
      %v284 = vunpack.c.l.b16 %v216
      %v285 = vunpack.c.l.b16 %v217
      %v286 = vunpack.c.l.b16 %v218
      %v287 = vunpack.c.l.b16 %v219
      %v288 = vunpack.c.l.b16 %v220
      %v289 = vunpack.c.l.b16 %v221
      %v290 = vunpack.c.l.b16 %v222
      %v291 = vunpack.c.l.b16 %v223
      %v292 = vunpack.c.l.b16 %v224
      %v293 = vunpack.c.l.b16 %v225
      %v294 = vunpack.c.l.b16 %v226
      %v295 = vpack.c.b16 %v264, %v263
      %v296 = vpack.c.b16 %v266, %v265
      %v297 = vpack.c.b16 %v268, %v267
      %v298 = vpack.c.b16 %v270, %v269
      %v299 = vpack.c.b16 %v272, %v271
      %v300 = vpack.c.b16 %v274, %v273
      %v301 = vpack.c.b16 %v276, %v275
      %v302 = vpack.c.b16 %v278, %v277
      %v303 = vpack.c.b16 %v280, %v279
      %v304 = vpack.c.b16 %v282, %v281
      %v305 = vpack.c.b16 %v284, %v283
      %v306 = vpack.c.b16 %v286, %v285
      %v307 = vpack.c.b16 %v288, %v287
      %v308 = vpack.c.b16 %v290, %v289
      %v309 = vpack.c.b16 %v292, %v291
      %v310 = vpack.c.b16 %v294, %v293
      %v315 = vunpack.c.l.b16 %v227
      %v316 = vunpack.c.h.b16 %v227
      %v317 = vunpack.c.l.b16 %v228
      %v318 = vunpack.c.h.b16 %v228
      %v319 = vunpack.c.l.b16 %v229
      %v320 = vunpack.c.h.b16 %v229
      %v321 = vunpack.c.l.b16 %v230
      %v322 = vunpack.c.h.b16 %v230
      %v323 = vpack.c.b16 %v317, %v315
      %v324 = vpack.c.b16 %v318, %v316
      %v325 = vpack.c.b16 %v321, %v319
      %v326 = vpack.c.b16 %v322, %v320
      %vm331 = vcmask 261120
      %v333 = vsel %vm331, %v295, 0
      %v336 = vsel %vm331, %v296, 0
      %v339 = vsel %vm331, %v297, 0
      %v342 = vsel %vm331, %v298, 0
      %v345 = vsel %vm331, %v299, 0
      %v348 = vsel %vm331, %v300, 0
      %v351 = vsel %vm331, %v301, 0
      %v354 = vsel %vm331, %v302, 0
      %v357 = vsel %vm331, %v303, 0
      %v360 = vsel %vm331, %v304, 0
      %v363 = vsel %vm331, %v305, 0
      %v366 = vsel %vm331, %v306, 0
      %v369 = vsel %vm331, %v307, 0
      %v372 = vsel %vm331, %v308, 0
      %v375 = vsel %vm331, %v309, 0
      %v378 = vsel %vm331, %v310, 0
      %380 = vmatprep.subr.bf16.mxu0 %v324
      %381 = vmatpush1.bf16.msra.mxu0 %v323
      %382 = vmatprep.subr.bf16.mxu0 %v326
      %383 = vmatpush1.bf16.msra.mxu0 %v325
      %384 = vmatprep.subr.bf16.mxu0 0
      %385 = vmatpush1.bf16.msra.mxu0 0
      %386 = vmatprep.subr.bf16.mxu0 0
      %387 = vmatpush1.bf16.msra.mxu0 0
      %388 = vmatprep.subr.bf16.mxu0 0
      %389 = vmatpush1.bf16.msra.mxu0 0
      %390 = vmatprep.subr.bf16.mxu0 0
      %391 = vmatpush1.bf16.msra.mxu0 0
      %392 = vmatprep.subr.bf16.mxu0 0
      %393 = vmatpush1.bf16.msra.mxu0 0
      %394 = vmatprep.subr.bf16.mxu0 0
      %395 = vmatpush1.bf16.msra.mxu0 0
      %396 = vmatprep.subr.bf16.mxu0 0
      %397 = vmatpush1.bf16.msra.mxu0 0
      %398 = vmatprep.subr.bf16.mxu0 0
      %399 = vmatpush1.bf16.msra.mxu0 0
      %400 = vmatprep.subr.bf16.mxu0 0
      %401 = vmatpush1.bf16.msra.mxu0 0
      %402 = vmatprep.subr.bf16.mxu0 0
      %403 = vmatpush1.bf16.msra.mxu0 0
      %404 = vmatprep.subr.bf16.mxu0 0
      %405 = vmatpush1.bf16.msra.mxu0 0
      %406 = vmatprep.subr.bf16.mxu0 0
      %407 = vmatpush1.bf16.msra.mxu0 0
      %408 = vmatprep.subr.bf16.mxu0 0
      %409 = vmatpush1.bf16.msra.mxu0 0
      %410 = vmatprep.subr.bf16.mxu0 0
      %411 = vmatpush1.bf16.msra.mxu0 0
      %412 = vmatprep.mubr.bf16.mxu0 0
      %413 = vmatmul.mubr.bf16.gmra.mrb[0].mxu0 %v333
      %v414 = vpop.f32.mrb[0].mxu0
      %v415 = vadd.f32 0.0, %v414
      %v416 = vpop.f32.mrb[0].mxu0
      %v417 = vadd.f32 0.0, %v416
      %v418 = vpop.f32.mrb[0].mxu0
      %v419 = vadd.f32 0.0, %v418
      %v420 = vpop.f32.mrb[0].mxu0
      %v421 = vadd.f32 0.0, %v420
      %422 = vmatprep.mubr.bf16.mxu0 0
      %423 = vmatmul.mubr.bf16.gmra.mrb[0].mxu0 %v336
      %v424 = vpop.f32.mrb[0].mxu0
      %v425 = vadd.f32 0.0, %v424
      %v426 = vpop.f32.mrb[0].mxu0
      %v427 = vadd.f32 0.0, %v426
      %v428 = vpop.f32.mrb[0].mxu0
      %v429 = vadd.f32 0.0, %v428
      %v430 = vpop.f32.mrb[0].mxu0
      %v431 = vadd.f32 0.0, %v430
      %432 = vmatprep.mubr.bf16.mxu0 0
      %433 = vmatmul.mubr.bf16.gmra.mrb[0].mxu0 %v339
      %v434 = vpop.f32.mrb[0].mxu0
      %v435 = vadd.f32 0.0, %v434
      %v436 = vpop.f32.mrb[0].mxu0
      %v437 = vadd.f32 0.0, %v436
      %v438 = vpop.f32.mrb[0].mxu0
      %v439 = vadd.f32 0.0, %v438
      %v440 = vpop.f32.mrb[0].mxu0
      %v441 = vadd.f32 0.0, %v440
      %442 = vmatprep.mubr.bf16.mxu0 0
      %443 = vmatmul.mubr.bf16.gmra.mrb[0].mxu0 %v342
      %v444 = vpop.f32.mrb[0].mxu0
      %v445 = vadd.f32 0.0, %v444
      %v446 = vpop.f32.mrb[0].mxu0
      %v447 = vadd.f32 0.0, %v446
      %v448 = vpop.f32.mrb[0].mxu0
      %v449 = vadd.f32 0.0, %v448
      %v450 = vpop.f32.mrb[0].mxu0
      %v451 = vadd.f32 0.0, %v450
      %452 = vmatprep.mubr.bf16.mxu0 0
      %453 = vmatmul.mubr.bf16.gmra.mrb[0].mxu0 %v345
      %v454 = vpop.f32.mrb[0].mxu0
      %v455 = vadd.f32 0.0, %v454
      %v456 = vpop.f32.mrb[0].mxu0
      %v457 = vadd.f32 0.0, %v456
      %v458 = vpop.f32.mrb[0].mxu0
      %v459 = vadd.f32 0.0, %v458
      %v460 = vpop.f32.mrb[0].mxu0
      %v461 = vadd.f32 0.0, %v460
      %462 = vmatprep.mubr.bf16.mxu0 0
      %463 = vmatmul.mubr.bf16.gmra.mrb[0].mxu0 %v348
      %v464 = vpop.f32.mrb[0].mxu0
      %v465 = vadd.f32 0.0, %v464
      %v466 = vpop.f32.mrb[0].mxu0
      %v467 = vadd.f32 0.0, %v466
      %v468 = vpop.f32.mrb[0].mxu0
      %v469 = vadd.f32 0.0, %v468
      %v470 = vpop.f32.mrb[0].mxu0
      %v471 = vadd.f32 0.0, %v470
      %472 = vmatprep.mubr.bf16.mxu0 0
      %473 = vmatmul.mubr.bf16.gmra.mrb[0].mxu0 %v351
      %v474 = vpop.f32.mrb[0].mxu0
      %v475 = vadd.f32 0.0, %v474
      %v476 = vpop.f32.mrb[0].mxu0
      %v477 = vadd.f32 0.0, %v476
      %v478 = vpop.f32.mrb[0].mxu0
      %v479 = vadd.f32 0.0, %v478
      %v480 = vpop.f32.mrb[0].mxu0
      %v481 = vadd.f32 0.0, %v480
      %482 = vmatprep.mubr.bf16.mxu0 0
      %483 = vmatmul.mubr.bf16.gmra.mrb[0].mxu0 %v354
      %v484 = vpop.f32.mrb[0].mxu0
      %v485 = vadd.f32 0.0, %v484
      %v486 = vpop.f32.mrb[0].mxu0
      %v487 = vadd.f32 0.0, %v486
      %v488 = vpop.f32.mrb[0].mxu0
      %v489 = vadd.f32 0.0, %v488
      %v490 = vpop.f32.mrb[0].mxu0
      %v491 = vadd.f32 0.0, %v490
      %492 = vmatprep.mubr.bf16.mxu0 0
      %493 = vmatmul.mubr.bf16.gmra.mrb[0].mxu0 %v357
      %v494 = vpop.f32.mrb[0].mxu0
      %v495 = vadd.f32 0.0, %v494
      %v496 = vpop.f32.mrb[0].mxu0
      %v497 = vadd.f32 0.0, %v496
      %v498 = vpop.f32.mrb[0].mxu0
      %v499 = vadd.f32 0.0, %v498
      %v500 = vpop.f32.mrb[0].mxu0
      %v501 = vadd.f32 0.0, %v500
      %502 = vmatprep.mubr.bf16.mxu0 0
      %503 = vmatmul.mubr.bf16.gmra.mrb[0].mxu0 %v360
      %v504 = vpop.f32.mrb[0].mxu0
      %v505 = vadd.f32 0.0, %v504
      %v506 = vpop.f32.mrb[0].mxu0
      %v507 = vadd.f32 0.0, %v506
      %v508 = vpop.f32.mrb[0].mxu0
      %v509 = vadd.f32 0.0, %v508
      %v510 = vpop.f32.mrb[0].mxu0
      %v511 = vadd.f32 0.0, %v510
      %512 = vmatprep.mubr.bf16.mxu0 0
      %513 = vmatmul.mubr.bf16.gmra.mrb[0].mxu0 %v363
      %v514 = vpop.f32.mrb[0].mxu0
      %v515 = vadd.f32 0.0, %v514
      %v516 = vpop.f32.mrb[0].mxu0
      %v517 = vadd.f32 0.0, %v516
      %v518 = vpop.f32.mrb[0].mxu0
      %v519 = vadd.f32 0.0, %v518
      %v520 = vpop.f32.mrb[0].mxu0
      %v521 = vadd.f32 0.0, %v520
      %522 = vmatprep.mubr.bf16.mxu0 0
      %523 = vmatmul.mubr.bf16.gmra.mrb[0].mxu0 %v366
      %v524 = vpop.f32.mrb[0].mxu0
      %v525 = vadd.f32 0.0, %v524
      %v526 = vpop.f32.mrb[0].mxu0
      %v527 = vadd.f32 0.0, %v526
      %v528 = vpop.f32.mrb[0].mxu0
      %v529 = vadd.f32 0.0, %v528
      %v530 = vpop.f32.mrb[0].mxu0
      %v531 = vadd.f32 0.0, %v530
      %532 = vmatprep.mubr.bf16.mxu0 0
      %533 = vmatmul.mubr.bf16.gmra.mrb[0].mxu0 %v369
      %v534 = vpop.f32.mrb[0].mxu0
      %v535 = vadd.f32 0.0, %v534
      %v536 = vpop.f32.mrb[0].mxu0
      %v537 = vadd.f32 0.0, %v536
      %v538 = vpop.f32.mrb[0].mxu0
      %v539 = vadd.f32 0.0, %v538
      %v540 = vpop.f32.mrb[0].mxu0
      %v541 = vadd.f32 0.0, %v540
      %542 = vmatprep.mubr.bf16.mxu0 0
      %543 = vmatmul.mubr.bf16.gmra.mrb[0].mxu0 %v372
      %v544 = vpop.f32.mrb[0].mxu0
      %v545 = vadd.f32 0.0, %v544
      %v546 = vpop.f32.mrb[0].mxu0
      %v547 = vadd.f32 0.0, %v546
      %v548 = vpop.f32.mrb[0].mxu0
      %v549 = vadd.f32 0.0, %v548
      %v550 = vpop.f32.mrb[0].mxu0
      %v551 = vadd.f32 0.0, %v550
      %552 = vmatprep.mubr.bf16.mxu0 0
      %553 = vmatmul.mubr.bf16.gmra.mrb[0].mxu0 %v375
      %v554 = vpop.f32.mrb[0].mxu0
      %v555 = vadd.f32 0.0, %v554
      %v556 = vpop.f32.mrb[0].mxu0
      %v557 = vadd.f32 0.0, %v556
      %v558 = vpop.f32.mrb[0].mxu0
      %v559 = vadd.f32 0.0, %v558
      %v560 = vpop.f32.mrb[0].mxu0
      %v561 = vadd.f32 0.0, %v560
      %562 = vmatprep.mubr.bf16.mxu0 0
      %563 = vmatmul.mubr.bf16.gmra.mrb[0].mxu0 %v378
      %v564 = vpop.f32.mrb[0].mxu0
      %v565 = vadd.f32 0.0, %v564
      %v566 = vpop.f32.mrb[0].mxu0
      %v567 = vadd.f32 0.0, %v566
      %v568 = vpop.f32.mrb[0].mxu0
      %v569 = vadd.f32 0.0, %v568
      %v570 = vpop.f32.mrb[0].mxu0
      %v571 = vadd.f32 0.0, %v570
      %572 = vdwg.mxu0
      %v573 = vpack.c.bf16 %v419, %v415
      %v574 = vpack.c.bf16 %v421, %v417
      %v575 = vpack.c.bf16 %v429, %v425
      %v576 = vpack.c.bf16 %v431, %v427
      %v577 = vpack.c.bf16 %v439, %v435
      %v578 = vpack.c.bf16 %v441, %v437
      %v579 = vpack.c.bf16 %v449, %v445
      %v580 = vpack.c.bf16 %v451, %v447
      %v581 = vpack.c.bf16 %v459, %v455
      %v582 = vpack.c.bf16 %v461, %v457
      %v583 = vpack.c.bf16 %v469, %v465
      %v584 = vpack.c.bf16 %v471, %v467
      %v585 = vpack.c.bf16 %v479, %v475
      %v586 = vpack.c.bf16 %v481, %v477
      %v587 = vpack.c.bf16 %v489, %v485
      %v588 = vpack.c.bf16 %v491, %v487
      %v589 = vpack.c.bf16 %v499, %v495
      %v590 = vpack.c.bf16 %v501, %v497
      %v591 = vpack.c.bf16 %v509, %v505
      %v592 = vpack.c.bf16 %v511, %v507
      %v593 = vpack.c.bf16 %v519, %v515
      %v594 = vpack.c.bf16 %v521, %v517
      %v595 = vpack.c.bf16 %v529, %v525
      %v596 = vpack.c.bf16 %v531, %v527
      %v597 = vpack.c.bf16 %v539, %v535
      %v598 = vpack.c.bf16 %v541, %v537
      %v599 = vpack.c.bf16 %v549, %v545
      %v600 = vpack.c.bf16 %v551, %v547
      %v601 = vpack.c.bf16 %v559, %v555
      %v602 = vpack.c.bf16 %v561, %v557
      %v603 = vpack.c.bf16 %v569, %v565
      %v604 = vpack.c.bf16 %v571, %v567
      %v637 = vunpack.c.l.b16 %v573
      %v638 = vunpack.c.l.b16 %v574
      %v639 = vunpack.c.h.b16 %v573
      %v640 = vunpack.c.h.b16 %v574
      %v641 = vunpack.c.l.b16 %v575
      %v642 = vunpack.c.l.b16 %v576
      %v643 = vunpack.c.h.b16 %v575
      %v644 = vunpack.c.h.b16 %v576
      %v645 = vunpack.c.l.b16 %v577
      %v646 = vunpack.c.l.b16 %v578
      %v647 = vunpack.c.h.b16 %v577
      %v648 = vunpack.c.h.b16 %v578
      %v649 = vunpack.c.l.b16 %v579
      %v650 = vunpack.c.l.b16 %v580
      %v651 = vunpack.c.h.b16 %v579
      %v652 = vunpack.c.h.b16 %v580
      %v653 = vunpack.c.l.b16 %v581
      %v654 = vunpack.c.l.b16 %v582
      %v655 = vunpack.c.h.b16 %v581
      %v656 = vunpack.c.h.b16 %v582
      %v657 = vunpack.c.l.b16 %v583
      %v658 = vunpack.c.l.b16 %v584
      %v659 = vunpack.c.h.b16 %v583
      %v660 = vunpack.c.h.b16 %v584
      %v661 = vunpack.c.l.b16 %v585
      %v662 = vunpack.c.l.b16 %v586
      %v663 = vunpack.c.h.b16 %v585
      %v664 = vunpack.c.h.b16 %v586
      %v665 = vunpack.c.l.b16 %v587
      %v666 = vunpack.c.l.b16 %v588
      %v667 = vunpack.c.h.b16 %v587
      %v668 = vunpack.c.h.b16 %v588
      %v669 = vunpack.c.l.b16 %v589
      %v670 = vunpack.c.l.b16 %v590
      %v671 = vunpack.c.h.b16 %v589
      %v672 = vunpack.c.h.b16 %v590
      %v673 = vunpack.c.l.b16 %v591
      %v674 = vunpack.c.l.b16 %v592
      %v675 = vunpack.c.h.b16 %v591
      %v676 = vunpack.c.h.b16 %v592
      %v677 = vunpack.c.l.b16 %v593
      %v678 = vunpack.c.l.b16 %v594
      %v679 = vunpack.c.h.b16 %v593
      %v680 = vunpack.c.h.b16 %v594
      %v681 = vunpack.c.l.b16 %v595
      %v682 = vunpack.c.l.b16 %v596
      %v683 = vunpack.c.h.b16 %v595
      %v684 = vunpack.c.h.b16 %v596
      %v685 = vunpack.c.l.b16 %v597
      %v686 = vunpack.c.l.b16 %v598
      %v687 = vunpack.c.h.b16 %v597
      %v688 = vunpack.c.h.b16 %v598
      %v689 = vunpack.c.l.b16 %v599
      %v690 = vunpack.c.l.b16 %v600
      %v691 = vunpack.c.h.b16 %v599
      %v692 = vunpack.c.h.b16 %v600
      %v693 = vunpack.c.l.b16 %v601
      %v694 = vunpack.c.l.b16 %v602
      %v695 = vunpack.c.h.b16 %v601
      %v696 = vunpack.c.h.b16 %v602
      %v697 = vunpack.c.l.b16 %v603
      %v698 = vunpack.c.l.b16 %v604
      %v699 = vunpack.c.h.b16 %v603
      %v700 = vunpack.c.h.b16 %v604
      %v701 = vpack.c.b16 %v638, %v637
      %v702 = vpack.c.b16 %v640, %v639
      %v703 = vpack.c.b16 %v642, %v641
      %v704 = vpack.c.b16 %v644, %v643
      %v705 = vpack.c.b16 %v646, %v645
      %v706 = vpack.c.b16 %v648, %v647
      %v707 = vpack.c.b16 %v650, %v649
      %v708 = vpack.c.b16 %v652, %v651
      %v709 = vpack.c.b16 %v654, %v653
      %v710 = vpack.c.b16 %v656, %v655
      %v711 = vpack.c.b16 %v658, %v657
      %v712 = vpack.c.b16 %v660, %v659
      %v713 = vpack.c.b16 %v662, %v661
      %v714 = vpack.c.b16 %v664, %v663
      %v715 = vpack.c.b16 %v666, %v665
      %v716 = vpack.c.b16 %v668, %v667
      %v717 = vpack.c.b16 %v670, %v669
      %v718 = vpack.c.b16 %v672, %v671
      %v719 = vpack.c.b16 %v674, %v673
      %v720 = vpack.c.b16 %v676, %v675
      %v721 = vpack.c.b16 %v678, %v677
      %v722 = vpack.c.b16 %v680, %v679
      %v723 = vpack.c.b16 %v682, %v681
      %v724 = vpack.c.b16 %v684, %v683
      %v725 = vpack.c.b16 %v686, %v685
      %v726 = vpack.c.b16 %v688, %v687
      %v727 = vpack.c.b16 %v690, %v689
      %v728 = vpack.c.b16 %v692, %v691
      %v729 = vpack.c.b16 %v694, %v693
      %v730 = vpack.c.b16 %v696, %v695
      %v731 = vpack.c.b16 %v698, %v697
      %v732 = vpack.c.b16 %v700, %v699
      %765 = vst [vmem:[%s191] sm:$0xff] %v701
      %766 = vst [vmem:[%s191 + $0x8] sm:$0xff] %v702
      %767 = vst [vmem:[%s191 + $0x10] sm:$0xff] %v703
      %768 = vst [vmem:[%s191 + $0x18] sm:$0xff] %v704
      %769 = vst [vmem:[%s191 + $0x20] sm:$0xff] %v705
      %770 = vst [vmem:[%s191 + $0x28] sm:$0xff] %v706
      %771 = vst [vmem:[%s191 + $0x30] sm:$0xff] %v707
      %772 = vst [vmem:[%s191 + $0x38] sm:$0xff] %v708
      %773 = vst [vmem:[%s191 + $0x40] sm:$0xff] %v709
      %774 = vst [vmem:[%s191 + $0x48] sm:$0xff] %v710
      %775 = vst [vmem:[%s191 + $0x50] sm:$0xff] %v711
      %776 = vst [vmem:[%s191 + $0x58] sm:$0xff] %v712
      %777 = vst [vmem:[%s191 + $0x60] sm:$0xff] %v713
      %778 = vst [vmem:[%s191 + $0x68] sm:$0xff] %v714
      %779 = vst [vmem:[%s191 + $0x70] sm:$0xff] %v715
      %780 = vst [vmem:[%s191 + $0x78] sm:$0xff] %v716
      %781 = vst [vmem:[%s191 + $0x80] sm:$0xff] %v717
      %782 = vst [vmem:[%s191 + $0x88] sm:$0xff] %v718
      %783 = vst [vmem:[%s191 + $0x90] sm:$0xff] %v719
      %784 = vst [vmem:[%s191 + $0x98] sm:$0xff] %v720
      %785 = vst [vmem:[%s191 + $0xa0] sm:$0xff] %v721
      %786 = vst [vmem:[%s191 + $0xa8] sm:$0xff] %v722
      %787 = vst [vmem:[%s191 + $0xb0] sm:$0xff] %v723
      %788 = vst [vmem:[%s191 + $0xb8] sm:$0xff] %v724
      %789 = vst [vmem:[%s191 + $0xc0] sm:$0xff] %v725
      %790 = vst [vmem:[%s191 + $0xc8] sm:$0xff] %v726
      %791 = vst [vmem:[%s191 + $0xd0] sm:$0xff] %v727
      %792 = vst [vmem:[%s191 + $0xd8] sm:$0xff] %v728
      %793 = vst [vmem:[%s191 + $0xe0] sm:$0xff] %v729
      %794 = vst [vmem:[%s191 + $0xe8] sm:$0xff] %v730
      %795 = vst [vmem:[%s191 + $0xf0] sm:$0xff] %v731
      %796 = vst [vmem:[%s191 + $0xf8] sm:$0xff] %v732
      %s797 = smul.u32 32, %s17
      %s798 = smul.u32 2, %s18
      %p799 = scmp.lt.s32.totalorder %s797, 63
      %s800 = scalar_select %p799, %s797, 63
      %p801 = scmp.lt.s32.totalorder %s798, 1
      %s802 = scalar_select %p801, %s798, 1
      %s803 = smul.addr %s800, 2
      %s804 = sadd.s32 %s802, %s803
      %s805 = smul.addr %s804, 4
      %s806 = scalar_lea.vmem %s2, %s805
      // Predicated region
      $region29: #{segformer_forward.8} parent=27 // pred_check
        %p807 = pneg %p97
      $region30: #{segformer_forward.8} parent=27 // pred_check_branch
        %809 = sbr.rel (%p807) target = $region32
      $region31: #{segformer_forward.8} parent=27 // pred_region
        %s810 = smul.u32 32, %s17
        %s811 = smul.u32 2, %s18
      $region32: #{segformer_forward.8} parent=27 // pred_fallthru
        _
    $region28: #{segformer_forward.8} parent=5 // pred_fallthru
      _
    %p812 = scmp.le.s32.totalorder 2, %s8
    // Predicated region
    $region33: #{segformer_forward.8} parent=5 // pred_check
      %p813 = pneg %p812
    $region34: #{segformer_forward.8} parent=5 // pred_check_branch
      %815 = sbr.rel (%p813) target = $region36
    $region35: #{segformer_forward.8} parent=5 // pred_region
      %s816 = ssub.s32 %s8, 2
      // Predicated region
      $region37: #{segformer_forward.8} parent=35 // pred_check
        %p817 = pneg %p103
      $region38: #{segformer_forward.8} parent=35 // pred_check_branch
        %819 = sbr.rel (%p817) target = $region40
      $region39: #{segformer_forward.8} parent=35 // pred_region
        %s820 = smul.u32 32, %s19
        %s821 = smul.u32 2, %s20
        %p822 = scmp.lt.s32.totalorder %s820, 63
        %s823 = scalar_select %p822, %s820, 63
        %p824 = scmp.lt.s32.totalorder %s821, 1
        %s825 = scalar_select %p824, %s821, 1
        %s826 = smul.addr %s823, 2
        %s827 = sadd.s32 %s825, %s826
        %s828 = smul.addr %s827, 4
        %s829 = scalar_lea.vmem %s2, %s828
      $region40: #{segformer_forward.8} parent=35 // pred_fallthru
        _
    $region36: #{segformer_forward.8} parent=5 // pred_fallthru
      _
  $region6: #{segformer_forward.8} parent=0 // loop_footer
    %s12 = sadd.s32 1, %s8
  $region7: #{segformer_forward.8} parent=0 // loop_footer_branch
    %7 = sbr.rel target = $region3
  $region8: #{segformer_forward.8} parent=0 // loop_exit
    _

// kernel: segformer_forward.9
$region0: #{segformer_forward.9}
  #allocation0 [shape = 'u32[]', space=smem, size = 0x4, offset = 0x4, fixed_abs, tag = 'smem constant byte address 0x4 - core index']
  #allocation1 [shape = 'u32[144,128]{1,0:T(1,128)}', space=vmem, size = 0x12000, scoped, tag = 'internal scratch']
  %s0 = inlined_call_operand.vmem [shape: bf16[512,256], index: 0, kind: input, shape index: {}]
  %s1 = inlined_call_operand.vmem [shape: f32[1,256], index: 1, kind: input, shape index: {}]
  %s2 = inlined_call_operand.vmem [shape: f32[1,256], index: 2, kind: input, shape index: {}]
  %s3 = inlined_call_operand.vmem [shape: bf16[256,21], index: 3, kind: input, shape index: {}]
  %s4 = inlined_call_operand.vmem [shape: f32[1,21], index: 4, kind: input, shape index: {}]
  %s5 = inlined_call_operand.vmem [shape: f32[512,21], index: 5, kind: output, shape index: {}]
  %s6 = sld [smem:[#allocation0]]
  $region53: #{segformer_forward.9} parent=0
    _
  %s8 = ssub.s32 1, %s6
  %s9 = scalar_select 0, %s8, %s6
  loop: start=0, step=1, limit=4
  $region2: #{segformer_forward.9} parent=0 // loop_pre_header
    _
  $region3: #{segformer_forward.9} parent=0 // loop_header
    %s11 = sphi 0, %s15
    %p12 = scmp.ge.s32.totalorder %s11, 4
    %s21 = sphi 0, %s23
    %s24 = sphi 0, %s21
    %s25 = sphi 0, %s24
    %s41 = sphi 0, %s25
    %s45 = sphi 0, %s45
    %s47 = sphi 0, %s45
    %s48 = sphi 0, %s47
    %s62 = sphi 0, %s48
    %s66 = sphi 0, %s66
    %s68 = sphi 0, %s66
    %s69 = sphi 0, %s68
    %s83 = sphi 0, %s69
    %s87 = sphi 0, %s87
    %s89 = sphi 0, %s87
    %s90 = sphi 0, %s89
    %s104 = sphi 0, %s90
    %s108 = sphi 0, %s108
    %s110 = sphi 0, %s108
    %s111 = sphi 0, %s110
    %s125 = sphi 0, %s111
    %s131 = sphi 0, %s133
    %s134 = sphi 0, %s131
    %s135 = sphi 0, %s134
    %s151 = sphi 0, %s135
  $region4: #{segformer_forward.9} parent=0 // loop_header_branch
    %14 = sbr.rel (%p12) target = $region8
  $region5: #{segformer_forward.9} parent=0 // loop_body
    %s16 = ssub.s32 %s11, 1
    %s17 = ssub.s32 %s11, 2
    %s18 = sadd.s32 %s11, 1
    %s19 = ssub.s32 %s11, %s18
    %p20 = scmp.eq.s32.totalorder %s19, 0
    %s22 = sadd.s32 %s21, 1
    %s23 = scalar_select %p20, %s21, %s22
    %p26 = pneg %p20
    %p27 = scmp.eq.s32.totalorder %s11, 1
    %p28 = por %p26, %p27
    %p29 = scmp.ne.s32.totalorder %s21, %s24
    %p30 = scmp.eq.s32.totalorder %s11, 0
    %p31 = por %p29, %p30
    %p32 = scmp.ne.s32.totalorder %s21, %s24
    %p33 = scmp.eq.s32.totalorder %s16, 1
    %p34 = por %p32, %p33
    %p35 = scmp.ne.s32.totalorder %s24, %s25
    %p36 = scmp.eq.s32.totalorder %s16, 0
    %p37 = por %p35, %p36
    %p38 = scmp.ne.s32.totalorder %s24, %s25
    %p39 = scmp.eq.s32.totalorder %s17, 1
    %p40 = por %p38, %p39
    %p42 = scmp.ne.s32.totalorder %s25, %s41
    %p43 = scmp.eq.s32.totalorder %s17, 0
    %p44 = por %p42, %p43
    %s46 = sadd.s32 %s45, 1
    %p49 = scmp.eq.s32.totalorder %s11, 1
    %p50 = scmp.ne.s32.totalorder %s45, %s47
    %p51 = scmp.eq.s32.totalorder %s11, 0
    %p52 = por %p50, %p51
    %p53 = scmp.ne.s32.totalorder %s45, %s47
    %p54 = scmp.eq.s32.totalorder %s16, 1
    %p55 = por %p53, %p54
    %p56 = scmp.ne.s32.totalorder %s47, %s48
    %p57 = scmp.eq.s32.totalorder %s16, 0
    %p58 = por %p56, %p57
    %p59 = scmp.ne.s32.totalorder %s47, %s48
    %p60 = scmp.eq.s32.totalorder %s17, 1
    %p61 = por %p59, %p60
    %p63 = scmp.ne.s32.totalorder %s48, %s62
    %p64 = scmp.eq.s32.totalorder %s17, 0
    %p65 = por %p63, %p64
    %s67 = sadd.s32 %s66, 1
    %p70 = scmp.eq.s32.totalorder %s11, 1
    %p71 = scmp.ne.s32.totalorder %s66, %s68
    %p72 = scmp.eq.s32.totalorder %s11, 0
    %p73 = por %p71, %p72
    %p74 = scmp.ne.s32.totalorder %s66, %s68
    %p75 = scmp.eq.s32.totalorder %s16, 1
    %p76 = por %p74, %p75
    %p77 = scmp.ne.s32.totalorder %s68, %s69
    %p78 = scmp.eq.s32.totalorder %s16, 0
    %p79 = por %p77, %p78
    %p80 = scmp.ne.s32.totalorder %s68, %s69
    %p81 = scmp.eq.s32.totalorder %s17, 1
    %p82 = por %p80, %p81
    %p84 = scmp.ne.s32.totalorder %s69, %s83
    %p85 = scmp.eq.s32.totalorder %s17, 0
    %p86 = por %p84, %p85
    %s88 = sadd.s32 %s87, 1
    %p91 = scmp.eq.s32.totalorder %s11, 1
    %p92 = scmp.ne.s32.totalorder %s87, %s89
    %p93 = scmp.eq.s32.totalorder %s11, 0
    %p94 = por %p92, %p93
    %p95 = scmp.ne.s32.totalorder %s87, %s89
    %p96 = scmp.eq.s32.totalorder %s16, 1
    %p97 = por %p95, %p96
    %p98 = scmp.ne.s32.totalorder %s89, %s90
    %p99 = scmp.eq.s32.totalorder %s16, 0
    %p100 = por %p98, %p99
    %p101 = scmp.ne.s32.totalorder %s89, %s90
    %p102 = scmp.eq.s32.totalorder %s17, 1
    %p103 = por %p101, %p102
    %p105 = scmp.ne.s32.totalorder %s90, %s104
    %p106 = scmp.eq.s32.totalorder %s17, 0
    %p107 = por %p105, %p106
    %s109 = sadd.s32 %s108, 1
    %p112 = scmp.eq.s32.totalorder %s11, 1
    %p113 = scmp.ne.s32.totalorder %s108, %s110
    %p114 = scmp.eq.s32.totalorder %s11, 0
    %p115 = por %p113, %p114
    %p116 = scmp.ne.s32.totalorder %s108, %s110
    %p117 = scmp.eq.s32.totalorder %s16, 1
    %p118 = por %p116, %p117
    %p119 = scmp.ne.s32.totalorder %s110, %s111
    %p120 = scmp.eq.s32.totalorder %s16, 0
    %p121 = por %p119, %p120
    %p122 = scmp.ne.s32.totalorder %s110, %s111
    %p123 = scmp.eq.s32.totalorder %s17, 1
    %p124 = por %p122, %p123
    %p126 = scmp.ne.s32.totalorder %s111, %s125
    %p127 = scmp.eq.s32.totalorder %s17, 0
    %p128 = por %p126, %p127
    %s129 = ssub.s32 %s11, %s18
    %p130 = scmp.eq.s32.totalorder %s129, 0
    %s132 = sadd.s32 %s131, 1
    %s133 = scalar_select %p130, %s131, %s132
    %p136 = pneg %p130
    %p137 = scmp.eq.s32.totalorder %s11, 1
    %p138 = por %p136, %p137
    %p139 = scmp.ne.s32.totalorder %s131, %s134
    %p140 = scmp.eq.s32.totalorder %s11, 0
    %p141 = por %p139, %p140
    %p142 = scmp.ne.s32.totalorder %s131, %s134
    %p143 = scmp.eq.s32.totalorder %s16, 1
    %p144 = por %p142, %p143
    %p145 = scmp.ne.s32.totalorder %s134, %s135
    %p146 = scmp.eq.s32.totalorder %s16, 0
    %p147 = por %p145, %p146
    %p148 = scmp.ne.s32.totalorder %s134, %s135
    %p149 = scmp.eq.s32.totalorder %s17, 1
    %p150 = por %p148, %p149
    %p152 = scmp.ne.s32.totalorder %s135, %s151
    %p153 = scmp.eq.s32.totalorder %s17, 0
    %p154 = por %p152, %p153
    %p155 = scmp.le.s32.totalorder 1, %s11
    %p156 = scmp.lt.s32.totalorder %s11, 3
    %p157 = pnand %p155, %p156
    %p158 = pneg %p157
    // Predicated region
    $region9: #{segformer_forward.9} parent=5 // pred_check
      _
    $region10: #{segformer_forward.9} parent=5 // pred_check_branch
      %160 = sbr.rel (%p157) target = $region12
    $region11: #{segformer_forward.9} parent=5 // pred_region
      %s161 = ssub.s32 %s11, 1
      // Predicated region
      $region13: #{segformer_forward.9} parent=11 // pred_check
        %p162 = pneg %p58
      $region14: #{segformer_forward.9} parent=11 // pred_check_branch
        %164 = sbr.rel (%p162) target = $region16
      $region15: #{segformer_forward.9} parent=11 // pred_region
        _
      $region16: #{segformer_forward.9} parent=11 // pred_fallthru
        _
      // Predicated region
      $region17: #{segformer_forward.9} parent=11 // pred_check
        %p165 = pneg %p79
      $region18: #{segformer_forward.9} parent=11 // pred_check_branch
        %167 = sbr.rel (%p165) target = $region20
      $region19: #{segformer_forward.9} parent=11 // pred_region
        _
      $region20: #{segformer_forward.9} parent=11 // pred_fallthru
        _
      // Predicated region
      $region21: #{segformer_forward.9} parent=11 // pred_check
        %p168 = pneg %p100
      $region22: #{segformer_forward.9} parent=11 // pred_check_branch
        %170 = sbr.rel (%p168) target = $region24
      $region23: #{segformer_forward.9} parent=11 // pred_region
        _
      $region24: #{segformer_forward.9} parent=11 // pred_fallthru
        _
      // Predicated region
      $region25: #{segformer_forward.9} parent=11 // pred_check
        %p171 = pneg %p121
      $region26: #{segformer_forward.9} parent=11 // pred_check_branch
        %173 = sbr.rel (%p171) target = $region28
      $region27: #{segformer_forward.9} parent=11 // pred_region
        _
      $region28: #{segformer_forward.9} parent=11 // pred_fallthru
        _
    $region12: #{segformer_forward.9} parent=5 // pred_fallthru
      _
    %p174 = scmp.lt.s32.totalorder %s11, 2
    // Predicated region
    $region29: #{segformer_forward.9} parent=5 // pred_check
      %p175 = pneg %p174
    $region30: #{segformer_forward.9} parent=5 // pred_check_branch
      %177 = sbr.rel (%p175) target = $region32
    $region31: #{segformer_forward.9} parent=5 // pred_region
      // Predicated region
      $region33: #{segformer_forward.9} parent=31 // pred_check
        %p178 = pneg %p31
      $region34: #{segformer_forward.9} parent=31 // pred_check_branch
        %180 = sbr.rel (%p178) target = $region36
      $region35: #{segformer_forward.9} parent=31 // pred_region
        %s181 = smul.u32 32, %s11
        %p182 = scmp.lt.s32.totalorder %s181, 63
        %s183 = scalar_select %p182, %s181, 63
        %s184 = smul.addr %s183, 2
        %s185 = smul.addr %s184, 4
        %s186 = scalar_lea.vmem %s0, %s185
        %s187 = smul.u32 32, %s11
      $region36: #{segformer_forward.9} parent=31 // pred_fallthru
        _
    $region32: #{segformer_forward.9} parent=5 // pred_fallthru
      _
    %p188 = scmp.le.s32.totalorder 1, %s11
    %p189 = scmp.lt.s32.totalorder %s11, 3
    %p190 = pnand %p188, %p189
    %p191 = pneg %p190
    // Predicated region
    $region37: #{segformer_forward.9} parent=5 // pred_check
      _
    $region38: #{segformer_forward.9} parent=5 // pred_check_branch
      %193 = sbr.rel (%p190) target = $region40
    $region39: #{segformer_forward.9} parent=5 // pred_region
      %s194 = ssub.s32 %s11, 1
      %s195 = smul.u32 32, %s16
      %p196 = scmp.lt.s32.totalorder %s195, 63
      %s197 = scalar_select %p196, %s195, 63
      %s198 = smul.addr %s197, 2
      %s199 = smul.addr %s198, 4
      %s200 = scalar_lea.vmem %s0, %s199
      %p201 = pneg %p37
      %p202 = pneg %p34
      %p203 = pneg %p58
      %p204 = pneg %p55
      %p205 = pneg %p79
      %p206 = pneg %p76
      %p207 = pneg %p100
      %p208 = pneg %p97
      %p209 = pneg %p121
      %p210 = pneg %p118
      %p211 = pneg %p147
      %p212 = pneg %p144
      %s213 = smul.u32 32, %s16
      %p214 = scmp.lt.s32.totalorder %s213, 63
      %s215 = scalar_select %p214, %s213, 63
      %s216 = smul.addr %s215, 8
      %s217 = scalar_lea.vmem %s5, %s216
      %s218 = smul.u32 32, %s16
      %p219 = scmp.lt.s32.totalorder %s218, 63
      %s220 = scalar_select %p219, %s218, 63
      %s221 = smul.addr %s220, 2
      %s222 = smul.addr %s221, 4
      %s223 = scalar_lea.vmem %s0, %s222
      %s224 = smul.u32 32, %s16
      %s225 = smul.u32 32, %s16
      %p226 = scmp.lt.s32.totalorder %s225, 63
      %s227 = scalar_select %p226, %s225, 63
      %s228 = smul.addr %s227, 8
      %s229 = scalar_lea.vmem %s5, %s228
      %s230 = smul.u32 32, %s16
      %v232 = vld [vmem:[%s223] sm:$0xff]
      %v233 = vld [vmem:[%s223 + $0x8] sm:$0xff]
      %v234 = vld [vmem:[%s223 + $0x10] sm:$0xff]
      %v235 = vld [vmem:[%s223 + $0x18] sm:$0xff]
      %v236 = vld [vmem:[%s223 + $0x20] sm:$0xff]
      %v237 = vld [vmem:[%s223 + $0x28] sm:$0xff]
      %v238 = vld [vmem:[%s223 + $0x30] sm:$0xff]
      %v239 = vld [vmem:[%s223 + $0x38] sm:$0xff]
      %v240 = vld [vmem:[%s223 + $0x40] sm:$0xff]
      %v241 = vld [vmem:[%s223 + $0x48] sm:$0xff]
      %v242 = vld [vmem:[%s223 + $0x50] sm:$0xff]
      %v243 = vld [vmem:[%s223 + $0x58] sm:$0xff]
      %v244 = vld [vmem:[%s223 + $0x60] sm:$0xff]
      %v245 = vld [vmem:[%s223 + $0x68] sm:$0xff]
      %v246 = vld [vmem:[%s223 + $0x70] sm:$0xff]
      %v247 = vld [vmem:[%s223 + $0x78] sm:$0xff]
      %v248 = vld [vmem:[%s223 + $0x80] sm:$0xff]
      %v249 = vld [vmem:[%s223 + $0x88] sm:$0xff]
      %v250 = vld [vmem:[%s223 + $0x90] sm:$0xff]
      %v251 = vld [vmem:[%s223 + $0x98] sm:$0xff]
      %v252 = vld [vmem:[%s223 + $0xa0] sm:$0xff]
      %v253 = vld [vmem:[%s223 + $0xa8] sm:$0xff]
      %v254 = vld [vmem:[%s223 + $0xb0] sm:$0xff]
      %v255 = vld [vmem:[%s223 + $0xb8] sm:$0xff]
      %v256 = vld [vmem:[%s223 + $0xc0] sm:$0xff]
      %v257 = vld [vmem:[%s223 + $0xc8] sm:$0xff]
      %v258 = vld [vmem:[%s223 + $0xd0] sm:$0xff]
      %v259 = vld [vmem:[%s223 + $0xd8] sm:$0xff]
      %v260 = vld [vmem:[%s223 + $0xe0] sm:$0xff]
      %v261 = vld [vmem:[%s223 + $0xe8] sm:$0xff]
      %v262 = vld [vmem:[%s223 + $0xf0] sm:$0xff]
      %v263 = vld [vmem:[%s223 + $0xf8] sm:$0xff]
      %v264 = vunpack.c.l.bf16 %v232
      %v265 = vunpack.c.h.bf16 %v232
      %v266 = vunpack.c.l.bf16 %v233
      %v267 = vunpack.c.h.bf16 %v233
      %v268 = vunpack.c.l.bf16 %v234
      %v269 = vunpack.c.h.bf16 %v234
      %v270 = vunpack.c.l.bf16 %v235
      %v271 = vunpack.c.h.bf16 %v235
      %v272 = vunpack.c.l.bf16 %v236
      %v273 = vunpack.c.h.bf16 %v236
      %v274 = vunpack.c.l.bf16 %v237
      %v275 = vunpack.c.h.bf16 %v237
      %v276 = vunpack.c.l.bf16 %v238
      %v277 = vunpack.c.h.bf16 %v238
      %v278 = vunpack.c.l.bf16 %v239
      %v279 = vunpack.c.h.bf16 %v239
      %v280 = vunpack.c.l.bf16 %v240
      %v281 = vunpack.c.h.bf16 %v240
      %v282 = vunpack.c.l.bf16 %v241
      %v283 = vunpack.c.h.bf16 %v241
      %v284 = vunpack.c.l.bf16 %v242
      %v285 = vunpack.c.h.bf16 %v242
      %v286 = vunpack.c.l.bf16 %v243
      %v287 = vunpack.c.h.bf16 %v243
      %v288 = vunpack.c.l.bf16 %v244
      %v289 = vunpack.c.h.bf16 %v244
      %v290 = vunpack.c.l.bf16 %v245
      %v291 = vunpack.c.h.bf16 %v245
      %v292 = vunpack.c.l.bf16 %v246
      %v293 = vunpack.c.h.bf16 %v246
      %v294 = vunpack.c.l.bf16 %v247
      %v295 = vunpack.c.h.bf16 %v247
      %v296 = vunpack.c.l.bf16 %v248
      %v297 = vunpack.c.h.bf16 %v248
      %v298 = vunpack.c.l.bf16 %v249
      %v299 = vunpack.c.h.bf16 %v249
      %v300 = vunpack.c.l.bf16 %v250
      %v301 = vunpack.c.h.bf16 %v250
      %v302 = vunpack.c.l.bf16 %v251
      %v303 = vunpack.c.h.bf16 %v251
      %v304 = vunpack.c.l.bf16 %v252
      %v305 = vunpack.c.h.bf16 %v252
      %v306 = vunpack.c.l.bf16 %v253
      %v307 = vunpack.c.h.bf16 %v253
      %v308 = vunpack.c.l.bf16 %v254
      %v309 = vunpack.c.h.bf16 %v254
      %v310 = vunpack.c.l.bf16 %v255
      %v311 = vunpack.c.h.bf16 %v255
      %v312 = vunpack.c.l.bf16 %v256
      %v313 = vunpack.c.h.bf16 %v256
      %v314 = vunpack.c.l.bf16 %v257
      %v315 = vunpack.c.h.bf16 %v257
      %v316 = vunpack.c.l.bf16 %v258
      %v317 = vunpack.c.h.bf16 %v258
      %v318 = vunpack.c.l.bf16 %v259
      %v319 = vunpack.c.h.bf16 %v259
      %v320 = vunpack.c.l.bf16 %v260
      %v321 = vunpack.c.h.bf16 %v260
      %v322 = vunpack.c.l.bf16 %v261
      %v323 = vunpack.c.h.bf16 %v261
      %v324 = vunpack.c.l.bf16 %v262
      %v325 = vunpack.c.h.bf16 %v262
      %v326 = vunpack.c.l.bf16 %v263
      %v327 = vunpack.c.h.bf16 %v263
      %v328 = vld [vmem:[%s1] sm:$0x3]
      %v330 = vlaneseq
      %v331 = vshrl.u32 %v330, 7
      %v332 = vsub.s32 0, %v331
      %v333 = vrot.slane %v328, %v332
      %v334 = vlaneseq
      %v335 = vshrl.u32 %v334, 7
      %v336 = vsub.s32 1, %v335
      %v337 = vrot.slane %v328, %v336
      %v340 = vmul.f32 %v264, %v333
      %v341 = vmul.f32 %v265, %v337
      %v342 = vmul.f32 %v266, %v333
      %v343 = vmul.f32 %v267, %v337
      %v344 = vmul.f32 %v268, %v333
      %v345 = vmul.f32 %v269, %v337
      %v346 = vmul.f32 %v270, %v333
      %v347 = vmul.f32 %v271, %v337
      %v348 = vmul.f32 %v272, %v333
      %v349 = vmul.f32 %v273, %v337
      %v350 = vmul.f32 %v274, %v333
      %v351 = vmul.f32 %v275, %v337
      %v352 = vmul.f32 %v276, %v333
      %v353 = vmul.f32 %v277, %v337
      %v354 = vmul.f32 %v278, %v333
      %v355 = vmul.f32 %v279, %v337
      %v356 = vmul.f32 %v280, %v333
      %v357 = vmul.f32 %v281, %v337
      %v358 = vmul.f32 %v282, %v333
      %v359 = vmul.f32 %v283, %v337
      %v360 = vmul.f32 %v284, %v333
      %v361 = vmul.f32 %v285, %v337
      %v362 = vmul.f32 %v286, %v333
      %v363 = vmul.f32 %v287, %v337
      %v364 = vmul.f32 %v288, %v333
      %v365 = vmul.f32 %v289, %v337
      %v366 = vmul.f32 %v290, %v333
      %v367 = vmul.f32 %v291, %v337
      %v368 = vmul.f32 %v292, %v333
      %v369 = vmul.f32 %v293, %v337
      %v370 = vmul.f32 %v294, %v333
      %v371 = vmul.f32 %v295, %v337
      %v372 = vmul.f32 %v296, %v333
      %v373 = vmul.f32 %v297, %v337
      %v374 = vmul.f32 %v298, %v333
      %v375 = vmul.f32 %v299, %v337
      %v376 = vmul.f32 %v300, %v333
      %v377 = vmul.f32 %v301, %v337
      %v378 = vmul.f32 %v302, %v333
      %v379 = vmul.f32 %v303, %v337
      %v380 = vmul.f32 %v304, %v333
      %v381 = vmul.f32 %v305, %v337
      %v382 = vmul.f32 %v306, %v333
      %v383 = vmul.f32 %v307, %v337
      %v384 = vmul.f32 %v308, %v333
      %v385 = vmul.f32 %v309, %v337
      %v386 = vmul.f32 %v310, %v333
      %v387 = vmul.f32 %v311, %v337
      %v388 = vmul.f32 %v312, %v333
      %v389 = vmul.f32 %v313, %v337
      %v390 = vmul.f32 %v314, %v333
      %v391 = vmul.f32 %v315, %v337
      %v392 = vmul.f32 %v316, %v333
      %v393 = vmul.f32 %v317, %v337
      %v394 = vmul.f32 %v318, %v333
      %v395 = vmul.f32 %v319, %v337
      %v396 = vmul.f32 %v320, %v333
      %v397 = vmul.f32 %v321, %v337
      %v398 = vmul.f32 %v322, %v333
      %v399 = vmul.f32 %v323, %v337
      %v400 = vmul.f32 %v324, %v333
      %v401 = vmul.f32 %v325, %v337
      %v402 = vmul.f32 %v326, %v333
      %v403 = vmul.f32 %v327, %v337
      %v404 = vld [vmem:[%s2] sm:$0x3]
      %v406 = vlaneseq
      %v407 = vshrl.u32 %v406, 7
      %v408 = vsub.s32 0, %v407
      %v409 = vrot.slane %v404, %v408
      %v410 = vlaneseq
      %v411 = vshrl.u32 %v410, 7
      %v412 = vsub.s32 1, %v411
      %v413 = vrot.slane %v404, %v412
      %v416 = vadd.f32 %v340, %v409
      %v417 = vadd.f32 %v341, %v413
      %v418 = vadd.f32 %v342, %v409
      %v419 = vadd.f32 %v343, %v413
      %v420 = vadd.f32 %v344, %v409
      %v421 = vadd.f32 %v345, %v413
      %v422 = vadd.f32 %v346, %v409
      %v423 = vadd.f32 %v347, %v413
      %v424 = vadd.f32 %v348, %v409
      %v425 = vadd.f32 %v349, %v413
      %v426 = vadd.f32 %v350, %v409
      %v427 = vadd.f32 %v351, %v413
      %v428 = vadd.f32 %v352, %v409
      %v429 = vadd.f32 %v353, %v413
      %v430 = vadd.f32 %v354, %v409
      %v431 = vadd.f32 %v355, %v413
      %v432 = vadd.f32 %v356, %v409
      %v433 = vadd.f32 %v357, %v413
      %v434 = vadd.f32 %v358, %v409
      %v435 = vadd.f32 %v359, %v413
      %v436 = vadd.f32 %v360, %v409
      %v437 = vadd.f32 %v361, %v413
      %v438 = vadd.f32 %v362, %v409
      %v439 = vadd.f32 %v363, %v413
      %v440 = vadd.f32 %v364, %v409
      %v441 = vadd.f32 %v365, %v413
      %v442 = vadd.f32 %v366, %v409
      %v443 = vadd.f32 %v367, %v413
      %v444 = vadd.f32 %v368, %v409
      %v445 = vadd.f32 %v369, %v413
      %v446 = vadd.f32 %v370, %v409
      %v447 = vadd.f32 %v371, %v413
      %v448 = vadd.f32 %v372, %v409
      %v449 = vadd.f32 %v373, %v413
      %v450 = vadd.f32 %v374, %v409
      %v451 = vadd.f32 %v375, %v413
      %v452 = vadd.f32 %v376, %v409
      %v453 = vadd.f32 %v377, %v413
      %v454 = vadd.f32 %v378, %v409
      %v455 = vadd.f32 %v379, %v413
      %v456 = vadd.f32 %v380, %v409
      %v457 = vadd.f32 %v381, %v413
      %v458 = vadd.f32 %v382, %v409
      %v459 = vadd.f32 %v383, %v413
      %v460 = vadd.f32 %v384, %v409
      %v461 = vadd.f32 %v385, %v413
      %v462 = vadd.f32 %v386, %v409
      %v463 = vadd.f32 %v387, %v413
      %v464 = vadd.f32 %v388, %v409
      %v465 = vadd.f32 %v389, %v413
      %v466 = vadd.f32 %v390, %v409
      %v467 = vadd.f32 %v391, %v413
      %v468 = vadd.f32 %v392, %v409
      %v469 = vadd.f32 %v393, %v413
      %v470 = vadd.f32 %v394, %v409
      %v471 = vadd.f32 %v395, %v413
      %v472 = vadd.f32 %v396, %v409
      %v473 = vadd.f32 %v397, %v413
      %v474 = vadd.f32 %v398, %v409
      %v475 = vadd.f32 %v399, %v413
      %v476 = vadd.f32 %v400, %v409
      %v477 = vadd.f32 %v401, %v413
      %v478 = vadd.f32 %v402, %v409
      %v479 = vadd.f32 %v403, %v413
      %v480 = vmax.f32 %v416, 0.0
      %v481 = vmax.f32 %v417, 0.0
      %v482 = vmax.f32 %v418, 0.0
      %v483 = vmax.f32 %v419, 0.0
      %v484 = vmax.f32 %v420, 0.0
      %v485 = vmax.f32 %v421, 0.0
      %v486 = vmax.f32 %v422, 0.0
      %v487 = vmax.f32 %v423, 0.0
      %v488 = vmax.f32 %v424, 0.0
      %v489 = vmax.f32 %v425, 0.0
      %v490 = vmax.f32 %v426, 0.0
      %v491 = vmax.f32 %v427, 0.0
      %v492 = vmax.f32 %v428, 0.0
      %v493 = vmax.f32 %v429, 0.0
      %v494 = vmax.f32 %v430, 0.0
      %v495 = vmax.f32 %v431, 0.0
      %v496 = vmax.f32 %v432, 0.0
      %v497 = vmax.f32 %v433, 0.0
      %v498 = vmax.f32 %v434, 0.0
      %v499 = vmax.f32 %v435, 0.0
      %v500 = vmax.f32 %v436, 0.0
      %v501 = vmax.f32 %v437, 0.0
      %v502 = vmax.f32 %v438, 0.0
      %v503 = vmax.f32 %v439, 0.0
      %v504 = vmax.f32 %v440, 0.0
      %v505 = vmax.f32 %v441, 0.0
      %v506 = vmax.f32 %v442, 0.0
      %v507 = vmax.f32 %v443, 0.0
      %v508 = vmax.f32 %v444, 0.0
      %v509 = vmax.f32 %v445, 0.0
      %v510 = vmax.f32 %v446, 0.0
      %v511 = vmax.f32 %v447, 0.0
      %v512 = vmax.f32 %v448, 0.0
      %v513 = vmax.f32 %v449, 0.0
      %v514 = vmax.f32 %v450, 0.0
      %v515 = vmax.f32 %v451, 0.0
      %v516 = vmax.f32 %v452, 0.0
      %v517 = vmax.f32 %v453, 0.0
      %v518 = vmax.f32 %v454, 0.0
      %v519 = vmax.f32 %v455, 0.0
      %v520 = vmax.f32 %v456, 0.0
      %v521 = vmax.f32 %v457, 0.0
      %v522 = vmax.f32 %v458, 0.0
      %v523 = vmax.f32 %v459, 0.0
      %v524 = vmax.f32 %v460, 0.0
      %v525 = vmax.f32 %v461, 0.0
      %v526 = vmax.f32 %v462, 0.0
      %v527 = vmax.f32 %v463, 0.0
      %v528 = vmax.f32 %v464, 0.0
      %v529 = vmax.f32 %v465, 0.0
      %v530 = vmax.f32 %v466, 0.0
      %v531 = vmax.f32 %v467, 0.0
      %v532 = vmax.f32 %v468, 0.0
      %v533 = vmax.f32 %v469, 0.0
      %v534 = vmax.f32 %v470, 0.0
      %v535 = vmax.f32 %v471, 0.0
      %v536 = vmax.f32 %v472, 0.0
      %v537 = vmax.f32 %v473, 0.0
      %v538 = vmax.f32 %v474, 0.0
      %v539 = vmax.f32 %v475, 0.0
      %v540 = vmax.f32 %v476, 0.0
      %v541 = vmax.f32 %v477, 0.0
      %v542 = vmax.f32 %v478, 0.0
      %v543 = vmax.f32 %v479, 0.0
      %v544 = vpack.c.bf16 %v482, %v480
      %v545 = vpack.c.bf16 %v483, %v481
      %v546 = vpack.c.bf16 %v486, %v484
      %v547 = vpack.c.bf16 %v487, %v485
      %v548 = vpack.c.bf16 %v490, %v488
      %v549 = vpack.c.bf16 %v491, %v489
      %v550 = vpack.c.bf16 %v494, %v492
      %v551 = vpack.c.bf16 %v495, %v493
      %v552 = vpack.c.bf16 %v498, %v496
      %v553 = vpack.c.bf16 %v499, %v497
      %v554 = vpack.c.bf16 %v502, %v500
      %v555 = vpack.c.bf16 %v503, %v501
      %v556 = vpack.c.bf16 %v506, %v504
      %v557 = vpack.c.bf16 %v507, %v505
      %v558 = vpack.c.bf16 %v510, %v508
      %v559 = vpack.c.bf16 %v511, %v509
      %v560 = vpack.c.bf16 %v514, %v512
      %v561 = vpack.c.bf16 %v515, %v513
      %v562 = vpack.c.bf16 %v518, %v516
      %v563 = vpack.c.bf16 %v519, %v517
      %v564 = vpack.c.bf16 %v522, %v520
      %v565 = vpack.c.bf16 %v523, %v521
      %v566 = vpack.c.bf16 %v526, %v524
      %v567 = vpack.c.bf16 %v527, %v525
      %v568 = vpack.c.bf16 %v530, %v528
      %v569 = vpack.c.bf16 %v531, %v529
      %v570 = vpack.c.bf16 %v534, %v532
      %v571 = vpack.c.bf16 %v535, %v533
      %v572 = vpack.c.bf16 %v538, %v536
      %v573 = vpack.c.bf16 %v539, %v537
      %v574 = vpack.c.bf16 %v542, %v540
      %v575 = vpack.c.bf16 %v543, %v541
      %v576 = vld [vmem:[%s3] sm:$0xf]
      %v577 = vld [vmem:[%s3 + $0x4] sm:$0xf]
      %v578 = vld [vmem:[%s3 + $0x8] sm:$0xf]
      %v579 = vld [vmem:[%s3 + $0xc] sm:$0xf]
      %v580 = vld [vmem:[%s3 + $0x10] sm:$0xf]
      %v581 = vld [vmem:[%s3 + $0x14] sm:$0xf]
      %v582 = vld [vmem:[%s3 + $0x18] sm:$0xf]
      %v583 = vld [vmem:[%s3 + $0x1c] sm:$0xf]
      %v584 = vld [vmem:[%s3 + $0x20] sm:$0xf]
      %v585 = vld [vmem:[%s3 + $0x24] sm:$0xf]
      %v586 = vld [vmem:[%s3 + $0x28] sm:$0xf]
      %v587 = vld [vmem:[%s3 + $0x2c] sm:$0xf]
      %v588 = vld [vmem:[%s3 + $0x30] sm:$0xf]
      %v589 = vld [vmem:[%s3 + $0x34] sm:$0xf]
      %v590 = vld [vmem:[%s3 + $0x38] sm:$0xf]
      %v591 = vld [vmem:[%s3 + $0x3c] sm:$0xf]
      %v592 = vld [vmem:[%s3 + $0x40] sm:$0xf]
      %v593 = vld [vmem:[%s3 + $0x44] sm:$0xf]
      %v594 = vld [vmem:[%s3 + $0x48] sm:$0xf]
      %v595 = vld [vmem:[%s3 + $0x4c] sm:$0xf]
      %v596 = vld [vmem:[%s3 + $0x50] sm:$0xf]
      %v597 = vld [vmem:[%s3 + $0x54] sm:$0xf]
      %v598 = vld [vmem:[%s3 + $0x58] sm:$0xf]
      %v599 = vld [vmem:[%s3 + $0x5c] sm:$0xf]
      %v600 = vld [vmem:[%s3 + $0x60] sm:$0xf]
      %v601 = vld [vmem:[%s3 + $0x64] sm:$0xf]
      %v602 = vld [vmem:[%s3 + $0x68] sm:$0xf]
      %v603 = vld [vmem:[%s3 + $0x6c] sm:$0xf]
      %v604 = vld [vmem:[%s3 + $0x70] sm:$0xf]
      %v605 = vld [vmem:[%s3 + $0x74] sm:$0xf]
      %v606 = vld [vmem:[%s3 + $0x78] sm:$0xf]
      %v607 = vld [vmem:[%s3 + $0x7c] sm:$0xf]
      %v608 = vld [vmem:[%s4] sm:$0x1]
      %v610 = vlaneseq
      %v611 = vshrl.u32 %v610, 7
      %v612 = vsub.s32 0, %v611
      %v613 = vrot.slane %v608, %v612
      %v647 = vunpack.c.l.b16 %v576
      %v648 = vunpack.c.l.b16 %v577
      %v649 = vunpack.c.l.b16 %v578
      %v650 = vunpack.c.l.b16 %v579
      %v651 = vunpack.c.l.b16 %v580
      %v652 = vunpack.c.l.b16 %v581
      %v653 = vunpack.c.l.b16 %v582
      %v654 = vunpack.c.l.b16 %v583
      %v655 = vunpack.c.l.b16 %v584
      %v656 = vunpack.c.l.b16 %v585
      %v657 = vunpack.c.l.b16 %v586
      %v658 = vunpack.c.l.b16 %v587
      %v659 = vunpack.c.l.b16 %v588
      %v660 = vunpack.c.l.b16 %v589
      %v661 = vunpack.c.l.b16 %v590
      %v662 = vunpack.c.l.b16 %v591
      %v663 = vunpack.c.l.b16 %v592
      %v664 = vunpack.c.l.b16 %v593
      %v665 = vunpack.c.l.b16 %v594
      %v666 = vunpack.c.l.b16 %v595
      %v667 = vunpack.c.l.b16 %v596
      %v668 = vunpack.c.l.b16 %v597
      %v669 = vunpack.c.l.b16 %v598
      %v670 = vunpack.c.l.b16 %v599
      %v671 = vunpack.c.l.b16 %v600
      %v672 = vunpack.c.l.b16 %v601
      %v673 = vunpack.c.l.b16 %v602
      %v674 = vunpack.c.l.b16 %v603
      %v675 = vunpack.c.l.b16 %v604
      %v676 = vunpack.c.l.b16 %v605
      %v677 = vunpack.c.l.b16 %v606
      %v678 = vunpack.c.l.b16 %v607
      %v679 = vpack.c.b16 %v648, %v647
      %v680 = vpack.c.b16 %v650, %v649
      %v681 = vpack.c.b16 %v652, %v651
      %v682 = vpack.c.b16 %v654, %v653
      %v683 = vpack.c.b16 %v656, %v655
      %v684 = vpack.c.b16 %v658, %v657
      %v685 = vpack.c.b16 %v660, %v659
      %v686 = vpack.c.b16 %v662, %v661
      %v687 = vpack.c.b16 %v664, %v663
      %v688 = vpack.c.b16 %v666, %v665
      %v689 = vpack.c.b16 %v668, %v667
      %v690 = vpack.c.b16 %v670, %v669
      %v691 = vpack.c.b16 %v672, %v671
      %v692 = vpack.c.b16 %v674, %v673
      %v693 = vpack.c.b16 %v676, %v675
      %v694 = vpack.c.b16 %v678, %v677
      %711 = vmatprep.subr.bf16.mxu0 0
      %712 = vmatpush1.bf16.msra.mxu0 %v679
      %713 = vmatprep.subr.bf16.mxu0 0
      %714 = vmatpush1.bf16.msra.mxu0 %v680
      %715 = vmatprep.subr.bf16.mxu0 0
      %716 = vmatpush1.bf16.msra.mxu0 %v681
      %717 = vmatprep.subr.bf16.mxu0 0
      %718 = vmatpush1.bf16.msra.mxu0 %v682
      %719 = vmatprep.subr.bf16.mxu0 0
      %720 = vmatpush1.bf16.msra.mxu0 %v683
      %721 = vmatprep.subr.bf16.mxu0 0
      %722 = vmatpush1.bf16.msra.mxu0 %v684
      %723 = vmatprep.subr.bf16.mxu0 0
      %724 = vmatpush1.bf16.msra.mxu0 %v685
      %725 = vmatprep.subr.bf16.mxu0 0
      %726 = vmatpush1.bf16.msra.mxu0 %v686
      %727 = vmatprep.subr.bf16.mxu0 0
      %728 = vmatpush1.bf16.msra.mxu0 %v687
      %729 = vmatprep.subr.bf16.mxu0 0
      %730 = vmatpush1.bf16.msra.mxu0 %v688
      %731 = vmatprep.subr.bf16.mxu0 0
      %732 = vmatpush1.bf16.msra.mxu0 %v689
      %733 = vmatprep.subr.bf16.mxu0 0
      %734 = vmatpush1.bf16.msra.mxu0 %v690
      %735 = vmatprep.subr.bf16.mxu0 0
      %736 = vmatpush1.bf16.msra.mxu0 %v691
      %737 = vmatprep.subr.bf16.mxu0 0
      %738 = vmatpush1.bf16.msra.mxu0 %v692
      %739 = vmatprep.subr.bf16.mxu0 0
      %740 = vmatpush1.bf16.msra.mxu0 %v693
      %741 = vmatprep.subr.bf16.mxu0 0
      %742 = vmatpush1.bf16.msra.mxu0 %v694
      %743 = vmatprep.mubr.bf16.mxu0 %v545
      %744 = vmatmul.mubr.bf16.gmra.mrb[0].mxu0 %v544
      %v745 = vpop.f32.mrb[0].mxu0
      %v746 = vadd.f32 %v613, %v745
      %v747 = vpop.f32.mrb[0].mxu0
      %v748 = vpop.f32.mrb[0].mxu0
      %v749 = vadd.f32 %v613, %v748
      %v750 = vpop.f32.mrb[0].mxu0
      %751 = vmatprep.mubr.bf16.mxu0 %v547
      %752 = vmatmul.mubr.bf16.gmra.mrb[0].mxu0 %v546
      %v753 = vpop.f32.mrb[0].mxu0
      %v754 = vadd.f32 %v613, %v753
      %v755 = vpop.f32.mrb[0].mxu0
      %v756 = vpop.f32.mrb[0].mxu0
      %v757 = vadd.f32 %v613, %v756
      %v758 = vpop.f32.mrb[0].mxu0
      %759 = vmatprep.mubr.bf16.mxu0 %v549
      %760 = vmatmul.mubr.bf16.gmra.mrb[0].mxu0 %v548
      %v761 = vpop.f32.mrb[0].mxu0
      %v762 = vadd.f32 %v613, %v761
      %v763 = vpop.f32.mrb[0].mxu0
      %v764 = vpop.f32.mrb[0].mxu0
      %v765 = vadd.f32 %v613, %v764
      %v766 = vpop.f32.mrb[0].mxu0
      %767 = vmatprep.mubr.bf16.mxu0 %v551
      %768 = vmatmul.mubr.bf16.gmra.mrb[0].mxu0 %v550
      %v769 = vpop.f32.mrb[0].mxu0
      %v770 = vadd.f32 %v613, %v769
      %v771 = vpop.f32.mrb[0].mxu0
      %v772 = vpop.f32.mrb[0].mxu0
      %v773 = vadd.f32 %v613, %v772
      %v774 = vpop.f32.mrb[0].mxu0
      %775 = vmatprep.mubr.bf16.mxu0 %v553
      %776 = vmatmul.mubr.bf16.gmra.mrb[0].mxu0 %v552
      %v777 = vpop.f32.mrb[0].mxu0
      %v778 = vadd.f32 %v613, %v777
      %v779 = vpop.f32.mrb[0].mxu0
      %v780 = vpop.f32.mrb[0].mxu0
      %v781 = vadd.f32 %v613, %v780
      %v782 = vpop.f32.mrb[0].mxu0
      %783 = vmatprep.mubr.bf16.mxu0 %v555
      %784 = vmatmul.mubr.bf16.gmra.mrb[0].mxu0 %v554
      %v785 = vpop.f32.mrb[0].mxu0
      %v786 = vadd.f32 %v613, %v785
      %v787 = vpop.f32.mrb[0].mxu0
      %v788 = vpop.f32.mrb[0].mxu0
      %v789 = vadd.f32 %v613, %v788
      %v790 = vpop.f32.mrb[0].mxu0
      %791 = vmatprep.mubr.bf16.mxu0 %v557
      %792 = vmatmul.mubr.bf16.gmra.mrb[0].mxu0 %v556
      %v793 = vpop.f32.mrb[0].mxu0
      %v794 = vadd.f32 %v613, %v793
      %v795 = vpop.f32.mrb[0].mxu0
      %v796 = vpop.f32.mrb[0].mxu0
      %v797 = vadd.f32 %v613, %v796
      %v798 = vpop.f32.mrb[0].mxu0
      %799 = vmatprep.mubr.bf16.mxu0 %v559
      %800 = vmatmul.mubr.bf16.gmra.mrb[0].mxu0 %v558
      %v801 = vpop.f32.mrb[0].mxu0
      %v802 = vadd.f32 %v613, %v801
      %v803 = vpop.f32.mrb[0].mxu0
      %v804 = vpop.f32.mrb[0].mxu0
      %v805 = vadd.f32 %v613, %v804
      %v806 = vpop.f32.mrb[0].mxu0
      %807 = vmatprep.mubr.bf16.mxu0 %v561
      %808 = vmatmul.mubr.bf16.gmra.mrb[0].mxu0 %v560
      %v809 = vpop.f32.mrb[0].mxu0
      %v810 = vadd.f32 %v613, %v809
      %v811 = vpop.f32.mrb[0].mxu0
      %v812 = vpop.f32.mrb[0].mxu0
      %v813 = vadd.f32 %v613, %v812
      %v814 = vpop.f32.mrb[0].mxu0
      %815 = vmatprep.mubr.bf16.mxu0 %v563
      %816 = vmatmul.mubr.bf16.gmra.mrb[0].mxu0 %v562
      %v817 = vpop.f32.mrb[0].mxu0
      %v818 = vadd.f32 %v613, %v817
      %v819 = vpop.f32.mrb[0].mxu0
      %v820 = vpop.f32.mrb[0].mxu0
      %v821 = vadd.f32 %v613, %v820
      %v822 = vpop.f32.mrb[0].mxu0
      %823 = vmatprep.mubr.bf16.mxu0 %v565
      %824 = vmatmul.mubr.bf16.gmra.mrb[0].mxu0 %v564
      %v825 = vpop.f32.mrb[0].mxu0
      %v826 = vadd.f32 %v613, %v825
      %v827 = vpop.f32.mrb[0].mxu0
      %v828 = vpop.f32.mrb[0].mxu0
      %v829 = vadd.f32 %v613, %v828
      %v830 = vpop.f32.mrb[0].mxu0
      %831 = vmatprep.mubr.bf16.mxu0 %v567
      %832 = vmatmul.mubr.bf16.gmra.mrb[0].mxu0 %v566
      %v833 = vpop.f32.mrb[0].mxu0
      %v834 = vadd.f32 %v613, %v833
      %v835 = vpop.f32.mrb[0].mxu0
      %v836 = vpop.f32.mrb[0].mxu0
      %v837 = vadd.f32 %v613, %v836
      %v838 = vpop.f32.mrb[0].mxu0
      %839 = vmatprep.mubr.bf16.mxu0 %v569
      %840 = vmatmul.mubr.bf16.gmra.mrb[0].mxu0 %v568
      %v841 = vpop.f32.mrb[0].mxu0
      %v842 = vadd.f32 %v613, %v841
      %v843 = vpop.f32.mrb[0].mxu0
      %v844 = vpop.f32.mrb[0].mxu0
      %v845 = vadd.f32 %v613, %v844
      %v846 = vpop.f32.mrb[0].mxu0
      %847 = vmatprep.mubr.bf16.mxu0 %v571
      %848 = vmatmul.mubr.bf16.gmra.mrb[0].mxu0 %v570
      %v849 = vpop.f32.mrb[0].mxu0
      %v850 = vadd.f32 %v613, %v849
      %v851 = vpop.f32.mrb[0].mxu0
      %v852 = vpop.f32.mrb[0].mxu0
      %v853 = vadd.f32 %v613, %v852
      %v854 = vpop.f32.mrb[0].mxu0
      %855 = vmatprep.mubr.bf16.mxu0 %v573
      %856 = vmatmul.mubr.bf16.gmra.mrb[0].mxu0 %v572
      %v857 = vpop.f32.mrb[0].mxu0
      %v858 = vadd.f32 %v613, %v857
      %v859 = vpop.f32.mrb[0].mxu0
      %v860 = vpop.f32.mrb[0].mxu0
      %v861 = vadd.f32 %v613, %v860
      %v862 = vpop.f32.mrb[0].mxu0
      %863 = vmatprep.mubr.bf16.mxu0 %v575
      %864 = vmatmul.mubr.bf16.gmra.mrb[0].mxu0 %v574
      %v865 = vpop.f32.mrb[0].mxu0
      %v866 = vadd.f32 %v613, %v865
      %v867 = vpop.f32.mrb[0].mxu0
      %v868 = vpop.f32.mrb[0].mxu0
      %v869 = vadd.f32 %v613, %v868
      %v870 = vpop.f32.mrb[0].mxu0
      %871 = vdwg.mxu0
      %vm872 = vcmask 171008
      %873 = vst.msk [vmem:[%s229] sm:$0xff] %vm872, %v746
      %874 = vst.msk [vmem:[%s229 + $0x8] sm:$0xff] %vm872, %v749
      %875 = vst.msk [vmem:[%s229 + $0x10] sm:$0xff] %vm872, %v754
      %876 = vst.msk [vmem:[%s229 + $0x18] sm:$0xff] %vm872, %v757
      %877 = vst.msk [vmem:[%s229 + $0x20] sm:$0xff] %vm872, %v762
      %878 = vst.msk [vmem:[%s229 + $0x28] sm:$0xff] %vm872, %v765
      %879 = vst.msk [vmem:[%s229 + $0x30] sm:$0xff] %vm872, %v770
      %880 = vst.msk [vmem:[%s229 + $0x38] sm:$0xff] %vm872, %v773
      %881 = vst.msk [vmem:[%s229 + $0x40] sm:$0xff] %vm872, %v778
      %882 = vst.msk [vmem:[%s229 + $0x48] sm:$0xff] %vm872, %v781
      %883 = vst.msk [vmem:[%s229 + $0x50] sm:$0xff] %vm872, %v786
      %884 = vst.msk [vmem:[%s229 + $0x58] sm:$0xff] %vm872, %v789
      %885 = vst.msk [vmem:[%s229 + $0x60] sm:$0xff] %vm872, %v794
      %886 = vst.msk [vmem:[%s229 + $0x68] sm:$0xff] %vm872, %v797
      %887 = vst.msk [vmem:[%s229 + $0x70] sm:$0xff] %vm872, %v802
      %888 = vst.msk [vmem:[%s229 + $0x78] sm:$0xff] %vm872, %v805
      %889 = vst.msk [vmem:[%s229 + $0x80] sm:$0xff] %vm872, %v810
      %890 = vst.msk [vmem:[%s229 + $0x88] sm:$0xff] %vm872, %v813
      %891 = vst.msk [vmem:[%s229 + $0x90] sm:$0xff] %vm872, %v818
      %892 = vst.msk [vmem:[%s229 + $0x98] sm:$0xff] %vm872, %v821
      %893 = vst.msk [vmem:[%s229 + $0xa0] sm:$0xff] %vm872, %v826
      %894 = vst.msk [vmem:[%s229 + $0xa8] sm:$0xff] %vm872, %v829
      %895 = vst.msk [vmem:[%s229 + $0xb0] sm:$0xff] %vm872, %v834
      %896 = vst.msk [vmem:[%s229 + $0xb8] sm:$0xff] %vm872, %v837
      %897 = vst.msk [vmem:[%s229 + $0xc0] sm:$0xff] %vm872, %v842
      %898 = vst.msk [vmem:[%s229 + $0xc8] sm:$0xff] %vm872, %v845
      %899 = vst.msk [vmem:[%s229 + $0xd0] sm:$0xff] %vm872, %v850
      %900 = vst.msk [vmem:[%s229 + $0xd8] sm:$0xff] %vm872, %v853
      %901 = vst.msk [vmem:[%s229 + $0xe0] sm:$0xff] %vm872, %v858
      %902 = vst.msk [vmem:[%s229 + $0xe8] sm:$0xff] %vm872, %v861
      %903 = vst.msk [vmem:[%s229 + $0xf0] sm:$0xff] %vm872, %v866
      %904 = vst.msk [vmem:[%s229 + $0xf8] sm:$0xff] %vm872, %v869
      %s905 = smul.u32 32, %s16
      %p906 = scmp.lt.s32.totalorder %s905, 63
      %s907 = scalar_select %p906, %s905, 63
      %s908 = smul.addr %s907, 8
      %s909 = scalar_lea.vmem %s5, %s908
      // Predicated region
      $region41: #{segformer_forward.9} parent=39 // pred_check
        %p910 = pneg %p144
      $region42: #{segformer_forward.9} parent=39 // pred_check_branch
        %912 = sbr.rel (%p910) target = $region44
      $region43: #{segformer_forward.9} parent=39 // pred_region
        %s913 = smul.u32 32, %s16
      $region44: #{segformer_forward.9} parent=39 // pred_fallthru
        _
    $region40: #{segformer_forward.9} parent=5 // pred_fallthru
      _
    %p914 = scmp.le.s32.totalorder 2, %s11
    // Predicated region
    $region45: #{segformer_forward.9} parent=5 // pred_check
      %p915 = pneg %p914
    $region46: #{segformer_forward.9} parent=5 // pred_check_branch
      %917 = sbr.rel (%p915) target = $region48
    $region47: #{segformer_forward.9} parent=5 // pred_region
      %s918 = ssub.s32 %s11, 2
      // Predicated region
      $region49: #{segformer_forward.9} parent=47 // pred_check
        %p919 = pneg %p150
      $region50: #{segformer_forward.9} parent=47 // pred_check_branch
        %921 = sbr.rel (%p919) target = $region52
      $region51: #{segformer_forward.9} parent=47 // pred_region
        %s922 = smul.u32 32, %s17
        %p923 = scmp.lt.s32.totalorder %s922, 63
        %s924 = scalar_select %p923, %s922, 63
        %s925 = smul.addr %s924, 8
        %s926 = scalar_lea.vmem %s5, %s925
      $region52: #{segformer_forward.9} parent=47 // pred_fallthru
        _
    $region48: #{segformer_forward.9} parent=5 // pred_fallthru
      _
  $region6: #{segformer_forward.9} parent=0 // loop_footer
    %s15 = sadd.s32 1, %s11
  $region7: #{segformer_forward.9} parent=0 // loop_footer_branch
    %10 = sbr.rel target = $region3
  $region8: #{segformer_forward.9} parent=0 // loop_exit
    _

</llo_original>
